<compile_context>
chip_gen: v6e
topology: v6e:2x2x1
jax: 0.10.0
libtpu: 0.0.40
codegen_flags: <defaults>
</compile_context>

<pallas_src>
import functools

import jax
import jax.numpy as jnp
from jax.experimental import pallas as pl
from jax.experimental.pallas import tpu as pltpu


# ----------------------------- fused kernel -----------------------------------


def fused_rnn_kernel(x_ref, wih_ref, whh_ref, b_ref, w1r_ref, b1_ref,
                     w2_ref, b2_ref, out_ref, pre_ref):
    """Fused LSTM scan + Linear/ReLU/Linear/LogSoftmax head.

    x_ref:   (T, B, 1)   time-major scalar inputs, T = C * L (channel sequences
                         concatenated; state carried across channels like the torch loop)
    wih_ref: (1, 4H)     W_ih^T              (g columns pre-scaled by 2)
    whh_ref: (H, 4H)     W_hh^T, bf16        (g columns pre-scaled by 2)
    b_ref:   (1, 4H)     b_ih + b_hh         (g columns pre-scaled by 2)
    w1r_ref: (L, H, H)   linear1 weight (in, out), bf16; w1r[t] multiplies h_t
    b1_ref:  (1, H)
    w2_ref:  (H, 5)      linear2 weight (in, out)
    b2_ref:  (1, 5)
    out_ref: (B, 5)      log-probabilities
    pre_ref: (T, B, 4H)  VMEM scratch: precomputed input + bias gate contribution
    """
    H = whh_ref.shape[0]
    T, B, _ = x_ref.shape
    L = w1r_ref.shape[0]
    C = T // L

    # Hoisted, fully parallel-over-t precompute (off the serial recurrence path).
    # TODO(synk): at production sizes fill this in T-chunks to bound VMEM on v7x.
    pre_ref[...] = x_ref[...] * wih_ref[...] + b_ref[...]

    whh = whh_ref[...]                                    # (H, 4H) bf16, loop-invariant

    h = jnp.zeros((B, H), jnp.bfloat16)
    c = jnp.zeros((B, H), jnp.float32)
    acc = jnp.zeros((B, H), jnp.float32)
    tail = (C - 1) * L                                    # only the last channel feeds linear1

    # Fully unrolled (T is a Python int): the scheduler can hide the pre[t] / w1_r[t]
    # loads and the acc matmul under the serial MXU -> sigmoid -> tanh chain.
    for t in range(T):
        gates = pre_ref[t] + jnp.dot(h, whh, preferred_element_type=jnp.float32)
        # One EUP pass over (B, 4H); g columns were pre-scaled by 2 in the params,
        # so tanh(raw g) == 2*sigmoid(gates_g) - 1.  PyTorch gate order: i, f, g, o.
        sg = jax.nn.sigmoid(gates)
        i_g = sg[:, 0 * H:1 * H]
        f_g = sg[:, 1 * H:2 * H]
        g_g = 2.0 * sg[:, 2 * H:3 * H] - 1.0
        o_g = sg[:, 3 * H:4 * H]
        c = f_g * c + i_g * g_g
        h = (o_g * jnp.tanh(c)).astype(jnp.bfloat16)
        if t >= tail:
            # Distribute linear1 into the scan: acc += h_t @ W1^T[t*H:(t+1)*H, :]
            # (static index, last channel only).
            acc = acc + jnp.dot(h, w1r_ref[t - tail],
                                preferred_element_type=jnp.float32)

    # Head: ReLU(linear1) -> linear2 -> log-softmax(dim=1), all f32.
    r1 = jnp.maximum(acc + b1_ref[...], 0.0)
    r2 = jnp.dot(r1, w2_ref[...], preferred_element_type=jnp.float32) + b2_ref[...]
    z = r2 - jnp.max(r2, axis=1, keepdims=True)
    out_ref[...] = z - jnp.log(jnp.sum(jnp.exp(z), axis=1, keepdims=True))


# ----------------------------- wrappers ---------------------------------------


def _zeros_map(nd, i):
    return (0,) * nd


def _full_spec(shape):
    return pl.BlockSpec(shape, functools.partial(_zeros_map, len(shape)))


def rnn_forward(x, kparams):
    """Mirror of RNNClass.forward. x: (B, C, L) with L == ins."""
    B, C, L = x.shape
    H = kparams["whh_t"].shape[0]
    # x.view(a[0], a[2], a[1]) is a reshape (not a transpose) -- mirrored exactly.
    xv = jnp.reshape(x, (B, L, C)).astype(jnp.float32)
    # Concatenate the C per-channel length-L scalar sequences into one time-major
    # scan of length T = C*L (state carried across channels, like the torch loop).
    # TODO(synk): at large T*B ship x lane-dense ((B, T)) instead of (T, B, 1).
    x_seq = jnp.reshape(jnp.transpose(xv, (2, 1, 0)), (C * L, B, 1))

    in_arrays = (x_seq, kparams["wih_t"], kparams["whh_t"], kparams["b_lstm"],
                 kparams["w1_r"], kparams["b1"], kparams["w2"], kparams["b2"])
    out_shape = jax.ShapeDtypeStruct((B, 5), jnp.float32)
    return pl.pallas_call(
        fused_rnn_kernel,
        grid=(1,),
        in_specs=[_full_spec(a.shape) for a in in_arrays],
        out_specs=_full_spec(out_shape.shape),
        out_shape=out_shape,
        scratch_shapes=[pltpu.VMEM((C * L, B, 4 * H), jnp.float32)],
        compiler_params=pltpu.CompilerParams(
            dimension_semantics=("arbitrary",),
            vmem_limit_bytes=32 * 1024 * 1024),
    )(*in_arrays)


def init_raw_params(key, ins, hs):
    """Torch-layout parameters of RNNClass(ins, [hs], 5), deterministic."""
    H = hs
    ks = jax.random.split(key, 8)
    s = 1.0 / jnp.sqrt(jnp.float32(H))
    w_ih = jax.random.uniform(ks[0], (4 * H, 1), jnp.float32, -s, s)
    w_hh = jax.random.uniform(ks[1], (4 * H, H), jnp.float32, -s, s)
    b_ih = jax.random.uniform(ks[2], (4 * H,), jnp.float32, -s, s)
    b_hh = jax.random.uniform(ks[3], (4 * H,), jnp.float32, -s, s)
    s1 = 1.0 / jnp.sqrt(jnp.float32(ins * H))
    w1 = jax.random.uniform(ks[4], (H, ins * H), jnp.float32, -s1, s1)   # (out, in)
    b1 = jax.random.uniform(ks[5], (H,), jnp.float32, -s1, s1)
    s2 = 1.0 / jnp.sqrt(jnp.float32(H))
    w2 = jax.random.uniform(ks[6], (5, H), jnp.float32, -s2, s2)         # (out, in)
    b2 = jax.random.uniform(ks[7], (5,), jnp.float32, -s2, s2)
    return {"w_ih": w_ih, "w_hh": w_hh, "b_ih": b_ih, "b_hh": b_hh,
            "w1": w1, "b1": b1, "w2": w2, "b2": b2}


def prepare_kernel_params(raw, ins):
    """One-time repack: transpose to (in, out), fold the two LSTM biases, fold the
    g-gate x2 (tanh(x) = 2*sigmoid(2x) - 1) into the gate parameters, and cast the
    recurrence / linear1 weights to bf16 for single-pass MXU matmuls."""
    H = raw["w_hh"].shape[1]
    gscale = jnp.ones((1, 4 * H), jnp.float32).at[:, 2 * H:3 * H].set(2.0)
    wih_t = jnp.transpose(raw["w_ih"]) * gscale                            # (1, 4H)
    whh_t = (jnp.transpose(raw["w_hh"]) * gscale).astype(jnp.bfloat16)     # (H, 4H)
    b_lstm = (raw["b_ih"] + raw["b_hh"])[None, :] * gscale                 # (1, 4H)
    w1_t = jnp.transpose(raw["w1"])                                        # (ins*H, H)
    w1_r = jnp.reshape(w1_t, (ins, H, H)).astype(jnp.bfloat16)             # block t -> h_t
    return {"wih_t": wih_t, "whh_t": whh_t, "b_lstm": b_lstm, "w1_r": w1_r,
            "b1": raw["b1"][None, :], "w2": jnp.transpose(raw["w2"]),
            "b2": raw["b2"][None, :]}


def rnn_forward_ref(x, raw):
    """Pure-JAX f32 reference of the same math (exact tanh, f32 matmuls)."""
    B, C, L = x.shape
    H = raw["w_hh"].shape[1]
    xv = jnp.reshape(x, (B, L, C)).astype(jnp.float32)
    wih = jnp.transpose(raw["w_ih"])
    whh = jnp.transpose(raw["w_hh"])
    b = (raw["b_ih"] + raw["b_hh"])[None, :]
    h = jnp.zeros((B, H), jnp.float32)
    c = jnp.zeros((B, H), jnp.float32)
    out = None
    for i in range(C):
        hs = []
        for t in range(L):
            g = xv[:, t, i:i + 1] * wih + h @ whh + b
            i_g = jax.nn.sigmoid(g[:, :H])
            f_g = jax.nn.sigmoid(g[:, H:2 * H])
            g_g = jnp.tanh(g[:, 2 * H:3 * H])
            o_g = jax.nn.sigmoid(g[:, 3 * H:])
            c = f_g * c + i_g * g_g
            h = o_g * jnp.tanh(c)
            hs.append(h)
        out = jnp.stack(hs, axis=1)                      # (B, L, H), last channel wins
    feat = jnp.reshape(out, (B, L * H))
    r1 = jnp.maximum(feat @ jnp.transpose(raw["w1"]) + raw["b1"], 0.0)
    r2 = r1 @ jnp.transpose(raw["w2"]) + raw["b2"]
    return jax.nn.log_softmax(r2, axis=1)


if __name__ == "__main__":
    # fit() uses entries.reshape(B, 1, ins) (C == 1); C = 2 also exercises the
    # multi-channel path of forward().  B = 8 fills the 8 sublanes.
    B, C, ins, H = 8, 2, 16, 32
    key = jax.random.PRNGKey(0)
    kx, kp = jax.random.split(key)
    x = jax.random.normal(kx, (B, C, ins), jnp.float32)
    raw = init_raw_params(kp, ins, H)
    kparams = prepare_kernel_params(raw, ins)

    fwd = jax.jit(rnn_forward)
    res = fwd(x, kparams)                 # (B, 5) log-probabilities
    jax.block_until_ready(res)

    assert res.shape == (B, 5)
    # log-softmax rows must (numerically) sum to 1 after exp
    assert bool(jnp.all(jnp.abs(jnp.sum(jnp.exp(res), axis=1) - 1.0) < 1e-4))
    # match the pure-JAX f32 reference (bf16 MXU recurrence -> slightly looser gate)
    ref = rnn_forward_ref(x, raw)
    assert bool(jnp.allclose(res, ref, atol=2e-2, rtol=2e-2))
    print("KERNEL_OK")
</pallas_src>

<mosaic_0001>
module attributes {stable_mosaic.version = 11 : i64} {
  func.func @fused_rnn_kernel(%arg0: i32, %arg1: memref<32x8x1xf32, #tpu.memory_space<vmem>>, %arg2: memref<1x128xf32, #tpu.memory_space<vmem>>, %arg3: memref<32x128xbf16, #tpu.memory_space<vmem>>, %arg4: memref<1x128xf32, #tpu.memory_space<vmem>>, %arg5: memref<16x32x32xbf16, #tpu.memory_space<vmem>>, %arg6: memref<1x32xf32, #tpu.memory_space<vmem>>, %arg7: memref<32x5xf32, #tpu.memory_space<vmem>>, %arg8: memref<1x5xf32, #tpu.memory_space<vmem>>, %arg9: memref<8x5xf32, #tpu.memory_space<vmem>>, %arg10: memref<32x8x128xf32, #tpu.memory_space<vmem>>) attributes {dimension_semantics = [#tpu.dimension_semantics<arbitrary>], iteration_bounds = array<i64: 1>, scalar_prefetch = 0 : i64, scratch_operands = 1 : i64, tpu.core_type = #tpu.core_type<tc>, window_params = [{pipeline_mode = #tpu.pipeline_mode<synchronous>, transform_indices = @transform_0, window_bounds = array<i64: 32, 8, 1>}, {pipeline_mode = #tpu.pipeline_mode<synchronous>, transform_indices = @transform_1, window_bounds = array<i64: 1, 128>}, {pipeline_mode = #tpu.pipeline_mode<synchronous>, transform_indices = @transform_2, window_bounds = array<i64: 32, 128>}, {pipeline_mode = #tpu.pipeline_mode<synchronous>, transform_indices = @transform_3, window_bounds = array<i64: 1, 128>}, {pipeline_mode = #tpu.pipeline_mode<synchronous>, transform_indices = @transform_4, window_bounds = array<i64: 16, 32, 32>}, {pipeline_mode = #tpu.pipeline_mode<synchronous>, transform_indices = @transform_5, window_bounds = array<i64: 1, 32>}, {pipeline_mode = #tpu.pipeline_mode<synchronous>, transform_indices = @transform_6, window_bounds = array<i64: 32, 5>}, {pipeline_mode = #tpu.pipeline_mode<synchronous>, transform_indices = @transform_7, window_bounds = array<i64: 1, 5>}, {pipeline_mode = #tpu.pipeline_mode<synchronous>, transform_indices = @transform_8, window_bounds = array<i64: 8, 5>}]} {
    %c0 = arith.constant 0 : index
    %c0_0 = arith.constant 0 : index
    %c0_1 = arith.constant 0 : index
    %0 = vector.load %arg1[%c0, %c0_0, %c0_1] : memref<32x8x1xf32, #tpu.memory_space<vmem>>, vector<32x8x1xf32>
    %c0_2 = arith.constant 0 : index
    %c0_3 = arith.constant 0 : index
    %1 = vector.load %arg2[%c0_2, %c0_3] : memref<1x128xf32, #tpu.memory_space<vmem>>, vector<1x128xf32>
    %2 = vector.shape_cast %1 : vector<1x128xf32> to vector<1x1x128xf32>
    %3 = vector.broadcast %0 : vector<32x8x1xf32> to vector<32x8x128xf32>
    %4 = vector.broadcast %2 : vector<1x1x128xf32> to vector<32x8x128xf32>
    %5 = arith.mulf %3, %4 : vector<32x8x128xf32>
    %c0_4 = arith.constant 0 : index
    %c0_5 = arith.constant 0 : index
    %6 = vector.load %arg4[%c0_4, %c0_5] : memref<1x128xf32, #tpu.memory_space<vmem>>, vector<1x128xf32>
    %7 = vector.shape_cast %6 : vector<1x128xf32> to vector<1x1x128xf32>
    %8 = vector.broadcast %7 : vector<1x1x128xf32> to vector<32x8x128xf32>
    %9 = arith.addf %5, %8 : vector<32x8x128xf32>
    %c0_6 = arith.constant 0 : index
    %c0_7 = arith.constant 0 : index
    %c0_8 = arith.constant 0 : index
    %10 = vector.load %arg10[%c0_6, %c0_7, %c0_8] : memref<32x8x128xf32, #tpu.memory_space<vmem>>, vector<32x8x128xf32>
    tpu.vector_store %arg10[%c0_6, %c0_7, %c0_8], %9 {strides = array<i32>} : memref<32x8x128xf32, #tpu.memory_space<vmem>>, vector<32x8x128xf32>,
    %c0_9 = arith.constant 0 : index
    %c0_10 = arith.constant 0 : index
    %11 = vector.load %arg3[%c0_9, %c0_10] : memref<32x128xbf16, #tpu.memory_space<vmem>>, vector<32x128xbf16>
    %cst = arith.constant 0.000000e+00 : bf16
    %12 = vector.broadcast %cst : bf16 to vector<8x32xbf16>
    %cst_11 = arith.constant 0.000000e+00 : f32
    %13 = vector.broadcast %cst_11 : f32 to vector<8x32xf32>
    %cst_12 = arith.constant 0.000000e+00 : f32
    %14 = vector.broadcast %cst_12 : f32 to vector<8x32xf32>
    %c0_13 = arith.constant 0 : index
    %c0_14 = arith.constant 0 : index
    %c0_15 = arith.constant 0 : index
    %15 = vector.load %arg10[%c0_13, %c0_14, %c0_15] : memref<32x8x128xf32, #tpu.memory_space<vmem>>, vector<1x8x128xf32>
    %16 = vector.shape_cast %15 : vector<1x8x128xf32> to vector<8x128xf32>
    %cst_16 = arith.constant dense<0.000000e+00> : vector<8x128xf32>
    %17 = tpu.matmul %12, %11, %cst_16 {dimension_numbers = #tpu.dot_dimension_numbers<[1], [0], [0], [1], [0, 0, 1, 1], [], []>} : vector<8x32xbf16>, vector<32x128xbf16>, vector<8x128xf32> -> vector<8x128xf32>
    %18 = arith.addf %16, %17 : vector<8x128xf32>
    %19 = arith.negf %18 : vector<8x128xf32>
    %20 = math.exp %19 : vector<8x128xf32>
    %cst_17 = arith.constant 1.000000e+00 : f32
    %21 = vector.broadcast %cst_17 : f32 to vector<8x128xf32>
    %22 = arith.addf %21, %20 : vector<8x128xf32>
    %23 = arith.divf %21, %22 : vector<8x128xf32>
    %24 = vector.extract_strided_slice %23 {offsets = [0, 0], sizes = [8, 32], strides = [1, 1]} : vector<8x128xf32> to vector<8x32xf32>
    %25 = vector.extract_strided_slice %23 {offsets = [0, 32], sizes = [8, 32], strides = [1, 1]} : vector<8x128xf32> to vector<8x32xf32>
    %26 = vector.extract_strided_slice %23 {offsets = [0, 64], sizes = [8, 32], strides = [1, 1]} : vector<8x128xf32> to vector<8x32xf32>
    %cst_18 = arith.constant 2.000000e+00 : f32
    %27 = vector.broadcast %cst_18 : f32 to vector<8x32xf32>
    %28 = arith.mulf %27, %26 : vector<8x32xf32>
    %cst_19 = arith.constant 1.000000e+00 : f32
    %29 = vector.broadcast %cst_19 : f32 to vector<8x32xf32>
    %30 = arith.subf %28, %29 : vector<8x32xf32>
    %31 = vector.extract_strided_slice %23 {offsets = [0, 96], sizes = [8, 32], strides = [1, 1]} : vector<8x128xf32> to vector<8x32xf32>
    %32 = arith.mulf %25, %13 : vector<8x32xf32>
    %33 = arith.mulf %24, %30 : vector<8x32xf32>
    %34 = arith.addf %32, %33 : vector<8x32xf32>
    %35 = math.tanh %34 : vector<8x32xf32>
    %36 = arith.mulf %31, %35 : vector<8x32xf32>
    %37 = arith.truncf %36 : vector<8x32xf32> to vector<8x32xbf16>
    %c1 = arith.constant 1 : index
    %c0_20 = arith.constant 0 : index
    %c0_21 = arith.constant 0 : index
    %38 = vector.load %arg10[%c1, %c0_20, %c0_21] : memref<32x8x128xf32, #tpu.memory_space<vmem>>, vector<1x8x128xf32>
    %39 = vector.shape_cast %38 : vector<1x8x128xf32> to vector<8x128xf32>
    %cst_22 = arith.constant dense<0.000000e+00> : vector<8x128xf32>
    %40 = tpu.matmul %37, %11, %cst_22 {dimension_numbers = #tpu.dot_dimension_numbers<[1], [0], [0], [1], [0, 0, 1, 1], [], []>} : vector<8x32xbf16>, vector<32x128xbf16>, vector<8x128xf32> -> vector<8x128xf32>
    %41 = arith.addf %39, %40 : vector<8x128xf32>
    %42 = arith.negf %41 : vector<8x128xf32>
    %43 = math.exp %42 : vector<8x128xf32>
    %cst_23 = arith.constant 1.000000e+00 : f32
    %44 = vector.broadcast %cst_23 : f32 to vector<8x128xf32>
    %45 = arith.addf %44, %43 : vector<8x128xf32>
    %46 = arith.divf %44, %45 : vector<8x128xf32>
    %47 = vector.extract_strided_slice %46 {offsets = [0, 0], sizes = [8, 32], strides = [1, 1]} : vector<8x128xf32> to vector<8x32xf32>
    %48 = vector.extract_strided_slice %46 {offsets = [0, 32], sizes = [8, 32], strides = [1, 1]} : vector<8x128xf32> to vector<8x32xf32>
    %49 = vector.extract_strided_slice %46 {offsets = [0, 64], sizes = [8, 32], strides = [1, 1]} : vector<8x128xf32> to vector<8x32xf32>
    %cst_24 = arith.constant 2.000000e+00 : f32
    %50 = vector.broadcast %cst_24 : f32 to vector<8x32xf32>
    %51 = arith.mulf %50, %49 : vector<8x32xf32>
    %cst_25 = arith.constant 1.000000e+00 : f32
    %52 = vector.broadcast %cst_25 : f32 to vector<8x32xf32>
    %53 = arith.subf %51, %52 : vector<8x32xf32>
    %54 = vector.extract_strided_slice %46 {offsets = [0, 96], sizes = [8, 32], strides = [1, 1]} : vector<8x128xf32> to vector<8x32xf32>
    %55 = arith.mulf %48, %34 : vector<8x32xf32>
    %56 = arith.mulf %47, %53 : vector<8x32xf32>
    %57 = arith.addf %55, %56 : vector<8x32xf32>
    %58 = math.tanh %57 : vector<8x32xf32>
    %59 = arith.mulf %54, %58 : vector<8x32xf32>
    %60 = arith.truncf %59 : vector<8x32xf32> to vector<8x32xbf16>
    %c2 = arith.constant 2 : index
    %c0_26 = arith.constant 0 : index
    %c0_27 = arith.constant 0 : index
    %61 = vector.load %arg10[%c2, %c0_26, %c0_27] : memref<32x8x128xf32, #tpu.memory_space<vmem>>, vector<1x8x128xf32>
    %62 = vector.shape_cast %61 : vector<1x8x128xf32> to vector<8x128xf32>
    %cst_28 = arith.constant dense<0.000000e+00> : vector<8x128xf32>
    %63 = tpu.matmul %60, %11, %cst_28 {dimension_numbers = #tpu.dot_dimension_numbers<[1], [0], [0], [1], [0, 0, 1, 1], [], []>} : vector<8x32xbf16>, vector<32x128xbf16>, vector<8x128xf32> -> vector<8x128xf32>
    %64 = arith.addf %62, %63 : vector<8x128xf32>
    %65 = arith.negf %64 : vector<8x128xf32>
    %66 = math.exp %65 : vector<8x128xf32>
    %cst_29 = arith.constant 1.000000e+00 : f32
    %67 = vector.broadcast %cst_29 : f32 to vector<8x128xf32>
    %68 = arith.addf %67, %66 : vector<8x128xf32>
    %69 = arith.divf %67, %68 : vector<8x128xf32>
    %70 = vector.extract_strided_slice %69 {offsets = [0, 0], sizes = [8, 32], strides = [1, 1]} : vector<8x128xf32> to vector<8x32xf32>
    %71 = vector.extract_strided_slice %69 {offsets = [0, 32], sizes = [8, 32], strides = [1, 1]} : vector<8x128xf32> to vector<8x32xf32>
    %72 = vector.extract_strided_slice %69 {offsets = [0, 64], sizes = [8, 32], strides = [1, 1]} : vector<8x128xf32> to vector<8x32xf32>
    %cst_30 = arith.constant 2.000000e+00 : f32
    %73 = vector.broadcast %cst_30 : f32 to vector<8x32xf32>
    %74 = arith.mulf %73, %72 : vector<8x32xf32>
    %cst_31 = arith.constant 1.000000e+00 : f32
    %75 = vector.broadcast %cst_31 : f32 to vector<8x32xf32>
    %76 = arith.subf %74, %75 : vector<8x32xf32>
    %77 = vector.extract_strided_slice %69 {offsets = [0, 96], sizes = [8, 32], strides = [1, 1]} : vector<8x128xf32> to vector<8x32xf32>
    %78 = arith.mulf %71, %57 : vector<8x32xf32>
    %79 = arith.mulf %70, %76 : vector<8x32xf32>
    %80 = arith.addf %78, %79 : vector<8x32xf32>
    %81 = math.tanh %80 : vector<8x32xf32>
    %82 = arith.mulf %77, %81 : vector<8x32xf32>
    %83 = arith.truncf %82 : vector<8x32xf32> to vector<8x32xbf16>
    %c3 = arith.constant 3 : index
    %c0_32 = arith.constant 0 : index
    %c0_33 = arith.constant 0 : index
    %84 = vector.load %arg10[%c3, %c0_32, %c0_33] : memref<32x8x128xf32, #tpu.memory_space<vmem>>, vector<1x8x128xf32>
    %85 = vector.shape_cast %84 : vector<1x8x128xf32> to vector<8x128xf32>
    %cst_34 = arith.constant dense<0.000000e+00> : vector<8x128xf32>
    %86 = tpu.matmul %83, %11, %cst_34 {dimension_numbers = #tpu.dot_dimension_numbers<[1], [0], [0], [1], [0, 0, 1, 1], [], []>} : vector<8x32xbf16>, vector<32x128xbf16>, vector<8x128xf32> -> vector<8x128xf32>
    %87 = arith.addf %85, %86 : vector<8x128xf32>
    %88 = arith.negf %87 : vector<8x128xf32>
    %89 = math.exp %88 : vector<8x128xf32>
    %cst_35 = arith.constant 1.000000e+00 : f32
    %90 = vector.broadcast %cst_35 : f32 to vector<8x128xf32>
    %91 = arith.addf %90, %89 : vector<8x128xf32>
    %92 = arith.divf %90, %91 : vector<8x128xf32>
    %93 = vector.extract_strided_slice %92 {offsets = [0, 0], sizes = [8, 32], strides = [1, 1]} : vector<8x128xf32> to vector<8x32xf32>
    %94 = vector.extract_strided_slice %92 {offsets = [0, 32], sizes = [8, 32], strides = [1, 1]} : vector<8x128xf32> to vector<8x32xf32>
    %95 = vector.extract_strided_slice %92 {offsets = [0, 64], sizes = [8, 32], strides = [1, 1]} : vector<8x128xf32> to vector<8x32xf32>
    %cst_36 = arith.constant 2.000000e+00 : f32
    %96 = vector.broadcast %cst_36 : f32 to vector<8x32xf32>
    %97 = arith.mulf %96, %95 : vector<8x32xf32>
    %cst_37 = arith.constant 1.000000e+00 : f32
    %98 = vector.broadcast %cst_37 : f32 to vector<8x32xf32>
    %99 = arith.subf %97, %98 : vector<8x32xf32>
    %100 = vector.extract_strided_slice %92 {offsets = [0, 96], sizes = [8, 32], strides = [1, 1]} : vector<8x128xf32> to vector<8x32xf32>
    %101 = arith.mulf %94, %80 : vector<8x32xf32>
    %102 = arith.mulf %93, %99 : vector<8x32xf32>
    %103 = arith.addf %101, %102 : vector<8x32xf32>
    %104 = math.tanh %103 : vector<8x32xf32>
    %105 = arith.mulf %100, %104 : vector<8x32xf32>
    %106 = arith.truncf %105 : vector<8x32xf32> to vector<8x32xbf16>
    %c4 = arith.constant 4 : index
    %c0_38 = arith.constant 0 : index
    %c0_39 = arith.constant 0 : index
    %107 = vector.load %arg10[%c4, %c0_38, %c0_39] : memref<32x8x128xf32, #tpu.memory_space<vmem>>, vector<1x8x128xf32>
    %108 = vector.shape_cast %107 : vector<1x8x128xf32> to vector<8x128xf32>
    %cst_40 = arith.constant dense<0.000000e+00> : vector<8x128xf32>
    %109 = tpu.matmul %106, %11, %cst_40 {dimension_numbers = #tpu.dot_dimension_numbers<[1], [0], [0], [1], [0, 0, 1, 1], [], []>} : vector<8x32xbf16>, vector<32x128xbf16>, vector<8x128xf32> -> vector<8x128xf32>
    %110 = arith.addf %108, %109 : vector<8x128xf32>
    %111 = arith.negf %110 : vector<8x128xf32>
    %112 = math.exp %111 : vector<8x128xf32>
    %cst_41 = arith.constant 1.000000e+00 : f32
    %113 = vector.broadcast %cst_41 : f32 to vector<8x128xf32>
    %114 = arith.addf %113, %112 : vector<8x128xf32>
    %115 = arith.divf %113, %114 : vector<8x128xf32>
    %116 = vector.extract_strided_slice %115 {offsets = [0, 0], sizes = [8, 32], strides = [1, 1]} : vector<8x128xf32> to vector<8x32xf32>
    %117 = vector.extract_strided_slice %115 {offsets = [0, 32], sizes = [8, 32], strides = [1, 1]} : vector<8x128xf32> to vector<8x32xf32>
    %118 = vector.extract_strided_slice %115 {offsets = [0, 64], sizes = [8, 32], strides = [1, 1]} : vector<8x128xf32> to vector<8x32xf32>
    %cst_42 = arith.constant 2.000000e+00 : f32
    %119 = vector.broadcast %cst_42 : f32 to vector<8x32xf32>
    %120 = arith.mulf %119, %118 : vector<8x32xf32>
    %cst_43 = arith.constant 1.000000e+00 : f32
    %121 = vector.broadcast %cst_43 : f32 to vector<8x32xf32>
    %122 = arith.subf %120, %121 : vector<8x32xf32>
    %123 = vector.extract_strided_slice %115 {offsets = [0, 96], sizes = [8, 32], strides = [1, 1]} : vector<8x128xf32> to vector<8x32xf32>
    %124 = arith.mulf %117, %103 : vector<8x32xf32>
    %125 = arith.mulf %116, %122 : vector<8x32xf32>
    %126 = arith.addf %124, %125 : vector<8x32xf32>
    %127 = math.tanh %126 : vector<8x32xf32>
    %128 = arith.mulf %123, %127 : vector<8x32xf32>
    %129 = arith.truncf %128 : vector<8x32xf32> to vector<8x32xbf16>
    %c5 = arith.constant 5 : index
    %c0_44 = arith.constant 0 : index
    %c0_45 = arith.constant 0 : index
    %130 = vector.load %arg10[%c5, %c0_44, %c0_45] : memref<32x8x128xf32, #tpu.memory_space<vmem>>, vector<1x8x128xf32>
    %131 = vector.shape_cast %130 : vector<1x8x128xf32> to vector<8x128xf32>
    %cst_46 = arith.constant dense<0.000000e+00> : vector<8x128xf32>
    %132 = tpu.matmul %129, %11, %cst_46 {dimension_numbers = #tpu.dot_dimension_numbers<[1], [0], [0], [1], [0, 0, 1, 1], [], []>} : vector<8x32xbf16>, vector<32x128xbf16>, vector<8x128xf32> -> vector<8x128xf32>
    %133 = arith.addf %131, %132 : vector<8x128xf32>
    %134 = arith.negf %133 : vector<8x128xf32>
    %135 = math.exp %134 : vector<8x128xf32>
    %cst_47 = arith.constant 1.000000e+00 : f32
    %136 = vector.broadcast %cst_47 : f32 to vector<8x128xf32>
    %137 = arith.addf %136, %135 : vector<8x128xf32>
    %138 = arith.divf %136, %137 : vector<8x128xf32>
    %139 = vector.extract_strided_slice %138 {offsets = [0, 0], sizes = [8, 32], strides = [1, 1]} : vector<8x128xf32> to vector<8x32xf32>
    %140 = vector.extract_strided_slice %138 {offsets = [0, 32], sizes = [8, 32], strides = [1, 1]} : vector<8x128xf32> to vector<8x32xf32>
    %141 = vector.extract_strided_slice %138 {offsets = [0, 64], sizes = [8, 32], strides = [1, 1]} : vector<8x128xf32> to vector<8x32xf32>
    %cst_48 = arith.constant 2.000000e+00 : f32
    %142 = vector.broadcast %cst_48 : f32 to vector<8x32xf32>
    %143 = arith.mulf %142, %141 : vector<8x32xf32>
    %cst_49 = arith.constant 1.000000e+00 : f32
    %144 = vector.broadcast %cst_49 : f32 to vector<8x32xf32>
    %145 = arith.subf %143, %144 : vector<8x32xf32>
    %146 = vector.extract_strided_slice %138 {offsets = [0, 96], sizes = [8, 32], strides = [1, 1]} : vector<8x128xf32> to vector<8x32xf32>
    %147 = arith.mulf %140, %126 : vector<8x32xf32>
    %148 = arith.mulf %139, %145 : vector<8x32xf32>
    %149 = arith.addf %147, %148 : vector<8x32xf32>
    %150 = math.tanh %149 : vector<8x32xf32>
    %151 = arith.mulf %146, %150 : vector<8x32xf32>
    %152 = arith.truncf %151 : vector<8x32xf32> to vector<8x32xbf16>
    %c6 = arith.constant 6 : index
    %c0_50 = arith.constant 0 : index
    %c0_51 = arith.constant 0 : index
    %153 = vector.load %arg10[%c6, %c0_50, %c0_51] : memref<32x8x128xf32, #tpu.memory_space<vmem>>, vector<1x8x128xf32>
    %154 = vector.shape_cast %153 : vector<1x8x128xf32> to vector<8x128xf32>
    %cst_52 = arith.constant dense<0.000000e+00> : vector<8x128xf32>
    %155 = tpu.matmul %152, %11, %cst_52 {dimension_numbers = #tpu.dot_dimension_numbers<[1], [0], [0], [1], [0, 0, 1, 1], [], []>} : vector<8x32xbf16>, vector<32x128xbf16>, vector<8x128xf32> -> vector<8x128xf32>
    %156 = arith.addf %154, %155 : vector<8x128xf32>
    %157 = arith.negf %156 : vector<8x128xf32>
    %158 = math.exp %157 : vector<8x128xf32>
    %cst_53 = arith.constant 1.000000e+00 : f32
    %159 = vector.broadcast %cst_53 : f32 to vector<8x128xf32>
    %160 = arith.addf %159, %158 : vector<8x128xf32>
    %161 = arith.divf %159, %160 : vector<8x128xf32>
    %162 = vector.extract_strided_slice %161 {offsets = [0, 0], sizes = [8, 32], strides = [1, 1]} : vector<8x128xf32> to vector<8x32xf32>
    %163 = vector.extract_strided_slice %161 {offsets = [0, 32], sizes = [8, 32], strides = [1, 1]} : vector<8x128xf32> to vector<8x32xf32>
    %164 = vector.extract_strided_slice %161 {offsets = [0, 64], sizes = [8, 32], strides = [1, 1]} : vector<8x128xf32> to vector<8x32xf32>
    %cst_54 = arith.constant 2.000000e+00 : f32
    %165 = vector.broadcast %cst_54 : f32 to vector<8x32xf32>
    %166 = arith.mulf %165, %164 : vector<8x32xf32>
    %cst_55 = arith.constant 1.000000e+00 : f32
    %167 = vector.broadcast %cst_55 : f32 to vector<8x32xf32>
    %168 = arith.subf %166, %167 : vector<8x32xf32>
    %169 = vector.extract_strided_slice %161 {offsets = [0, 96], sizes = [8, 32], strides = [1, 1]} : vector<8x128xf32> to vector<8x32xf32>
    %170 = arith.mulf %163, %149 : vector<8x32xf32>
    %171 = arith.mulf %162, %168 : vector<8x32xf32>
    %172 = arith.addf %170, %171 : vector<8x32xf32>
    %173 = math.tanh %172 : vector<8x32xf32>
    %174 = arith.mulf %169, %173 : vector<8x32xf32>
    %175 = arith.truncf %174 : vector<8x32xf32> to vector<8x32xbf16>
    %c7 = arith.constant 7 : index
    %c0_56 = arith.constant 0 : index
    %c0_57 = arith.constant 0 : index
    %176 = vector.load %arg10[%c7, %c0_56, %c0_57] : memref<32x8x128xf32, #tpu.memory_space<vmem>>, vector<1x8x128xf32>
    %177 = vector.shape_cast %176 : vector<1x8x128xf32> to vector<8x128xf32>
    %cst_58 = arith.constant dense<0.000000e+00> : vector<8x128xf32>
    %178 = tpu.matmul %175, %11, %cst_58 {dimension_numbers = #tpu.dot_dimension_numbers<[1], [0], [0], [1], [0, 0, 1, 1], [], []>} : vector<8x32xbf16>, vector<32x128xbf16>, vector<8x128xf32> -> vector<8x128xf32>
    %179 = arith.addf %177, %178 : vector<8x128xf32>
    %180 = arith.negf %179 : vector<8x128xf32>
    %181 = math.exp %180 : vector<8x128xf32>
    %cst_59 = arith.constant 1.000000e+00 : f32
    %182 = vector.broadcast %cst_59 : f32 to vector<8x128xf32>
    %183 = arith.addf %182, %181 : vector<8x128xf32>
    %184 = arith.divf %182, %183 : vector<8x128xf32>
    %185 = vector.extract_strided_slice %184 {offsets = [0, 0], sizes = [8, 32], strides = [1, 1]} : vector<8x128xf32> to vector<8x32xf32>
    %186 = vector.extract_strided_slice %184 {offsets = [0, 32], sizes = [8, 32], strides = [1, 1]} : vector<8x128xf32> to vector<8x32xf32>
    %187 = vector.extract_strided_slice %184 {offsets = [0, 64], sizes = [8, 32], strides = [1, 1]} : vector<8x128xf32> to vector<8x32xf32>
    %cst_60 = arith.constant 2.000000e+00 : f32
    %188 = vector.broadcast %cst_60 : f32 to vector<8x32xf32>
    %189 = arith.mulf %188, %187 : vector<8x32xf32>
    %cst_61 = arith.constant 1.000000e+00 : f32
    %190 = vector.broadcast %cst_61 : f32 to vector<8x32xf32>
    %191 = arith.subf %189, %190 : vector<8x32xf32>
    %192 = vector.extract_strided_slice %184 {offsets = [0, 96], sizes = [8, 32], strides = [1, 1]} : vector<8x128xf32> to vector<8x32xf32>
    %193 = arith.mulf %186, %172 : vector<8x32xf32>
    %194 = arith.mulf %185, %191 : vector<8x32xf32>
    %195 = arith.addf %193, %194 : vector<8x32xf32>
    %196 = math.tanh %195 : vector<8x32xf32>
    %197 = arith.mulf %192, %196 : vector<8x32xf32>
    %198 = arith.truncf %197 : vector<8x32xf32> to vector<8x32xbf16>
    %c8 = arith.constant 8 : index
    %c0_62 = arith.constant 0 : index
    %c0_63 = arith.constant 0 : index
    %199 = vector.load %arg10[%c8, %c0_62, %c0_63] : memref<32x8x128xf32, #tpu.memory_space<vmem>>, vector<1x8x128xf32>
    %200 = vector.shape_cast %199 : vector<1x8x128xf32> to vector<8x128xf32>
    %cst_64 = arith.constant dense<0.000000e+00> : vector<8x128xf32>
    %201 = tpu.matmul %198, %11, %cst_64 {dimension_numbers = #tpu.dot_dimension_numbers<[1], [0], [0], [1], [0, 0, 1, 1], [], []>} : vector<8x32xbf16>, vector<32x128xbf16>, vector<8x128xf32> -> vector<8x128xf32>
    %202 = arith.addf %200, %201 : vector<8x128xf32>
    %203 = arith.negf %202 : vector<8x128xf32>
    %204 = math.exp %203 : vector<8x128xf32>
    %cst_65 = arith.constant 1.000000e+00 : f32
    %205 = vector.broadcast %cst_65 : f32 to vector<8x128xf32>
    %206 = arith.addf %205, %204 : vector<8x128xf32>
    %207 = arith.divf %205, %206 : vector<8x128xf32>
    %208 = vector.extract_strided_slice %207 {offsets = [0, 0], sizes = [8, 32], strides = [1, 1]} : vector<8x128xf32> to vector<8x32xf32>
    %209 = vector.extract_strided_slice %207 {offsets = [0, 32], sizes = [8, 32], strides = [1, 1]} : vector<8x128xf32> to vector<8x32xf32>
    %210 = vector.extract_strided_slice %207 {offsets = [0, 64], sizes = [8, 32], strides = [1, 1]} : vector<8x128xf32> to vector<8x32xf32>
    %cst_66 = arith.constant 2.000000e+00 : f32
    %211 = vector.broadcast %cst_66 : f32 to vector<8x32xf32>
    %212 = arith.mulf %211, %210 : vector<8x32xf32>
    %cst_67 = arith.constant 1.000000e+00 : f32
    %213 = vector.broadcast %cst_67 : f32 to vector<8x32xf32>
    %214 = arith.subf %212, %213 : vector<8x32xf32>
    %215 = vector.extract_strided_slice %207 {offsets = [0, 96], sizes = [8, 32], strides = [1, 1]} : vector<8x128xf32> to vector<8x32xf32>
    %216 = arith.mulf %209, %195 : vector<8x32xf32>
    %217 = arith.mulf %208, %214 : vector<8x32xf32>
    %218 = arith.addf %216, %217 : vector<8x32xf32>
    %219 = math.tanh %218 : vector<8x32xf32>
    %220 = arith.mulf %215, %219 : vector<8x32xf32>
    %221 = arith.truncf %220 : vector<8x32xf32> to vector<8x32xbf16>
    %c9 = arith.constant 9 : index
    %c0_68 = arith.constant 0 : index
    %c0_69 = arith.constant 0 : index
    %222 = vector.load %arg10[%c9, %c0_68, %c0_69] : memref<32x8x128xf32, #tpu.memory_space<vmem>>, vector<1x8x128xf32>
    %223 = vector.shape_cast %222 : vector<1x8x128xf32> to vector<8x128xf32>
    %cst_70 = arith.constant dense<0.000000e+00> : vector<8x128xf32>
    %224 = tpu.matmul %221, %11, %cst_70 {dimension_numbers = #tpu.dot_dimension_numbers<[1], [0], [0], [1], [0, 0, 1, 1], [], []>} : vector<8x32xbf16>, vector<32x128xbf16>, vector<8x128xf32> -> vector<8x128xf32>
    %225 = arith.addf %223, %224 : vector<8x128xf32>
    %226 = arith.negf %225 : vector<8x128xf32>
    %227 = math.exp %226 : vector<8x128xf32>
    %cst_71 = arith.constant 1.000000e+00 : f32
    %228 = vector.broadcast %cst_71 : f32 to vector<8x128xf32>
    %229 = arith.addf %228, %227 : vector<8x128xf32>
    %230 = arith.divf %228, %229 : vector<8x128xf32>
    %231 = vector.extract_strided_slice %230 {offsets = [0, 0], sizes = [8, 32], strides = [1, 1]} : vector<8x128xf32> to vector<8x32xf32>
    %232 = vector.extract_strided_slice %230 {offsets = [0, 32], sizes = [8, 32], strides = [1, 1]} : vector<8x128xf32> to vector<8x32xf32>
    %233 = vector.extract_strided_slice %230 {offsets = [0, 64], sizes = [8, 32], strides = [1, 1]} : vector<8x128xf32> to vector<8x32xf32>
    %cst_72 = arith.constant 2.000000e+00 : f32
    %234 = vector.broadcast %cst_72 : f32 to vector<8x32xf32>
    %235 = arith.mulf %234, %233 : vector<8x32xf32>
    %cst_73 = arith.constant 1.000000e+00 : f32
    %236 = vector.broadcast %cst_73 : f32 to vector<8x32xf32>
    %237 = arith.subf %235, %236 : vector<8x32xf32>
    %238 = vector.extract_strided_slice %230 {offsets = [0, 96], sizes = [8, 32], strides = [1, 1]} : vector<8x128xf32> to vector<8x32xf32>
    %239 = arith.mulf %232, %218 : vector<8x32xf32>
    %240 = arith.mulf %231, %237 : vector<8x32xf32>
    %241 = arith.addf %239, %240 : vector<8x32xf32>
    %242 = math.tanh %241 : vector<8x32xf32>
    %243 = arith.mulf %238, %242 : vector<8x32xf32>
    %244 = arith.truncf %243 : vector<8x32xf32> to vector<8x32xbf16>
    %c10 = arith.constant 10 : index
    %c0_74 = arith.constant 0 : index
    %c0_75 = arith.constant 0 : index
    %245 = vector.load %arg10[%c10, %c0_74, %c0_75] : memref<32x8x128xf32, #tpu.memory_space<vmem>>, vector<1x8x128xf32>
    %246 = vector.shape_cast %245 : vector<1x8x128xf32> to vector<8x128xf32>
    %cst_76 = arith.constant dense<0.000000e+00> : vector<8x128xf32>
    %247 = tpu.matmul %244, %11, %cst_76 {dimension_numbers = #tpu.dot_dimension_numbers<[1], [0], [0], [1], [0, 0, 1, 1], [], []>} : vector<8x32xbf16>, vector<32x128xbf16>, vector<8x128xf32> -> vector<8x128xf32>
    %248 = arith.addf %246, %247 : vector<8x128xf32>
    %249 = arith.negf %248 : vector<8x128xf32>
    %250 = math.exp %249 : vector<8x128xf32>
    %cst_77 = arith.constant 1.000000e+00 : f32
    %251 = vector.broadcast %cst_77 : f32 to vector<8x128xf32>
    %252 = arith.addf %251, %250 : vector<8x128xf32>
    %253 = arith.divf %251, %252 : vector<8x128xf32>
    %254 = vector.extract_strided_slice %253 {offsets = [0, 0], sizes = [8, 32], strides = [1, 1]} : vector<8x128xf32> to vector<8x32xf32>
    %255 = vector.extract_strided_slice %253 {offsets = [0, 32], sizes = [8, 32], strides = [1, 1]} : vector<8x128xf32> to vector<8x32xf32>
    %256 = vector.extract_strided_slice %253 {offsets = [0, 64], sizes = [8, 32], strides = [1, 1]} : vector<8x128xf32> to vector<8x32xf32>
    %cst_78 = arith.constant 2.000000e+00 : f32
    %257 = vector.broadcast %cst_78 : f32 to vector<8x32xf32>
    %258 = arith.mulf %257, %256 : vector<8x32xf32>
    %cst_79 = arith.constant 1.000000e+00 : f32
    %259 = vector.broadcast %cst_79 : f32 to vector<8x32xf32>
    %260 = arith.subf %258, %259 : vector<8x32xf32>
    %261 = vector.extract_strided_slice %253 {offsets = [0, 96], sizes = [8, 32], strides = [1, 1]} : vector<8x128xf32> to vector<8x32xf32>
    %262 = arith.mulf %255, %241 : vector<8x32xf32>
    %263 = arith.mulf %254, %260 : vector<8x32xf32>
    %264 = arith.addf %262, %263 : vector<8x32xf32>
    %265 = math.tanh %264 : vector<8x32xf32>
    %266 = arith.mulf %261, %265 : vector<8x32xf32>
    %267 = arith.truncf %266 : vector<8x32xf32> to vector<8x32xbf16>
    %c11 = arith.constant 11 : index
    %c0_80 = arith.constant 0 : index
    %c0_81 = arith.constant 0 : index
    %268 = vector.load %arg10[%c11, %c0_80, %c0_81] : memref<32x8x128xf32, #tpu.memory_space<vmem>>, vector<1x8x128xf32>
    %269 = vector.shape_cast %268 : vector<1x8x128xf32> to vector<8x128xf32>
    %cst_82 = arith.constant dense<0.000000e+00> : vector<8x128xf32>
    %270 = tpu.matmul %267, %11, %cst_82 {dimension_numbers = #tpu.dot_dimension_numbers<[1], [0], [0], [1], [0, 0, 1, 1], [], []>} : vector<8x32xbf16>, vector<32x128xbf16>, vector<8x128xf32> -> vector<8x128xf32>
    %271 = arith.addf %269, %270 : vector<8x128xf32>
    %272 = arith.negf %271 : vector<8x128xf32>
    %273 = math.exp %272 : vector<8x128xf32>
    %cst_83 = arith.constant 1.000000e+00 : f32
    %274 = vector.broadcast %cst_83 : f32 to vector<8x128xf32>
    %275 = arith.addf %274, %273 : vector<8x128xf32>
    %276 = arith.divf %274, %275 : vector<8x128xf32>
    %277 = vector.extract_strided_slice %276 {offsets = [0, 0], sizes = [8, 32], strides = [1, 1]} : vector<8x128xf32> to vector<8x32xf32>
    %278 = vector.extract_strided_slice %276 {offsets = [0, 32], sizes = [8, 32], strides = [1, 1]} : vector<8x128xf32> to vector<8x32xf32>
    %279 = vector.extract_strided_slice %276 {offsets = [0, 64], sizes = [8, 32], strides = [1, 1]} : vector<8x128xf32> to vector<8x32xf32>
    %cst_84 = arith.constant 2.000000e+00 : f32
    %280 = vector.broadcast %cst_84 : f32 to vector<8x32xf32>
    %281 = arith.mulf %280, %279 : vector<8x32xf32>
    %cst_85 = arith.constant 1.000000e+00 : f32
    %282 = vector.broadcast %cst_85 : f32 to vector<8x32xf32>
    %283 = arith.subf %281, %282 : vector<8x32xf32>
    %284 = vector.extract_strided_slice %276 {offsets = [0, 96], sizes = [8, 32], strides = [1, 1]} : vector<8x128xf32> to vector<8x32xf32>
    %285 = arith.mulf %278, %264 : vector<8x32xf32>
    %286 = arith.mulf %277, %283 : vector<8x32xf32>
    %287 = arith.addf %285, %286 : vector<8x32xf32>
    %288 = math.tanh %287 : vector<8x32xf32>
    %289 = arith.mulf %284, %288 : vector<8x32xf32>
    %290 = arith.truncf %289 : vector<8x32xf32> to vector<8x32xbf16>
    %c12 = arith.constant 12 : index
    %c0_86 = arith.constant 0 : index
    %c0_87 = arith.constant 0 : index
    %291 = vector.load %arg10[%c12, %c0_86, %c0_87] : memref<32x8x128xf32, #tpu.memory_space<vmem>>, vector<1x8x128xf32>
    %292 = vector.shape_cast %291 : vector<1x8x128xf32> to vector<8x128xf32>
    %cst_88 = arith.constant dense<0.000000e+00> : vector<8x128xf32>
    %293 = tpu.matmul %290, %11, %cst_88 {dimension_numbers = #tpu.dot_dimension_numbers<[1], [0], [0], [1], [0, 0, 1, 1], [], []>} : vector<8x32xbf16>, vector<32x128xbf16>, vector<8x128xf32> -> vector<8x128xf32>
    %294 = arith.addf %292, %293 : vector<8x128xf32>
    %295 = arith.negf %294 : vector<8x128xf32>
    %296 = math.exp %295 : vector<8x128xf32>
    %cst_89 = arith.constant 1.000000e+00 : f32
    %297 = vector.broadcast %cst_89 : f32 to vector<8x128xf32>
    %298 = arith.addf %297, %296 : vector<8x128xf32>
    %299 = arith.divf %297, %298 : vector<8x128xf32>
    %300 = vector.extract_strided_slice %299 {offsets = [0, 0], sizes = [8, 32], strides = [1, 1]} : vector<8x128xf32> to vector<8x32xf32>
    %301 = vector.extract_strided_slice %299 {offsets = [0, 32], sizes = [8, 32], strides = [1, 1]} : vector<8x128xf32> to vector<8x32xf32>
    %302 = vector.extract_strided_slice %299 {offsets = [0, 64], sizes = [8, 32], strides = [1, 1]} : vector<8x128xf32> to vector<8x32xf32>
    %cst_90 = arith.constant 2.000000e+00 : f32
    %303 = vector.broadcast %cst_90 : f32 to vector<8x32xf32>
    %304 = arith.mulf %303, %302 : vector<8x32xf32>
    %cst_91 = arith.constant 1.000000e+00 : f32
    %305 = vector.broadcast %cst_91 : f32 to vector<8x32xf32>
    %306 = arith.subf %304, %305 : vector<8x32xf32>
    %307 = vector.extract_strided_slice %299 {offsets = [0, 96], sizes = [8, 32], strides = [1, 1]} : vector<8x128xf32> to vector<8x32xf32>
    %308 = arith.mulf %301, %287 : vector<8x32xf32>
    %309 = arith.mulf %300, %306 : vector<8x32xf32>
    %310 = arith.addf %308, %309 : vector<8x32xf32>
    %311 = math.tanh %310 : vector<8x32xf32>
    %312 = arith.mulf %307, %311 : vector<8x32xf32>
    %313 = arith.truncf %312 : vector<8x32xf32> to vector<8x32xbf16>
    %c13 = arith.constant 13 : index
    %c0_92 = arith.constant 0 : index
    %c0_93 = arith.constant 0 : index
    %314 = vector.load %arg10[%c13, %c0_92, %c0_93] : memref<32x8x128xf32, #tpu.memory_space<vmem>>, vector<1x8x128xf32>
    %315 = vector.shape_cast %314 : vector<1x8x128xf32> to vector<8x128xf32>
    %cst_94 = arith.constant dense<0.000000e+00> : vector<8x128xf32>
    %316 = tpu.matmul %313, %11, %cst_94 {dimension_numbers = #tpu.dot_dimension_numbers<[1], [0], [0], [1], [0, 0, 1, 1], [], []>} : vector<8x32xbf16>, vector<32x128xbf16>, vector<8x128xf32> -> vector<8x128xf32>
    %317 = arith.addf %315, %316 : vector<8x128xf32>
    %318 = arith.negf %317 : vector<8x128xf32>
    %319 = math.exp %318 : vector<8x128xf32>
    %cst_95 = arith.constant 1.000000e+00 : f32
    %320 = vector.broadcast %cst_95 : f32 to vector<8x128xf32>
    %321 = arith.addf %320, %319 : vector<8x128xf32>
    %322 = arith.divf %320, %321 : vector<8x128xf32>
    %323 = vector.extract_strided_slice %322 {offsets = [0, 0], sizes = [8, 32], strides = [1, 1]} : vector<8x128xf32> to vector<8x32xf32>
    %324 = vector.extract_strided_slice %322 {offsets = [0, 32], sizes = [8, 32], strides = [1, 1]} : vector<8x128xf32> to vector<8x32xf32>
    %325 = vector.extract_strided_slice %322 {offsets = [0, 64], sizes = [8, 32], strides = [1, 1]} : vector<8x128xf32> to vector<8x32xf32>
    %cst_96 = arith.constant 2.000000e+00 : f32
    %326 = vector.broadcast %cst_96 : f32 to vector<8x32xf32>
    %327 = arith.mulf %326, %325 : vector<8x32xf32>
    %cst_97 = arith.constant 1.000000e+00 : f32
    %328 = vector.broadcast %cst_97 : f32 to vector<8x32xf32>
    %329 = arith.subf %327, %328 : vector<8x32xf32>
    %330 = vector.extract_strided_slice %322 {offsets = [0, 96], sizes = [8, 32], strides = [1, 1]} : vector<8x128xf32> to vector<8x32xf32>
    %331 = arith.mulf %324, %310 : vector<8x32xf32>
    %332 = arith.mulf %323, %329 : vector<8x32xf32>
    %333 = arith.addf %331, %332 : vector<8x32xf32>
    %334 = math.tanh %333 : vector<8x32xf32>
    %335 = arith.mulf %330, %334 : vector<8x32xf32>
    %336 = arith.truncf %335 : vector<8x32xf32> to vector<8x32xbf16>
    %c14 = arith.constant 14 : index
    %c0_98 = arith.constant 0 : index
    %c0_99 = arith.constant 0 : index
    %337 = vector.load %arg10[%c14, %c0_98, %c0_99] : memref<32x8x128xf32, #tpu.memory_space<vmem>>, vector<1x8x128xf32>
    %338 = vector.shape_cast %337 : vector<1x8x128xf32> to vector<8x128xf32>
    %cst_100 = arith.constant dense<0.000000e+00> : vector<8x128xf32>
    %339 = tpu.matmul %336, %11, %cst_100 {dimension_numbers = #tpu.dot_dimension_numbers<[1], [0], [0], [1], [0, 0, 1, 1], [], []>} : vector<8x32xbf16>, vector<32x128xbf16>, vector<8x128xf32> -> vector<8x128xf32>
    %340 = arith.addf %338, %339 : vector<8x128xf32>
    %341 = arith.negf %340 : vector<8x128xf32>
    %342 = math.exp %341 : vector<8x128xf32>
    %cst_101 = arith.constant 1.000000e+00 : f32
    %343 = vector.broadcast %cst_101 : f32 to vector<8x128xf32>
    %344 = arith.addf %343, %342 : vector<8x128xf32>
    %345 = arith.divf %343, %344 : vector<8x128xf32>
    %346 = vector.extract_strided_slice %345 {offsets = [0, 0], sizes = [8, 32], strides = [1, 1]} : vector<8x128xf32> to vector<8x32xf32>
    %347 = vector.extract_strided_slice %345 {offsets = [0, 32], sizes = [8, 32], strides = [1, 1]} : vector<8x128xf32> to vector<8x32xf32>
    %348 = vector.extract_strided_slice %345 {offsets = [0, 64], sizes = [8, 32], strides = [1, 1]} : vector<8x128xf32> to vector<8x32xf32>
    %cst_102 = arith.constant 2.000000e+00 : f32
    %349 = vector.broadcast %cst_102 : f32 to vector<8x32xf32>
    %350 = arith.mulf %349, %348 : vector<8x32xf32>
    %cst_103 = arith.constant 1.000000e+00 : f32
    %351 = vector.broadcast %cst_103 : f32 to vector<8x32xf32>
    %352 = arith.subf %350, %351 : vector<8x32xf32>
    %353 = vector.extract_strided_slice %345 {offsets = [0, 96], sizes = [8, 32], strides = [1, 1]} : vector<8x128xf32> to vector<8x32xf32>
    %354 = arith.mulf %347, %333 : vector<8x32xf32>
    %355 = arith.mulf %346, %352 : vector<8x32xf32>
    %356 = arith.addf %354, %355 : vector<8x32xf32>
    %357 = math.tanh %356 : vector<8x32xf32>
    %358 = arith.mulf %353, %357 : vector<8x32xf32>
    %359 = arith.truncf %358 : vector<8x32xf32> to vector<8x32xbf16>
    %c15 = arith.constant 15 : index
    %c0_104 = arith.constant 0 : index
    %c0_105 = arith.constant 0 : index
    %360 = vector.load %arg10[%c15, %c0_104, %c0_105] : memref<32x8x128xf32, #tpu.memory_space<vmem>>, vector<1x8x128xf32>
    %361 = vector.shape_cast %360 : vector<1x8x128xf32> to vector<8x128xf32>
    %cst_106 = arith.constant dense<0.000000e+00> : vector<8x128xf32>
    %362 = tpu.matmul %359, %11, %cst_106 {dimension_numbers = #tpu.dot_dimension_numbers<[1], [0], [0], [1], [0, 0, 1, 1], [], []>} : vector<8x32xbf16>, vector<32x128xbf16>, vector<8x128xf32> -> vector<8x128xf32>
    %363 = arith.addf %361, %362 : vector<8x128xf32>
    %364 = arith.negf %363 : vector<8x128xf32>
    %365 = math.exp %364 : vector<8x128xf32>
    %cst_107 = arith.constant 1.000000e+00 : f32
    %366 = vector.broadcast %cst_107 : f32 to vector<8x128xf32>
    %367 = arith.addf %366, %365 : vector<8x128xf32>
    %368 = arith.divf %366, %367 : vector<8x128xf32>
    %369 = vector.extract_strided_slice %368 {offsets = [0, 0], sizes = [8, 32], strides = [1, 1]} : vector<8x128xf32> to vector<8x32xf32>
    %370 = vector.extract_strided_slice %368 {offsets = [0, 32], sizes = [8, 32], strides = [1, 1]} : vector<8x128xf32> to vector<8x32xf32>
    %371 = vector.extract_strided_slice %368 {offsets = [0, 64], sizes = [8, 32], strides = [1, 1]} : vector<8x128xf32> to vector<8x32xf32>
    %cst_108 = arith.constant 2.000000e+00 : f32
    %372 = vector.broadcast %cst_108 : f32 to vector<8x32xf32>
    %373 = arith.mulf %372, %371 : vector<8x32xf32>
    %cst_109 = arith.constant 1.000000e+00 : f32
    %374 = vector.broadcast %cst_109 : f32 to vector<8x32xf32>
    %375 = arith.subf %373, %374 : vector<8x32xf32>
    %376 = vector.extract_strided_slice %368 {offsets = [0, 96], sizes = [8, 32], strides = [1, 1]} : vector<8x128xf32> to vector<8x32xf32>
    %377 = arith.mulf %370, %356 : vector<8x32xf32>
    %378 = arith.mulf %369, %375 : vector<8x32xf32>
    %379 = arith.addf %377, %378 : vector<8x32xf32>
    %380 = math.tanh %379 : vector<8x32xf32>
    %381 = arith.mulf %376, %380 : vector<8x32xf32>
    %382 = arith.truncf %381 : vector<8x32xf32> to vector<8x32xbf16>
    %c16 = arith.constant 16 : index
    %c0_110 = arith.constant 0 : index
    %c0_111 = arith.constant 0 : index
    %383 = vector.load %arg10[%c16, %c0_110, %c0_111] : memref<32x8x128xf32, #tpu.memory_space<vmem>>, vector<1x8x128xf32>
    %384 = vector.shape_cast %383 : vector<1x8x128xf32> to vector<8x128xf32>
    %cst_112 = arith.constant dense<0.000000e+00> : vector<8x128xf32>
    %385 = tpu.matmul %382, %11, %cst_112 {dimension_numbers = #tpu.dot_dimension_numbers<[1], [0], [0], [1], [0, 0, 1, 1], [], []>} : vector<8x32xbf16>, vector<32x128xbf16>, vector<8x128xf32> -> vector<8x128xf32>
    %386 = arith.addf %384, %385 : vector<8x128xf32>
    %387 = arith.negf %386 : vector<8x128xf32>
    %388 = math.exp %387 : vector<8x128xf32>
    %cst_113 = arith.constant 1.000000e+00 : f32
    %389 = vector.broadcast %cst_113 : f32 to vector<8x128xf32>
    %390 = arith.addf %389, %388 : vector<8x128xf32>
    %391 = arith.divf %389, %390 : vector<8x128xf32>
    %392 = vector.extract_strided_slice %391 {offsets = [0, 0], sizes = [8, 32], strides = [1, 1]} : vector<8x128xf32> to vector<8x32xf32>
    %393 = vector.extract_strided_slice %391 {offsets = [0, 32], sizes = [8, 32], strides = [1, 1]} : vector<8x128xf32> to vector<8x32xf32>
    %394 = vector.extract_strided_slice %391 {offsets = [0, 64], sizes = [8, 32], strides = [1, 1]} : vector<8x128xf32> to vector<8x32xf32>
    %cst_114 = arith.constant 2.000000e+00 : f32
    %395 = vector.broadcast %cst_114 : f32 to vector<8x32xf32>
    %396 = arith.mulf %395, %394 : vector<8x32xf32>
    %cst_115 = arith.constant 1.000000e+00 : f32
    %397 = vector.broadcast %cst_115 : f32 to vector<8x32xf32>
    %398 = arith.subf %396, %397 : vector<8x32xf32>
    %399 = vector.extract_strided_slice %391 {offsets = [0, 96], sizes = [8, 32], strides = [1, 1]} : vector<8x128xf32> to vector<8x32xf32>
    %400 = arith.mulf %393, %379 : vector<8x32xf32>
    %401 = arith.mulf %392, %398 : vector<8x32xf32>
    %402 = arith.addf %400, %401 : vector<8x32xf32>
    %403 = math.tanh %402 : vector<8x32xf32>
    %404 = arith.mulf %399, %403 : vector<8x32xf32>
    %405 = arith.truncf %404 : vector<8x32xf32> to vector<8x32xbf16>
    %c0_116 = arith.constant 0 : index
    %c0_117 = arith.constant 0 : index
    %c0_118 = arith.constant 0 : index
    %406 = vector.load %arg5[%c0_116, %c0_117, %c0_118] : memref<16x32x32xbf16, #tpu.memory_space<vmem>>, vector<1x32x32xbf16>
    %407 = vector.shape_cast %406 : vector<1x32x32xbf16> to vector<32x32xbf16>
    %cst_119 = arith.constant dense<0.000000e+00> : vector<8x32xf32>
    %408 = tpu.matmul %405, %407, %cst_119 {dimension_numbers = #tpu.dot_dimension_numbers<[1], [0], [0], [1], [0, 0, 1, 1], [], []>} : vector<8x32xbf16>, vector<32x32xbf16>, vector<8x32xf32> -> vector<8x32xf32>
    %409 = arith.addf %14, %408 : vector<8x32xf32>
    %c17 = arith.constant 17 : index
    %c0_120 = arith.constant 0 : index
    %c0_121 = arith.constant 0 : index
    %410 = vector.load %arg10[%c17, %c0_120, %c0_121] : memref<32x8x128xf32, #tpu.memory_space<vmem>>, vector<1x8x128xf32>
    %411 = vector.shape_cast %410 : vector<1x8x128xf32> to vector<8x128xf32>
    %cst_122 = arith.constant dense<0.000000e+00> : vector<8x128xf32>
    %412 = tpu.matmul %405, %11, %cst_122 {dimension_numbers = #tpu.dot_dimension_numbers<[1], [0], [0], [1], [0, 0, 1, 1], [], []>} : vector<8x32xbf16>, vector<32x128xbf16>, vector<8x128xf32> -> vector<8x128xf32>
    %413 = arith.addf %411, %412 : vector<8x128xf32>
    %414 = arith.negf %413 : vector<8x128xf32>
    %415 = math.exp %414 : vector<8x128xf32>
    %cst_123 = arith.constant 1.000000e+00 : f32
    %416 = vector.broadcast %cst_123 : f32 to vector<8x128xf32>
    %417 = arith.addf %416, %415 : vector<8x128xf32>
    %418 = arith.divf %416, %417 : vector<8x128xf32>
    %419 = vector.extract_strided_slice %418 {offsets = [0, 0], sizes = [8, 32], strides = [1, 1]} : vector<8x128xf32> to vector<8x32xf32>
    %420 = vector.extract_strided_slice %418 {offsets = [0, 32], sizes = [8, 32], strides = [1, 1]} : vector<8x128xf32> to vector<8x32xf32>
    %421 = vector.extract_strided_slice %418 {offsets = [0, 64], sizes = [8, 32], strides = [1, 1]} : vector<8x128xf32> to vector<8x32xf32>
    %cst_124 = arith.constant 2.000000e+00 : f32
    %422 = vector.broadcast %cst_124 : f32 to vector<8x32xf32>
    %423 = arith.mulf %422, %421 : vector<8x32xf32>
    %cst_125 = arith.constant 1.000000e+00 : f32
    %424 = vector.broadcast %cst_125 : f32 to vector<8x32xf32>
    %425 = arith.subf %423, %424 : vector<8x32xf32>
    %426 = vector.extract_strided_slice %418 {offsets = [0, 96], sizes = [8, 32], strides = [1, 1]} : vector<8x128xf32> to vector<8x32xf32>
    %427 = arith.mulf %420, %402 : vector<8x32xf32>
    %428 = arith.mulf %419, %425 : vector<8x32xf32>
    %429 = arith.addf %427, %428 : vector<8x32xf32>
    %430 = math.tanh %429 : vector<8x32xf32>
    %431 = arith.mulf %426, %430 : vector<8x32xf32>
    %432 = arith.truncf %431 : vector<8x32xf32> to vector<8x32xbf16>
    %c1_126 = arith.constant 1 : index
    %c0_127 = arith.constant 0 : index
    %c0_128 = arith.constant 0 : index
    %433 = vector.load %arg5[%c1_126, %c0_127, %c0_128] : memref<16x32x32xbf16, #tpu.memory_space<vmem>>, vector<1x32x32xbf16>
    %434 = vector.shape_cast %433 : vector<1x32x32xbf16> to vector<32x32xbf16>
    %cst_129 = arith.constant dense<0.000000e+00> : vector<8x32xf32>
    %435 = tpu.matmul %432, %434, %cst_129 {dimension_numbers = #tpu.dot_dimension_numbers<[1], [0], [0], [1], [0, 0, 1, 1], [], []>} : vector<8x32xbf16>, vector<32x32xbf16>, vector<8x32xf32> -> vector<8x32xf32>
    %436 = arith.addf %409, %435 : vector<8x32xf32>
    %c18 = arith.constant 18 : index
    %c0_130 = arith.constant 0 : index
    %c0_131 = arith.constant 0 : index
    %437 = vector.load %arg10[%c18, %c0_130, %c0_131] : memref<32x8x128xf32, #tpu.memory_space<vmem>>, vector<1x8x128xf32>
    %438 = vector.shape_cast %437 : vector<1x8x128xf32> to vector<8x128xf32>
    %cst_132 = arith.constant dense<0.000000e+00> : vector<8x128xf32>
    %439 = tpu.matmul %432, %11, %cst_132 {dimension_numbers = #tpu.dot_dimension_numbers<[1], [0], [0], [1], [0, 0, 1, 1], [], []>} : vector<8x32xbf16>, vector<32x128xbf16>, vector<8x128xf32> -> vector<8x128xf32>
    %440 = arith.addf %438, %439 : vector<8x128xf32>
    %441 = arith.negf %440 : vector<8x128xf32>
    %442 = math.exp %441 : vector<8x128xf32>
    %cst_133 = arith.constant 1.000000e+00 : f32
    %443 = vector.broadcast %cst_133 : f32 to vector<8x128xf32>
    %444 = arith.addf %443, %442 : vector<8x128xf32>
    %445 = arith.divf %443, %444 : vector<8x128xf32>
    %446 = vector.extract_strided_slice %445 {offsets = [0, 0], sizes = [8, 32], strides = [1, 1]} : vector<8x128xf32> to vector<8x32xf32>
    %447 = vector.extract_strided_slice %445 {offsets = [0, 32], sizes = [8, 32], strides = [1, 1]} : vector<8x128xf32> to vector<8x32xf32>
    %448 = vector.extract_strided_slice %445 {offsets = [0, 64], sizes = [8, 32], strides = [1, 1]} : vector<8x128xf32> to vector<8x32xf32>
    %cst_134 = arith.constant 2.000000e+00 : f32
    %449 = vector.broadcast %cst_134 : f32 to vector<8x32xf32>
    %450 = arith.mulf %449, %448 : vector<8x32xf32>
    %cst_135 = arith.constant 1.000000e+00 : f32
    %451 = vector.broadcast %cst_135 : f32 to vector<8x32xf32>
    %452 = arith.subf %450, %451 : vector<8x32xf32>
    %453 = vector.extract_strided_slice %445 {offsets = [0, 96], sizes = [8, 32], strides = [1, 1]} : vector<8x128xf32> to vector<8x32xf32>
    %454 = arith.mulf %447, %429 : vector<8x32xf32>
    %455 = arith.mulf %446, %452 : vector<8x32xf32>
    %456 = arith.addf %454, %455 : vector<8x32xf32>
    %457 = math.tanh %456 : vector<8x32xf32>
    %458 = arith.mulf %453, %457 : vector<8x32xf32>
    %459 = arith.truncf %458 : vector<8x32xf32> to vector<8x32xbf16>
    %c2_136 = arith.constant 2 : index
    %c0_137 = arith.constant 0 : index
    %c0_138 = arith.constant 0 : index
    %460 = vector.load %arg5[%c2_136, %c0_137, %c0_138] : memref<16x32x32xbf16, #tpu.memory_space<vmem>>, vector<1x32x32xbf16>
    %461 = vector.shape_cast %460 : vector<1x32x32xbf16> to vector<32x32xbf16>
    %cst_139 = arith.constant dense<0.000000e+00> : vector<8x32xf32>
    %462 = tpu.matmul %459, %461, %cst_139 {dimension_numbers = #tpu.dot_dimension_numbers<[1], [0], [0], [1], [0, 0, 1, 1], [], []>} : vector<8x32xbf16>, vector<32x32xbf16>, vector<8x32xf32> -> vector<8x32xf32>
    %463 = arith.addf %436, %462 : vector<8x32xf32>
    %c19 = arith.constant 19 : index
    %c0_140 = arith.constant 0 : index
    %c0_141 = arith.constant 0 : index
    %464 = vector.load %arg10[%c19, %c0_140, %c0_141] : memref<32x8x128xf32, #tpu.memory_space<vmem>>, vector<1x8x128xf32>
    %465 = vector.shape_cast %464 : vector<1x8x128xf32> to vector<8x128xf32>
    %cst_142 = arith.constant dense<0.000000e+00> : vector<8x128xf32>
    %466 = tpu.matmul %459, %11, %cst_142 {dimension_numbers = #tpu.dot_dimension_numbers<[1], [0], [0], [1], [0, 0, 1, 1], [], []>} : vector<8x32xbf16>, vector<32x128xbf16>, vector<8x128xf32> -> vector<8x128xf32>
    %467 = arith.addf %465, %466 : vector<8x128xf32>
    %468 = arith.negf %467 : vector<8x128xf32>
    %469 = math.exp %468 : vector<8x128xf32>
    %cst_143 = arith.constant 1.000000e+00 : f32
    %470 = vector.broadcast %cst_143 : f32 to vector<8x128xf32>
    %471 = arith.addf %470, %469 : vector<8x128xf32>
    %472 = arith.divf %470, %471 : vector<8x128xf32>
    %473 = vector.extract_strided_slice %472 {offsets = [0, 0], sizes = [8, 32], strides = [1, 1]} : vector<8x128xf32> to vector<8x32xf32>
    %474 = vector.extract_strided_slice %472 {offsets = [0, 32], sizes = [8, 32], strides = [1, 1]} : vector<8x128xf32> to vector<8x32xf32>
    %475 = vector.extract_strided_slice %472 {offsets = [0, 64], sizes = [8, 32], strides = [1, 1]} : vector<8x128xf32> to vector<8x32xf32>
    %cst_144 = arith.constant 2.000000e+00 : f32
    %476 = vector.broadcast %cst_144 : f32 to vector<8x32xf32>
    %477 = arith.mulf %476, %475 : vector<8x32xf32>
    %cst_145 = arith.constant 1.000000e+00 : f32
    %478 = vector.broadcast %cst_145 : f32 to vector<8x32xf32>
    %479 = arith.subf %477, %478 : vector<8x32xf32>
    %480 = vector.extract_strided_slice %472 {offsets = [0, 96], sizes = [8, 32], strides = [1, 1]} : vector<8x128xf32> to vector<8x32xf32>
    %481 = arith.mulf %474, %456 : vector<8x32xf32>
    %482 = arith.mulf %473, %479 : vector<8x32xf32>
    %483 = arith.addf %481, %482 : vector<8x32xf32>
    %484 = math.tanh %483 : vector<8x32xf32>
    %485 = arith.mulf %480, %484 : vector<8x32xf32>
    %486 = arith.truncf %485 : vector<8x32xf32> to vector<8x32xbf16>
    %c3_146 = arith.constant 3 : index
    %c0_147 = arith.constant 0 : index
    %c0_148 = arith.constant 0 : index
    %487 = vector.load %arg5[%c3_146, %c0_147, %c0_148] : memref<16x32x32xbf16, #tpu.memory_space<vmem>>, vector<1x32x32xbf16>
    %488 = vector.shape_cast %487 : vector<1x32x32xbf16> to vector<32x32xbf16>
    %cst_149 = arith.constant dense<0.000000e+00> : vector<8x32xf32>
    %489 = tpu.matmul %486, %488, %cst_149 {dimension_numbers = #tpu.dot_dimension_numbers<[1], [0], [0], [1], [0, 0, 1, 1], [], []>} : vector<8x32xbf16>, vector<32x32xbf16>, vector<8x32xf32> -> vector<8x32xf32>
    %490 = arith.addf %463, %489 : vector<8x32xf32>
    %c20 = arith.constant 20 : index
    %c0_150 = arith.constant 0 : index
    %c0_151 = arith.constant 0 : index
    %491 = vector.load %arg10[%c20, %c0_150, %c0_151] : memref<32x8x128xf32, #tpu.memory_space<vmem>>, vector<1x8x128xf32>
    %492 = vector.shape_cast %491 : vector<1x8x128xf32> to vector<8x128xf32>
    %cst_152 = arith.constant dense<0.000000e+00> : vector<8x128xf32>
    %493 = tpu.matmul %486, %11, %cst_152 {dimension_numbers = #tpu.dot_dimension_numbers<[1], [0], [0], [1], [0, 0, 1, 1], [], []>} : vector<8x32xbf16>, vector<32x128xbf16>, vector<8x128xf32> -> vector<8x128xf32>
    %494 = arith.addf %492, %493 : vector<8x128xf32>
    %495 = arith.negf %494 : vector<8x128xf32>
    %496 = math.exp %495 : vector<8x128xf32>
    %cst_153 = arith.constant 1.000000e+00 : f32
    %497 = vector.broadcast %cst_153 : f32 to vector<8x128xf32>
    %498 = arith.addf %497, %496 : vector<8x128xf32>
    %499 = arith.divf %497, %498 : vector<8x128xf32>
    %500 = vector.extract_strided_slice %499 {offsets = [0, 0], sizes = [8, 32], strides = [1, 1]} : vector<8x128xf32> to vector<8x32xf32>
    %501 = vector.extract_strided_slice %499 {offsets = [0, 32], sizes = [8, 32], strides = [1, 1]} : vector<8x128xf32> to vector<8x32xf32>
    %502 = vector.extract_strided_slice %499 {offsets = [0, 64], sizes = [8, 32], strides = [1, 1]} : vector<8x128xf32> to vector<8x32xf32>
    %cst_154 = arith.constant 2.000000e+00 : f32
    %503 = vector.broadcast %cst_154 : f32 to vector<8x32xf32>
    %504 = arith.mulf %503, %502 : vector<8x32xf32>
    %cst_155 = arith.constant 1.000000e+00 : f32
    %505 = vector.broadcast %cst_155 : f32 to vector<8x32xf32>
    %506 = arith.subf %504, %505 : vector<8x32xf32>
    %507 = vector.extract_strided_slice %499 {offsets = [0, 96], sizes = [8, 32], strides = [1, 1]} : vector<8x128xf32> to vector<8x32xf32>
    %508 = arith.mulf %501, %483 : vector<8x32xf32>
    %509 = arith.mulf %500, %506 : vector<8x32xf32>
    %510 = arith.addf %508, %509 : vector<8x32xf32>
    %511 = math.tanh %510 : vector<8x32xf32>
    %512 = arith.mulf %507, %511 : vector<8x32xf32>
    %513 = arith.truncf %512 : vector<8x32xf32> to vector<8x32xbf16>
    %c4_156 = arith.constant 4 : index
    %c0_157 = arith.constant 0 : index
    %c0_158 = arith.constant 0 : index
    %514 = vector.load %arg5[%c4_156, %c0_157, %c0_158] : memref<16x32x32xbf16, #tpu.memory_space<vmem>>, vector<1x32x32xbf16>
    %515 = vector.shape_cast %514 : vector<1x32x32xbf16> to vector<32x32xbf16>
    %cst_159 = arith.constant dense<0.000000e+00> : vector<8x32xf32>
    %516 = tpu.matmul %513, %515, %cst_159 {dimension_numbers = #tpu.dot_dimension_numbers<[1], [0], [0], [1], [0, 0, 1, 1], [], []>} : vector<8x32xbf16>, vector<32x32xbf16>, vector<8x32xf32> -> vector<8x32xf32>
    %517 = arith.addf %490, %516 : vector<8x32xf32>
    %c21 = arith.constant 21 : index
    %c0_160 = arith.constant 0 : index
    %c0_161 = arith.constant 0 : index
    %518 = vector.load %arg10[%c21, %c0_160, %c0_161] : memref<32x8x128xf32, #tpu.memory_space<vmem>>, vector<1x8x128xf32>
    %519 = vector.shape_cast %518 : vector<1x8x128xf32> to vector<8x128xf32>
    %cst_162 = arith.constant dense<0.000000e+00> : vector<8x128xf32>
    %520 = tpu.matmul %513, %11, %cst_162 {dimension_numbers = #tpu.dot_dimension_numbers<[1], [0], [0], [1], [0, 0, 1, 1], [], []>} : vector<8x32xbf16>, vector<32x128xbf16>, vector<8x128xf32> -> vector<8x128xf32>
    %521 = arith.addf %519, %520 : vector<8x128xf32>
    %522 = arith.negf %521 : vector<8x128xf32>
    %523 = math.exp %522 : vector<8x128xf32>
    %cst_163 = arith.constant 1.000000e+00 : f32
    %524 = vector.broadcast %cst_163 : f32 to vector<8x128xf32>
    %525 = arith.addf %524, %523 : vector<8x128xf32>
    %526 = arith.divf %524, %525 : vector<8x128xf32>
    %527 = vector.extract_strided_slice %526 {offsets = [0, 0], sizes = [8, 32], strides = [1, 1]} : vector<8x128xf32> to vector<8x32xf32>
    %528 = vector.extract_strided_slice %526 {offsets = [0, 32], sizes = [8, 32], strides = [1, 1]} : vector<8x128xf32> to vector<8x32xf32>
    %529 = vector.extract_strided_slice %526 {offsets = [0, 64], sizes = [8, 32], strides = [1, 1]} : vector<8x128xf32> to vector<8x32xf32>
    %cst_164 = arith.constant 2.000000e+00 : f32
    %530 = vector.broadcast %cst_164 : f32 to vector<8x32xf32>
    %531 = arith.mulf %530, %529 : vector<8x32xf32>
    %cst_165 = arith.constant 1.000000e+00 : f32
    %532 = vector.broadcast %cst_165 : f32 to vector<8x32xf32>
    %533 = arith.subf %531, %532 : vector<8x32xf32>
    %534 = vector.extract_strided_slice %526 {offsets = [0, 96], sizes = [8, 32], strides = [1, 1]} : vector<8x128xf32> to vector<8x32xf32>
    %535 = arith.mulf %528, %510 : vector<8x32xf32>
    %536 = arith.mulf %527, %533 : vector<8x32xf32>
    %537 = arith.addf %535, %536 : vector<8x32xf32>
    %538 = math.tanh %537 : vector<8x32xf32>
    %539 = arith.mulf %534, %538 : vector<8x32xf32>
    %540 = arith.truncf %539 : vector<8x32xf32> to vector<8x32xbf16>
    %c5_166 = arith.constant 5 : index
    %c0_167 = arith.constant 0 : index
    %c0_168 = arith.constant 0 : index
    %541 = vector.load %arg5[%c5_166, %c0_167, %c0_168] : memref<16x32x32xbf16, #tpu.memory_space<vmem>>, vector<1x32x32xbf16>
    %542 = vector.shape_cast %541 : vector<1x32x32xbf16> to vector<32x32xbf16>
    %cst_169 = arith.constant dense<0.000000e+00> : vector<8x32xf32>
    %543 = tpu.matmul %540, %542, %cst_169 {dimension_numbers = #tpu.dot_dimension_numbers<[1], [0], [0], [1], [0, 0, 1, 1], [], []>} : vector<8x32xbf16>, vector<32x32xbf16>, vector<8x32xf32> -> vector<8x32xf32>
    %544 = arith.addf %517, %543 : vector<8x32xf32>
    %c22 = arith.constant 22 : index
    %c0_170 = arith.constant 0 : index
    %c0_171 = arith.constant 0 : index
    %545 = vector.load %arg10[%c22, %c0_170, %c0_171] : memref<32x8x128xf32, #tpu.memory_space<vmem>>, vector<1x8x128xf32>
    %546 = vector.shape_cast %545 : vector<1x8x128xf32> to vector<8x128xf32>
    %cst_172 = arith.constant dense<0.000000e+00> : vector<8x128xf32>
    %547 = tpu.matmul %540, %11, %cst_172 {dimension_numbers = #tpu.dot_dimension_numbers<[1], [0], [0], [1], [0, 0, 1, 1], [], []>} : vector<8x32xbf16>, vector<32x128xbf16>, vector<8x128xf32> -> vector<8x128xf32>
    %548 = arith.addf %546, %547 : vector<8x128xf32>
    %549 = arith.negf %548 : vector<8x128xf32>
    %550 = math.exp %549 : vector<8x128xf32>
    %cst_173 = arith.constant 1.000000e+00 : f32
    %551 = vector.broadcast %cst_173 : f32 to vector<8x128xf32>
    %552 = arith.addf %551, %550 : vector<8x128xf32>
    %553 = arith.divf %551, %552 : vector<8x128xf32>
    %554 = vector.extract_strided_slice %553 {offsets = [0, 0], sizes = [8, 32], strides = [1, 1]} : vector<8x128xf32> to vector<8x32xf32>
    %555 = vector.extract_strided_slice %553 {offsets = [0, 32], sizes = [8, 32], strides = [1, 1]} : vector<8x128xf32> to vector<8x32xf32>
    %556 = vector.extract_strided_slice %553 {offsets = [0, 64], sizes = [8, 32], strides = [1, 1]} : vector<8x128xf32> to vector<8x32xf32>
    %cst_174 = arith.constant 2.000000e+00 : f32
    %557 = vector.broadcast %cst_174 : f32 to vector<8x32xf32>
    %558 = arith.mulf %557, %556 : vector<8x32xf32>
    %cst_175 = arith.constant 1.000000e+00 : f32
    %559 = vector.broadcast %cst_175 : f32 to vector<8x32xf32>
    %560 = arith.subf %558, %559 : vector<8x32xf32>
    %561 = vector.extract_strided_slice %553 {offsets = [0, 96], sizes = [8, 32], strides = [1, 1]} : vector<8x128xf32> to vector<8x32xf32>
    %562 = arith.mulf %555, %537 : vector<8x32xf32>
    %563 = arith.mulf %554, %560 : vector<8x32xf32>
    %564 = arith.addf %562, %563 : vector<8x32xf32>
    %565 = math.tanh %564 : vector<8x32xf32>
    %566 = arith.mulf %561, %565 : vector<8x32xf32>
    %567 = arith.truncf %566 : vector<8x32xf32> to vector<8x32xbf16>
    %c6_176 = arith.constant 6 : index
    %c0_177 = arith.constant 0 : index
    %c0_178 = arith.constant 0 : index
    %568 = vector.load %arg5[%c6_176, %c0_177, %c0_178] : memref<16x32x32xbf16, #tpu.memory_space<vmem>>, vector<1x32x32xbf16>
    %569 = vector.shape_cast %568 : vector<1x32x32xbf16> to vector<32x32xbf16>
    %cst_179 = arith.constant dense<0.000000e+00> : vector<8x32xf32>
    %570 = tpu.matmul %567, %569, %cst_179 {dimension_numbers = #tpu.dot_dimension_numbers<[1], [0], [0], [1], [0, 0, 1, 1], [], []>} : vector<8x32xbf16>, vector<32x32xbf16>, vector<8x32xf32> -> vector<8x32xf32>
    %571 = arith.addf %544, %570 : vector<8x32xf32>
    %c23 = arith.constant 23 : index
    %c0_180 = arith.constant 0 : index
    %c0_181 = arith.constant 0 : index
    %572 = vector.load %arg10[%c23, %c0_180, %c0_181] : memref<32x8x128xf32, #tpu.memory_space<vmem>>, vector<1x8x128xf32>
    %573 = vector.shape_cast %572 : vector<1x8x128xf32> to vector<8x128xf32>
    %cst_182 = arith.constant dense<0.000000e+00> : vector<8x128xf32>
    %574 = tpu.matmul %567, %11, %cst_182 {dimension_numbers = #tpu.dot_dimension_numbers<[1], [0], [0], [1], [0, 0, 1, 1], [], []>} : vector<8x32xbf16>, vector<32x128xbf16>, vector<8x128xf32> -> vector<8x128xf32>
    %575 = arith.addf %573, %574 : vector<8x128xf32>
    %576 = arith.negf %575 : vector<8x128xf32>
    %577 = math.exp %576 : vector<8x128xf32>
    %cst_183 = arith.constant 1.000000e+00 : f32
    %578 = vector.broadcast %cst_183 : f32 to vector<8x128xf32>
    %579 = arith.addf %578, %577 : vector<8x128xf32>
    %580 = arith.divf %578, %579 : vector<8x128xf32>
    %581 = vector.extract_strided_slice %580 {offsets = [0, 0], sizes = [8, 32], strides = [1, 1]} : vector<8x128xf32> to vector<8x32xf32>
    %582 = vector.extract_strided_slice %580 {offsets = [0, 32], sizes = [8, 32], strides = [1, 1]} : vector<8x128xf32> to vector<8x32xf32>
    %583 = vector.extract_strided_slice %580 {offsets = [0, 64], sizes = [8, 32], strides = [1, 1]} : vector<8x128xf32> to vector<8x32xf32>
    %cst_184 = arith.constant 2.000000e+00 : f32
    %584 = vector.broadcast %cst_184 : f32 to vector<8x32xf32>
    %585 = arith.mulf %584, %583 : vector<8x32xf32>
    %cst_185 = arith.constant 1.000000e+00 : f32
    %586 = vector.broadcast %cst_185 : f32 to vector<8x32xf32>
    %587 = arith.subf %585, %586 : vector<8x32xf32>
    %588 = vector.extract_strided_slice %580 {offsets = [0, 96], sizes = [8, 32], strides = [1, 1]} : vector<8x128xf32> to vector<8x32xf32>
    %589 = arith.mulf %582, %564 : vector<8x32xf32>
    %590 = arith.mulf %581, %587 : vector<8x32xf32>
    %591 = arith.addf %589, %590 : vector<8x32xf32>
    %592 = math.tanh %591 : vector<8x32xf32>
    %593 = arith.mulf %588, %592 : vector<8x32xf32>
    %594 = arith.truncf %593 : vector<8x32xf32> to vector<8x32xbf16>
    %c7_186 = arith.constant 7 : index
    %c0_187 = arith.constant 0 : index
    %c0_188 = arith.constant 0 : index
    %595 = vector.load %arg5[%c7_186, %c0_187, %c0_188] : memref<16x32x32xbf16, #tpu.memory_space<vmem>>, vector<1x32x32xbf16>
    %596 = vector.shape_cast %595 : vector<1x32x32xbf16> to vector<32x32xbf16>
    %cst_189 = arith.constant dense<0.000000e+00> : vector<8x32xf32>
    %597 = tpu.matmul %594, %596, %cst_189 {dimension_numbers = #tpu.dot_dimension_numbers<[1], [0], [0], [1], [0, 0, 1, 1], [], []>} : vector<8x32xbf16>, vector<32x32xbf16>, vector<8x32xf32> -> vector<8x32xf32>
    %598 = arith.addf %571, %597 : vector<8x32xf32>
    %c24 = arith.constant 24 : index
    %c0_190 = arith.constant 0 : index
    %c0_191 = arith.constant 0 : index
    %599 = vector.load %arg10[%c24, %c0_190, %c0_191] : memref<32x8x128xf32, #tpu.memory_space<vmem>>, vector<1x8x128xf32>
    %600 = vector.shape_cast %599 : vector<1x8x128xf32> to vector<8x128xf32>
    %cst_192 = arith.constant dense<0.000000e+00> : vector<8x128xf32>
    %601 = tpu.matmul %594, %11, %cst_192 {dimension_numbers = #tpu.dot_dimension_numbers<[1], [0], [0], [1], [0, 0, 1, 1], [], []>} : vector<8x32xbf16>, vector<32x128xbf16>, vector<8x128xf32> -> vector<8x128xf32>
    %602 = arith.addf %600, %601 : vector<8x128xf32>
    %603 = arith.negf %602 : vector<8x128xf32>
    %604 = math.exp %603 : vector<8x128xf32>
    %cst_193 = arith.constant 1.000000e+00 : f32
    %605 = vector.broadcast %cst_193 : f32 to vector<8x128xf32>
    %606 = arith.addf %605, %604 : vector<8x128xf32>
    %607 = arith.divf %605, %606 : vector<8x128xf32>
    %608 = vector.extract_strided_slice %607 {offsets = [0, 0], sizes = [8, 32], strides = [1, 1]} : vector<8x128xf32> to vector<8x32xf32>
    %609 = vector.extract_strided_slice %607 {offsets = [0, 32], sizes = [8, 32], strides = [1, 1]} : vector<8x128xf32> to vector<8x32xf32>
    %610 = vector.extract_strided_slice %607 {offsets = [0, 64], sizes = [8, 32], strides = [1, 1]} : vector<8x128xf32> to vector<8x32xf32>
    %cst_194 = arith.constant 2.000000e+00 : f32
    %611 = vector.broadcast %cst_194 : f32 to vector<8x32xf32>
    %612 = arith.mulf %611, %610 : vector<8x32xf32>
    %cst_195 = arith.constant 1.000000e+00 : f32
    %613 = vector.broadcast %cst_195 : f32 to vector<8x32xf32>
    %614 = arith.subf %612, %613 : vector<8x32xf32>
    %615 = vector.extract_strided_slice %607 {offsets = [0, 96], sizes = [8, 32], strides = [1, 1]} : vector<8x128xf32> to vector<8x32xf32>
    %616 = arith.mulf %609, %591 : vector<8x32xf32>
    %617 = arith.mulf %608, %614 : vector<8x32xf32>
    %618 = arith.addf %616, %617 : vector<8x32xf32>
    %619 = math.tanh %618 : vector<8x32xf32>
    %620 = arith.mulf %615, %619 : vector<8x32xf32>
    %621 = arith.truncf %620 : vector<8x32xf32> to vector<8x32xbf16>
    %c8_196 = arith.constant 8 : index
    %c0_197 = arith.constant 0 : index
    %c0_198 = arith.constant 0 : index
    %622 = vector.load %arg5[%c8_196, %c0_197, %c0_198] : memref<16x32x32xbf16, #tpu.memory_space<vmem>>, vector<1x32x32xbf16>
    %623 = vector.shape_cast %622 : vector<1x32x32xbf16> to vector<32x32xbf16>
    %cst_199 = arith.constant dense<0.000000e+00> : vector<8x32xf32>
    %624 = tpu.matmul %621, %623, %cst_199 {dimension_numbers = #tpu.dot_dimension_numbers<[1], [0], [0], [1], [0, 0, 1, 1], [], []>} : vector<8x32xbf16>, vector<32x32xbf16>, vector<8x32xf32> -> vector<8x32xf32>
    %625 = arith.addf %598, %624 : vector<8x32xf32>
    %c25 = arith.constant 25 : index
    %c0_200 = arith.constant 0 : index
    %c0_201 = arith.constant 0 : index
    %626 = vector.load %arg10[%c25, %c0_200, %c0_201] : memref<32x8x128xf32, #tpu.memory_space<vmem>>, vector<1x8x128xf32>
    %627 = vector.shape_cast %626 : vector<1x8x128xf32> to vector<8x128xf32>
    %cst_202 = arith.constant dense<0.000000e+00> : vector<8x128xf32>
    %628 = tpu.matmul %621, %11, %cst_202 {dimension_numbers = #tpu.dot_dimension_numbers<[1], [0], [0], [1], [0, 0, 1, 1], [], []>} : vector<8x32xbf16>, vector<32x128xbf16>, vector<8x128xf32> -> vector<8x128xf32>
    %629 = arith.addf %627, %628 : vector<8x128xf32>
    %630 = arith.negf %629 : vector<8x128xf32>
    %631 = math.exp %630 : vector<8x128xf32>
    %cst_203 = arith.constant 1.000000e+00 : f32
    %632 = vector.broadcast %cst_203 : f32 to vector<8x128xf32>
    %633 = arith.addf %632, %631 : vector<8x128xf32>
    %634 = arith.divf %632, %633 : vector<8x128xf32>
    %635 = vector.extract_strided_slice %634 {offsets = [0, 0], sizes = [8, 32], strides = [1, 1]} : vector<8x128xf32> to vector<8x32xf32>
    %636 = vector.extract_strided_slice %634 {offsets = [0, 32], sizes = [8, 32], strides = [1, 1]} : vector<8x128xf32> to vector<8x32xf32>
    %637 = vector.extract_strided_slice %634 {offsets = [0, 64], sizes = [8, 32], strides = [1, 1]} : vector<8x128xf32> to vector<8x32xf32>
    %cst_204 = arith.constant 2.000000e+00 : f32
    %638 = vector.broadcast %cst_204 : f32 to vector<8x32xf32>
    %639 = arith.mulf %638, %637 : vector<8x32xf32>
    %cst_205 = arith.constant 1.000000e+00 : f32
    %640 = vector.broadcast %cst_205 : f32 to vector<8x32xf32>
    %641 = arith.subf %639, %640 : vector<8x32xf32>
    %642 = vector.extract_strided_slice %634 {offsets = [0, 96], sizes = [8, 32], strides = [1, 1]} : vector<8x128xf32> to vector<8x32xf32>
    %643 = arith.mulf %636, %618 : vector<8x32xf32>
    %644 = arith.mulf %635, %641 : vector<8x32xf32>
    %645 = arith.addf %643, %644 : vector<8x32xf32>
    %646 = math.tanh %645 : vector<8x32xf32>
    %647 = arith.mulf %642, %646 : vector<8x32xf32>
    %648 = arith.truncf %647 : vector<8x32xf32> to vector<8x32xbf16>
    %c9_206 = arith.constant 9 : index
    %c0_207 = arith.constant 0 : index
    %c0_208 = arith.constant 0 : index
    %649 = vector.load %arg5[%c9_206, %c0_207, %c0_208] : memref<16x32x32xbf16, #tpu.memory_space<vmem>>, vector<1x32x32xbf16>
    %650 = vector.shape_cast %649 : vector<1x32x32xbf16> to vector<32x32xbf16>
    %cst_209 = arith.constant dense<0.000000e+00> : vector<8x32xf32>
    %651 = tpu.matmul %648, %650, %cst_209 {dimension_numbers = #tpu.dot_dimension_numbers<[1], [0], [0], [1], [0, 0, 1, 1], [], []>} : vector<8x32xbf16>, vector<32x32xbf16>, vector<8x32xf32> -> vector<8x32xf32>
    %652 = arith.addf %625, %651 : vector<8x32xf32>
    %c26 = arith.constant 26 : index
    %c0_210 = arith.constant 0 : index
    %c0_211 = arith.constant 0 : index
    %653 = vector.load %arg10[%c26, %c0_210, %c0_211] : memref<32x8x128xf32, #tpu.memory_space<vmem>>, vector<1x8x128xf32>
    %654 = vector.shape_cast %653 : vector<1x8x128xf32> to vector<8x128xf32>
    %cst_212 = arith.constant dense<0.000000e+00> : vector<8x128xf32>
    %655 = tpu.matmul %648, %11, %cst_212 {dimension_numbers = #tpu.dot_dimension_numbers<[1], [0], [0], [1], [0, 0, 1, 1], [], []>} : vector<8x32xbf16>, vector<32x128xbf16>, vector<8x128xf32> -> vector<8x128xf32>
    %656 = arith.addf %654, %655 : vector<8x128xf32>
    %657 = arith.negf %656 : vector<8x128xf32>
    %658 = math.exp %657 : vector<8x128xf32>
    %cst_213 = arith.constant 1.000000e+00 : f32
    %659 = vector.broadcast %cst_213 : f32 to vector<8x128xf32>
    %660 = arith.addf %659, %658 : vector<8x128xf32>
    %661 = arith.divf %659, %660 : vector<8x128xf32>
    %662 = vector.extract_strided_slice %661 {offsets = [0, 0], sizes = [8, 32], strides = [1, 1]} : vector<8x128xf32> to vector<8x32xf32>
    %663 = vector.extract_strided_slice %661 {offsets = [0, 32], sizes = [8, 32], strides = [1, 1]} : vector<8x128xf32> to vector<8x32xf32>
    %664 = vector.extract_strided_slice %661 {offsets = [0, 64], sizes = [8, 32], strides = [1, 1]} : vector<8x128xf32> to vector<8x32xf32>
    %cst_214 = arith.constant 2.000000e+00 : f32
    %665 = vector.broadcast %cst_214 : f32 to vector<8x32xf32>
    %666 = arith.mulf %665, %664 : vector<8x32xf32>
    %cst_215 = arith.constant 1.000000e+00 : f32
    %667 = vector.broadcast %cst_215 : f32 to vector<8x32xf32>
    %668 = arith.subf %666, %667 : vector<8x32xf32>
    %669 = vector.extract_strided_slice %661 {offsets = [0, 96], sizes = [8, 32], strides = [1, 1]} : vector<8x128xf32> to vector<8x32xf32>
    %670 = arith.mulf %663, %645 : vector<8x32xf32>
    %671 = arith.mulf %662, %668 : vector<8x32xf32>
    %672 = arith.addf %670, %671 : vector<8x32xf32>
    %673 = math.tanh %672 : vector<8x32xf32>
    %674 = arith.mulf %669, %673 : vector<8x32xf32>
    %675 = arith.truncf %674 : vector<8x32xf32> to vector<8x32xbf16>
    %c10_216 = arith.constant 10 : index
    %c0_217 = arith.constant 0 : index
    %c0_218 = arith.constant 0 : index
    %676 = vector.load %arg5[%c10_216, %c0_217, %c0_218] : memref<16x32x32xbf16, #tpu.memory_space<vmem>>, vector<1x32x32xbf16>
    %677 = vector.shape_cast %676 : vector<1x32x32xbf16> to vector<32x32xbf16>
    %cst_219 = arith.constant dense<0.000000e+00> : vector<8x32xf32>
    %678 = tpu.matmul %675, %677, %cst_219 {dimension_numbers = #tpu.dot_dimension_numbers<[1], [0], [0], [1], [0, 0, 1, 1], [], []>} : vector<8x32xbf16>, vector<32x32xbf16>, vector<8x32xf32> -> vector<8x32xf32>
    %679 = arith.addf %652, %678 : vector<8x32xf32>
    %c27 = arith.constant 27 : index
    %c0_220 = arith.constant 0 : index
    %c0_221 = arith.constant 0 : index
    %680 = vector.load %arg10[%c27, %c0_220, %c0_221] : memref<32x8x128xf32, #tpu.memory_space<vmem>>, vector<1x8x128xf32>
    %681 = vector.shape_cast %680 : vector<1x8x128xf32> to vector<8x128xf32>
    %cst_222 = arith.constant dense<0.000000e+00> : vector<8x128xf32>
    %682 = tpu.matmul %675, %11, %cst_222 {dimension_numbers = #tpu.dot_dimension_numbers<[1], [0], [0], [1], [0, 0, 1, 1], [], []>} : vector<8x32xbf16>, vector<32x128xbf16>, vector<8x128xf32> -> vector<8x128xf32>
    %683 = arith.addf %681, %682 : vector<8x128xf32>
    %684 = arith.negf %683 : vector<8x128xf32>
    %685 = math.exp %684 : vector<8x128xf32>
    %cst_223 = arith.constant 1.000000e+00 : f32
    %686 = vector.broadcast %cst_223 : f32 to vector<8x128xf32>
    %687 = arith.addf %686, %685 : vector<8x128xf32>
    %688 = arith.divf %686, %687 : vector<8x128xf32>
    %689 = vector.extract_strided_slice %688 {offsets = [0, 0], sizes = [8, 32], strides = [1, 1]} : vector<8x128xf32> to vector<8x32xf32>
    %690 = vector.extract_strided_slice %688 {offsets = [0, 32], sizes = [8, 32], strides = [1, 1]} : vector<8x128xf32> to vector<8x32xf32>
    %691 = vector.extract_strided_slice %688 {offsets = [0, 64], sizes = [8, 32], strides = [1, 1]} : vector<8x128xf32> to vector<8x32xf32>
    %cst_224 = arith.constant 2.000000e+00 : f32
    %692 = vector.broadcast %cst_224 : f32 to vector<8x32xf32>
    %693 = arith.mulf %692, %691 : vector<8x32xf32>
    %cst_225 = arith.constant 1.000000e+00 : f32
    %694 = vector.broadcast %cst_225 : f32 to vector<8x32xf32>
    %695 = arith.subf %693, %694 : vector<8x32xf32>
    %696 = vector.extract_strided_slice %688 {offsets = [0, 96], sizes = [8, 32], strides = [1, 1]} : vector<8x128xf32> to vector<8x32xf32>
    %697 = arith.mulf %690, %672 : vector<8x32xf32>
    %698 = arith.mulf %689, %695 : vector<8x32xf32>
    %699 = arith.addf %697, %698 : vector<8x32xf32>
    %700 = math.tanh %699 : vector<8x32xf32>
    %701 = arith.mulf %696, %700 : vector<8x32xf32>
    %702 = arith.truncf %701 : vector<8x32xf32> to vector<8x32xbf16>
    %c11_226 = arith.constant 11 : index
    %c0_227 = arith.constant 0 : index
    %c0_228 = arith.constant 0 : index
    %703 = vector.load %arg5[%c11_226, %c0_227, %c0_228] : memref<16x32x32xbf16, #tpu.memory_space<vmem>>, vector<1x32x32xbf16>
    %704 = vector.shape_cast %703 : vector<1x32x32xbf16> to vector<32x32xbf16>
    %cst_229 = arith.constant dense<0.000000e+00> : vector<8x32xf32>
    %705 = tpu.matmul %702, %704, %cst_229 {dimension_numbers = #tpu.dot_dimension_numbers<[1], [0], [0], [1], [0, 0, 1, 1], [], []>} : vector<8x32xbf16>, vector<32x32xbf16>, vector<8x32xf32> -> vector<8x32xf32>
    %706 = arith.addf %679, %705 : vector<8x32xf32>
    %c28 = arith.constant 28 : index
    %c0_230 = arith.constant 0 : index
    %c0_231 = arith.constant 0 : index
    %707 = vector.load %arg10[%c28, %c0_230, %c0_231] : memref<32x8x128xf32, #tpu.memory_space<vmem>>, vector<1x8x128xf32>
    %708 = vector.shape_cast %707 : vector<1x8x128xf32> to vector<8x128xf32>
    %cst_232 = arith.constant dense<0.000000e+00> : vector<8x128xf32>
    %709 = tpu.matmul %702, %11, %cst_232 {dimension_numbers = #tpu.dot_dimension_numbers<[1], [0], [0], [1], [0, 0, 1, 1], [], []>} : vector<8x32xbf16>, vector<32x128xbf16>, vector<8x128xf32> -> vector<8x128xf32>
    %710 = arith.addf %708, %709 : vector<8x128xf32>
    %711 = arith.negf %710 : vector<8x128xf32>
    %712 = math.exp %711 : vector<8x128xf32>
    %cst_233 = arith.constant 1.000000e+00 : f32
    %713 = vector.broadcast %cst_233 : f32 to vector<8x128xf32>
    %714 = arith.addf %713, %712 : vector<8x128xf32>
    %715 = arith.divf %713, %714 : vector<8x128xf32>
    %716 = vector.extract_strided_slice %715 {offsets = [0, 0], sizes = [8, 32], strides = [1, 1]} : vector<8x128xf32> to vector<8x32xf32>
    %717 = vector.extract_strided_slice %715 {offsets = [0, 32], sizes = [8, 32], strides = [1, 1]} : vector<8x128xf32> to vector<8x32xf32>
    %718 = vector.extract_strided_slice %715 {offsets = [0, 64], sizes = [8, 32], strides = [1, 1]} : vector<8x128xf32> to vector<8x32xf32>
    %cst_234 = arith.constant 2.000000e+00 : f32
    %719 = vector.broadcast %cst_234 : f32 to vector<8x32xf32>
    %720 = arith.mulf %719, %718 : vector<8x32xf32>
    %cst_235 = arith.constant 1.000000e+00 : f32
    %721 = vector.broadcast %cst_235 : f32 to vector<8x32xf32>
    %722 = arith.subf %720, %721 : vector<8x32xf32>
    %723 = vector.extract_strided_slice %715 {offsets = [0, 96], sizes = [8, 32], strides = [1, 1]} : vector<8x128xf32> to vector<8x32xf32>
    %724 = arith.mulf %717, %699 : vector<8x32xf32>
    %725 = arith.mulf %716, %722 : vector<8x32xf32>
    %726 = arith.addf %724, %725 : vector<8x32xf32>
    %727 = math.tanh %726 : vector<8x32xf32>
    %728 = arith.mulf %723, %727 : vector<8x32xf32>
    %729 = arith.truncf %728 : vector<8x32xf32> to vector<8x32xbf16>
    %c12_236 = arith.constant 12 : index
    %c0_237 = arith.constant 0 : index
    %c0_238 = arith.constant 0 : index
    %730 = vector.load %arg5[%c12_236, %c0_237, %c0_238] : memref<16x32x32xbf16, #tpu.memory_space<vmem>>, vector<1x32x32xbf16>
    %731 = vector.shape_cast %730 : vector<1x32x32xbf16> to vector<32x32xbf16>
    %cst_239 = arith.constant dense<0.000000e+00> : vector<8x32xf32>
    %732 = tpu.matmul %729, %731, %cst_239 {dimension_numbers = #tpu.dot_dimension_numbers<[1], [0], [0], [1], [0, 0, 1, 1], [], []>} : vector<8x32xbf16>, vector<32x32xbf16>, vector<8x32xf32> -> vector<8x32xf32>
    %733 = arith.addf %706, %732 : vector<8x32xf32>
    %c29 = arith.constant 29 : index
    %c0_240 = arith.constant 0 : index
    %c0_241 = arith.constant 0 : index
    %734 = vector.load %arg10[%c29, %c0_240, %c0_241] : memref<32x8x128xf32, #tpu.memory_space<vmem>>, vector<1x8x128xf32>
    %735 = vector.shape_cast %734 : vector<1x8x128xf32> to vector<8x128xf32>
    %cst_242 = arith.constant dense<0.000000e+00> : vector<8x128xf32>
    %736 = tpu.matmul %729, %11, %cst_242 {dimension_numbers = #tpu.dot_dimension_numbers<[1], [0], [0], [1], [0, 0, 1, 1], [], []>} : vector<8x32xbf16>, vector<32x128xbf16>, vector<8x128xf32> -> vector<8x128xf32>
    %737 = arith.addf %735, %736 : vector<8x128xf32>
    %738 = arith.negf %737 : vector<8x128xf32>
    %739 = math.exp %738 : vector<8x128xf32>
    %cst_243 = arith.constant 1.000000e+00 : f32
    %740 = vector.broadcast %cst_243 : f32 to vector<8x128xf32>
    %741 = arith.addf %740, %739 : vector<8x128xf32>
    %742 = arith.divf %740, %741 : vector<8x128xf32>
    %743 = vector.extract_strided_slice %742 {offsets = [0, 0], sizes = [8, 32], strides = [1, 1]} : vector<8x128xf32> to vector<8x32xf32>
    %744 = vector.extract_strided_slice %742 {offsets = [0, 32], sizes = [8, 32], strides = [1, 1]} : vector<8x128xf32> to vector<8x32xf32>
    %745 = vector.extract_strided_slice %742 {offsets = [0, 64], sizes = [8, 32], strides = [1, 1]} : vector<8x128xf32> to vector<8x32xf32>
    %cst_244 = arith.constant 2.000000e+00 : f32
    %746 = vector.broadcast %cst_244 : f32 to vector<8x32xf32>
    %747 = arith.mulf %746, %745 : vector<8x32xf32>
    %cst_245 = arith.constant 1.000000e+00 : f32
    %748 = vector.broadcast %cst_245 : f32 to vector<8x32xf32>
    %749 = arith.subf %747, %748 : vector<8x32xf32>
    %750 = vector.extract_strided_slice %742 {offsets = [0, 96], sizes = [8, 32], strides = [1, 1]} : vector<8x128xf32> to vector<8x32xf32>
    %751 = arith.mulf %744, %726 : vector<8x32xf32>
    %752 = arith.mulf %743, %749 : vector<8x32xf32>
    %753 = arith.addf %751, %752 : vector<8x32xf32>
    %754 = math.tanh %753 : vector<8x32xf32>
    %755 = arith.mulf %750, %754 : vector<8x32xf32>
    %756 = arith.truncf %755 : vector<8x32xf32> to vector<8x32xbf16>
    %c13_246 = arith.constant 13 : index
    %c0_247 = arith.constant 0 : index
    %c0_248 = arith.constant 0 : index
    %757 = vector.load %arg5[%c13_246, %c0_247, %c0_248] : memref<16x32x32xbf16, #tpu.memory_space<vmem>>, vector<1x32x32xbf16>
    %758 = vector.shape_cast %757 : vector<1x32x32xbf16> to vector<32x32xbf16>
    %cst_249 = arith.constant dense<0.000000e+00> : vector<8x32xf32>
    %759 = tpu.matmul %756, %758, %cst_249 {dimension_numbers = #tpu.dot_dimension_numbers<[1], [0], [0], [1], [0, 0, 1, 1], [], []>} : vector<8x32xbf16>, vector<32x32xbf16>, vector<8x32xf32> -> vector<8x32xf32>
    %760 = arith.addf %733, %759 : vector<8x32xf32>
    %c30 = arith.constant 30 : index
    %c0_250 = arith.constant 0 : index
    %c0_251 = arith.constant 0 : index
    %761 = vector.load %arg10[%c30, %c0_250, %c0_251] : memref<32x8x128xf32, #tpu.memory_space<vmem>>, vector<1x8x128xf32>
    %762 = vector.shape_cast %761 : vector<1x8x128xf32> to vector<8x128xf32>
    %cst_252 = arith.constant dense<0.000000e+00> : vector<8x128xf32>
    %763 = tpu.matmul %756, %11, %cst_252 {dimension_numbers = #tpu.dot_dimension_numbers<[1], [0], [0], [1], [0, 0, 1, 1], [], []>} : vector<8x32xbf16>, vector<32x128xbf16>, vector<8x128xf32> -> vector<8x128xf32>
    %764 = arith.addf %762, %763 : vector<8x128xf32>
    %765 = arith.negf %764 : vector<8x128xf32>
    %766 = math.exp %765 : vector<8x128xf32>
    %cst_253 = arith.constant 1.000000e+00 : f32
    %767 = vector.broadcast %cst_253 : f32 to vector<8x128xf32>
    %768 = arith.addf %767, %766 : vector<8x128xf32>
    %769 = arith.divf %767, %768 : vector<8x128xf32>
    %770 = vector.extract_strided_slice %769 {offsets = [0, 0], sizes = [8, 32], strides = [1, 1]} : vector<8x128xf32> to vector<8x32xf32>
    %771 = vector.extract_strided_slice %769 {offsets = [0, 32], sizes = [8, 32], strides = [1, 1]} : vector<8x128xf32> to vector<8x32xf32>
    %772 = vector.extract_strided_slice %769 {offsets = [0, 64], sizes = [8, 32], strides = [1, 1]} : vector<8x128xf32> to vector<8x32xf32>
    %cst_254 = arith.constant 2.000000e+00 : f32
    %773 = vector.broadcast %cst_254 : f32 to vector<8x32xf32>
    %774 = arith.mulf %773, %772 : vector<8x32xf32>
    %cst_255 = arith.constant 1.000000e+00 : f32
    %775 = vector.broadcast %cst_255 : f32 to vector<8x32xf32>
    %776 = arith.subf %774, %775 : vector<8x32xf32>
    %777 = vector.extract_strided_slice %769 {offsets = [0, 96], sizes = [8, 32], strides = [1, 1]} : vector<8x128xf32> to vector<8x32xf32>
    %778 = arith.mulf %771, %753 : vector<8x32xf32>
    %779 = arith.mulf %770, %776 : vector<8x32xf32>
    %780 = arith.addf %778, %779 : vector<8x32xf32>
    %781 = math.tanh %780 : vector<8x32xf32>
    %782 = arith.mulf %777, %781 : vector<8x32xf32>
    %783 = arith.truncf %782 : vector<8x32xf32> to vector<8x32xbf16>
    %c14_256 = arith.constant 14 : index
    %c0_257 = arith.constant 0 : index
    %c0_258 = arith.constant 0 : index
    %784 = vector.load %arg5[%c14_256, %c0_257, %c0_258] : memref<16x32x32xbf16, #tpu.memory_space<vmem>>, vector<1x32x32xbf16>
    %785 = vector.shape_cast %784 : vector<1x32x32xbf16> to vector<32x32xbf16>
    %cst_259 = arith.constant dense<0.000000e+00> : vector<8x32xf32>
    %786 = tpu.matmul %783, %785, %cst_259 {dimension_numbers = #tpu.dot_dimension_numbers<[1], [0], [0], [1], [0, 0, 1, 1], [], []>} : vector<8x32xbf16>, vector<32x32xbf16>, vector<8x32xf32> -> vector<8x32xf32>
    %787 = arith.addf %760, %786 : vector<8x32xf32>
    %c31 = arith.constant 31 : index
    %c0_260 = arith.constant 0 : index
    %c0_261 = arith.constant 0 : index
    %788 = vector.load %arg10[%c31, %c0_260, %c0_261] : memref<32x8x128xf32, #tpu.memory_space<vmem>>, vector<1x8x128xf32>
    %789 = vector.shape_cast %788 : vector<1x8x128xf32> to vector<8x128xf32>
    %cst_262 = arith.constant dense<0.000000e+00> : vector<8x128xf32>
    %790 = tpu.matmul %783, %11, %cst_262 {dimension_numbers = #tpu.dot_dimension_numbers<[1], [0], [0], [1], [0, 0, 1, 1], [], []>} : vector<8x32xbf16>, vector<32x128xbf16>, vector<8x128xf32> -> vector<8x128xf32>
    %791 = arith.addf %789, %790 : vector<8x128xf32>
    %792 = arith.negf %791 : vector<8x128xf32>
    %793 = math.exp %792 : vector<8x128xf32>
    %cst_263 = arith.constant 1.000000e+00 : f32
    %794 = vector.broadcast %cst_263 : f32 to vector<8x128xf32>
    %795 = arith.addf %794, %793 : vector<8x128xf32>
    %796 = arith.divf %794, %795 : vector<8x128xf32>
    %797 = vector.extract_strided_slice %796 {offsets = [0, 0], sizes = [8, 32], strides = [1, 1]} : vector<8x128xf32> to vector<8x32xf32>
    %798 = vector.extract_strided_slice %796 {offsets = [0, 32], sizes = [8, 32], strides = [1, 1]} : vector<8x128xf32> to vector<8x32xf32>
    %799 = vector.extract_strided_slice %796 {offsets = [0, 64], sizes = [8, 32], strides = [1, 1]} : vector<8x128xf32> to vector<8x32xf32>
    %cst_264 = arith.constant 2.000000e+00 : f32
    %800 = vector.broadcast %cst_264 : f32 to vector<8x32xf32>
    %801 = arith.mulf %800, %799 : vector<8x32xf32>
    %cst_265 = arith.constant 1.000000e+00 : f32
    %802 = vector.broadcast %cst_265 : f32 to vector<8x32xf32>
    %803 = arith.subf %801, %802 : vector<8x32xf32>
    %804 = vector.extract_strided_slice %796 {offsets = [0, 96], sizes = [8, 32], strides = [1, 1]} : vector<8x128xf32> to vector<8x32xf32>
    %805 = arith.mulf %798, %780 : vector<8x32xf32>
    %806 = arith.mulf %797, %803 : vector<8x32xf32>
    %807 = arith.addf %805, %806 : vector<8x32xf32>
    %808 = math.tanh %807 : vector<8x32xf32>
    %809 = arith.mulf %804, %808 : vector<8x32xf32>
    %810 = arith.truncf %809 : vector<8x32xf32> to vector<8x32xbf16>
    %c15_266 = arith.constant 15 : index
    %c0_267 = arith.constant 0 : index
    %c0_268 = arith.constant 0 : index
    %811 = vector.load %arg5[%c15_266, %c0_267, %c0_268] : memref<16x32x32xbf16, #tpu.memory_space<vmem>>, vector<1x32x32xbf16>
    %812 = vector.shape_cast %811 : vector<1x32x32xbf16> to vector<32x32xbf16>
    %cst_269 = arith.constant dense<0.000000e+00> : vector<8x32xf32>
    %813 = tpu.matmul %810, %812, %cst_269 {dimension_numbers = #tpu.dot_dimension_numbers<[1], [0], [0], [1], [0, 0, 1, 1], [], []>} : vector<8x32xbf16>, vector<32x32xbf16>, vector<8x32xf32> -> vector<8x32xf32>
    %814 = arith.addf %787, %813 : vector<8x32xf32>
    %c0_270 = arith.constant 0 : index
    %c0_271 = arith.constant 0 : index
    %815 = vector.load %arg6[%c0_270, %c0_271] : memref<1x32xf32, #tpu.memory_space<vmem>>, vector<1x32xf32>
    %816 = vector.broadcast %815 : vector<1x32xf32> to vector<8x32xf32>
    %817 = arith.addf %814, %816 : vector<8x32xf32>
    %cst_272 = arith.constant 0.000000e+00 : f32
    %818 = vector.broadcast %cst_272 : f32 to vector<8x32xf32>
    %819 = arith.maximumf %817, %818 : vector<8x32xf32>
    %c0_273 = arith.constant 0 : index
    %c0_274 = arith.constant 0 : index
    %820 = vector.load %arg7[%c0_273, %c0_274] : memref<32x5xf32, #tpu.memory_space<vmem>>, vector<32x5xf32>
    %cst_275 = arith.constant dense<0.000000e+00> : vector<8x5xf32>
    %821 = tpu.matmul %819, %820, %cst_275 {dimension_numbers = #tpu.dot_dimension_numbers<[1], [0], [0], [1], [0, 0, 1, 1], [], []>} : vector<8x32xf32>, vector<32x5xf32>, vector<8x5xf32> -> vector<8x5xf32>
    %c0_276 = arith.constant 0 : index
    %c0_277 = arith.constant 0 : index
    %822 = vector.load %arg8[%c0_276, %c0_277] : memref<1x5xf32, #tpu.memory_space<vmem>>, vector<1x5xf32>
    %823 = vector.broadcast %822 : vector<1x5xf32> to vector<8x5xf32>
    %824 = arith.addf %821, %823 : vector<8x5xf32>
    %cst_278 = arith.constant dense<0xFF800000> : vector<8xf32>
    %825 = vector.multi_reduction <maximumf>, %824, %cst_278 [1] : vector<8x5xf32> to vector<8xf32>
    %826 = vector.shape_cast %825 : vector<8xf32> to vector<8x1xf32>
    %827 = vector.broadcast %826 : vector<8x1xf32> to vector<8x5xf32>
    %828 = arith.subf %824, %827 : vector<8x5xf32>
    %829 = math.exp %828 : vector<8x5xf32>
    %cst_279 = arith.constant dense<0.000000e+00> : vector<8xf32>
    %830 = vector.multi_reduction <add>, %829, %cst_279 [1] : vector<8x5xf32> to vector<8xf32>
    %831 = vector.shape_cast %830 : vector<8xf32> to vector<8x1xf32>
    %832 = math.log %831 : vector<8x1xf32>
    %833 = vector.broadcast %832 : vector<8x1xf32> to vector<8x5xf32>
    %834 = arith.subf %828, %833 : vector<8x5xf32>
    %c0_280 = arith.constant 0 : index
    %c0_281 = arith.constant 0 : index
    %835 = vector.load %arg9[%c0_280, %c0_281] : memref<8x5xf32, #tpu.memory_space<vmem>>, vector<8x5xf32>
    tpu.vector_store %arg9[%c0_280, %c0_281], %834 {strides = array<i32>} : memref<8x5xf32, #tpu.memory_space<vmem>>, vector<8x5xf32>,
    return
  }
  func.func @transform_0(%arg0: i32) -> (i32, i32, i32) {
    %c0_i32 = arith.constant 0 : i32
    %c0_i32_0 = arith.constant 0 : i32
    %c0_i32_1 = arith.constant 0 : i32
    %c0_i32_2 = arith.constant 0 : i32
    return %c0_i32, %c0_i32_0, %c0_i32_1 : i32, i32, i32
  }
  func.func @transform_1(%arg0: i32) -> (i32, i32) {
    %c0_i32 = arith.constant 0 : i32
    %c0_i32_0 = arith.constant 0 : i32
    %c0_i32_1 = arith.constant 0 : i32
    return %c0_i32, %c0_i32_0 : i32, i32
  }
  func.func @transform_2(%arg0: i32) -> (i32, i32) {
    %c0_i32 = arith.constant 0 : i32
    %c0_i32_0 = arith.constant 0 : i32
    %c0_i32_1 = arith.constant 0 : i32
    return %c0_i32, %c0_i32_0 : i32, i32
  }
  func.func @transform_3(%arg0: i32) -> (i32, i32) {
    %c0_i32 = arith.constant 0 : i32
    %c0_i32_0 = arith.constant 0 : i32
    %c0_i32_1 = arith.constant 0 : i32
    return %c0_i32, %c0_i32_0 : i32, i32
  }
  func.func @transform_4(%arg0: i32) -> (i32, i32, i32) {
    %c0_i32 = arith.constant 0 : i32
    %c0_i32_0 = arith.constant 0 : i32
    %c0_i32_1 = arith.constant 0 : i32
    %c0_i32_2 = arith.constant 0 : i32
    return %c0_i32, %c0_i32_0, %c0_i32_1 : i32, i32, i32
  }
  func.func @transform_5(%arg0: i32) -> (i32, i32) {
    %c0_i32 = arith.constant 0 : i32
    %c0_i32_0 = arith.constant 0 : i32
    %c0_i32_1 = arith.constant 0 : i32
    return %c0_i32, %c0_i32_0 : i32, i32
  }
  func.func @transform_6(%arg0: i32) -> (i32, i32) {
    %c0_i32 = arith.constant 0 : i32
    %c0_i32_0 = arith.constant 0 : i32
    %c0_i32_1 = arith.constant 0 : i32
    return %c0_i32, %c0_i32_0 : i32, i32
  }
  func.func @transform_7(%arg0: i32) -> (i32, i32) {
    %c0_i32 = arith.constant 0 : i32
    %c0_i32_0 = arith.constant 0 : i32
    %c0_i32_1 = arith.constant 0 : i32
    return %c0_i32, %c0_i32_0 : i32, i32
  }
  func.func @transform_8(%arg0: i32) -> (i32, i32) {
    %c0_i32 = arith.constant 0 : i32
    %c0_i32_0 = arith.constant 0 : i32
    %c0_i32_1 = arith.constant 0 : i32
    return %c0_i32, %c0_i32_0 : i32, i32
  }
}

</mosaic_0001>

<llo_original>
// kernel: rnn_forward.1
$region0: #{rnn_forward.1}
  #allocation0 [shape = 'u32[]', space=smem, size = 0x4, offset = 0x4, fixed_abs, tag = 'smem constant byte address 0x4 - core index']
  #allocation1 [shape = 'u32[144,128]{1,0:T(1,128)}', space=vmem, size = 0x12000, scoped, tag = 'internal scratch']
  #allocation2 [shape = 'f32[32,8,128]{2,1,0:T(8,128)}', space=vmem, size = 0x20000, scoped, tag = 'scratch operand']
  %s0 = inlined_call_operand.vmem [shape: f32[32,8,1], index: 0, kind: input, shape index: {}]
  %s1 = inlined_call_operand.vmem [shape: f32[1,128], index: 1, kind: input, shape index: {}]
  %s2 = inlined_call_operand.vmem [shape: bf16[32,128], index: 2, kind: input, shape index: {}]
  %s3 = inlined_call_operand.vmem [shape: f32[1,128], index: 3, kind: input, shape index: {}]
  %s4 = inlined_call_operand.vmem [shape: bf16[16,32,32], index: 4, kind: input, shape index: {}]
  %s5 = inlined_call_operand.vmem [shape: f32[1,32], index: 5, kind: input, shape index: {}]
  %s6 = inlined_call_operand.vmem [shape: f32[32,5], index: 6, kind: input, shape index: {}]
  %s7 = inlined_call_operand.vmem [shape: f32[1,5], index: 7, kind: input, shape index: {}]
  %s8 = inlined_call_operand.hbm [shape: f32[8,5], index: 8, kind: output, shape index: {}]
  %s9 = sld [smem:[#allocation0]]
  $region42: #{rnn_forward.1} parent=0
    _
  %s11 = ssub.s32 1, %s9
  %s12 = scalar_select 0, %s11, %s9
  $region1: #{rnn_forward.1} parent=0
    #allocation3 [shape = 'u8[4096]{0}', space=vmem, size = 0x1000, scoped, tag = 'output window, operand 0, single buffered']
    #allocation4 [shape = 's32[1]{0}', space=sflag, size = 0x4, scoped, tag = 'scoped memory for rnn_forward.1']
    %13 = vsyncpa [#allocation4], 0
    // Predicated region
    $region2: #{rnn_forward.1} parent=1 // pred_check
      _
    $region3: #{rnn_forward.1} parent=1 // pred_check_branch
      %15 = sbr.rel (0) target = $region5
    $region4: #{rnn_forward.1} parent=1 // pred_region
      _
    $region5: #{rnn_forward.1} parent=1 // pred_fallthru
      _
    // Predicated region
    $region6: #{rnn_forward.1} parent=1 // pred_check
      _
    $region7: #{rnn_forward.1} parent=1 // pred_check_branch
      %17 = sbr.rel (0) target = $region9
    $region8: #{rnn_forward.1} parent=1 // pred_region
      _
    $region9: #{rnn_forward.1} parent=1 // pred_fallthru
      _
    // Predicated region
    $region10: #{rnn_forward.1} parent=1 // pred_check
      _
    $region11: #{rnn_forward.1} parent=1 // pred_check_branch
      %19 = sbr.rel (0) target = $region13
    $region12: #{rnn_forward.1} parent=1 // pred_region
      _
    $region13: #{rnn_forward.1} parent=1 // pred_fallthru
      _
    // Predicated region
    $region14: #{rnn_forward.1} parent=1 // pred_check
      _
    $region15: #{rnn_forward.1} parent=1 // pred_check_branch
      %21 = sbr.rel (0) target = $region17
    $region16: #{rnn_forward.1} parent=1 // pred_region
      _
    $region17: #{rnn_forward.1} parent=1 // pred_fallthru
      _
    // Predicated region
    $region18: #{rnn_forward.1} parent=1 // pred_check
      _
    $region19: #{rnn_forward.1} parent=1 // pred_check_branch
      %23 = sbr.rel (0) target = $region21
    $region20: #{rnn_forward.1} parent=1 // pred_region
      _
    $region21: #{rnn_forward.1} parent=1 // pred_fallthru
      _
    // Predicated region
    $region22: #{rnn_forward.1} parent=1 // pred_check
      _
    $region23: #{rnn_forward.1} parent=1 // pred_check_branch
      %25 = sbr.rel (0) target = $region25
    $region24: #{rnn_forward.1} parent=1 // pred_region
      _
    $region25: #{rnn_forward.1} parent=1 // pred_fallthru
      _
    // Predicated region
    $region26: #{rnn_forward.1} parent=1 // pred_check
      _
    $region27: #{rnn_forward.1} parent=1 // pred_check_branch
      %27 = sbr.rel (0) target = $region29
    $region28: #{rnn_forward.1} parent=1 // pred_region
      _
    $region29: #{rnn_forward.1} parent=1 // pred_fallthru
      _
    // Predicated region
    $region30: #{rnn_forward.1} parent=1 // pred_check
      _
    $region31: #{rnn_forward.1} parent=1 // pred_check_branch
      %29 = sbr.rel (0) target = $region33
    $region32: #{rnn_forward.1} parent=1 // pred_region
      _
    $region33: #{rnn_forward.1} parent=1 // pred_fallthru
      _
    %v31 = vld [vmem:[%s0] sm:$0xff]
    %v32 = vld [vmem:[%s0 + $0x8] sm:$0xff]
    %v33 = vld [vmem:[%s0 + $0x10] sm:$0xff]
    %v34 = vld [vmem:[%s0 + $0x18] sm:$0xff]
    %v35 = vld [vmem:[%s0 + $0x20] sm:$0xff]
    %v36 = vld [vmem:[%s0 + $0x28] sm:$0xff]
    %v37 = vld [vmem:[%s0 + $0x30] sm:$0xff]
    %v38 = vld [vmem:[%s0 + $0x38] sm:$0xff]
    %v39 = vld [vmem:[%s0 + $0x40] sm:$0xff]
    %v40 = vld [vmem:[%s0 + $0x48] sm:$0xff]
    %v41 = vld [vmem:[%s0 + $0x50] sm:$0xff]
    %v42 = vld [vmem:[%s0 + $0x58] sm:$0xff]
    %v43 = vld [vmem:[%s0 + $0x60] sm:$0xff]
    %v44 = vld [vmem:[%s0 + $0x68] sm:$0xff]
    %v45 = vld [vmem:[%s0 + $0x70] sm:$0xff]
    %v46 = vld [vmem:[%s0 + $0x78] sm:$0xff]
    %v47 = vld [vmem:[%s0 + $0x80] sm:$0xff]
    %v48 = vld [vmem:[%s0 + $0x88] sm:$0xff]
    %v49 = vld [vmem:[%s0 + $0x90] sm:$0xff]
    %v50 = vld [vmem:[%s0 + $0x98] sm:$0xff]
    %v51 = vld [vmem:[%s0 + $0xa0] sm:$0xff]
    %v52 = vld [vmem:[%s0 + $0xa8] sm:$0xff]
    %v53 = vld [vmem:[%s0 + $0xb0] sm:$0xff]
    %v54 = vld [vmem:[%s0 + $0xb8] sm:$0xff]
    %v55 = vld [vmem:[%s0 + $0xc0] sm:$0xff]
    %v56 = vld [vmem:[%s0 + $0xc8] sm:$0xff]
    %v57 = vld [vmem:[%s0 + $0xd0] sm:$0xff]
    %v58 = vld [vmem:[%s0 + $0xd8] sm:$0xff]
    %v59 = vld [vmem:[%s0 + $0xe0] sm:$0xff]
    %v60 = vld [vmem:[%s0 + $0xe8] sm:$0xff]
    %v61 = vld [vmem:[%s0 + $0xf0] sm:$0xff]
    %v62 = vld [vmem:[%s0 + $0xf8] sm:$0xff]
    %v63 = vld [vmem:[%s1] sm:$0x1]
    %65 = vset.pattern.permute.xlu0 0
    %66 = vperm.xlu0 %65, %v31
    %v67 = vpop.permute.xlu0 %66
    %70 = vset.pattern.permute.xlu0 0
    %71 = vperm.xlu0 %70, %v32
    %v72 = vpop.permute.xlu0 %71
    %75 = vset.pattern.permute.xlu0 0
    %76 = vperm.xlu0 %75, %v33
    %v77 = vpop.permute.xlu0 %76
    %80 = vset.pattern.permute.xlu0 0
    %81 = vperm.xlu0 %80, %v34
    %v82 = vpop.permute.xlu0 %81
    %85 = vset.pattern.permute.xlu0 0
    %86 = vperm.xlu0 %85, %v35
    %v87 = vpop.permute.xlu0 %86
    %90 = vset.pattern.permute.xlu0 0
    %91 = vperm.xlu0 %90, %v36
    %v92 = vpop.permute.xlu0 %91
    %95 = vset.pattern.permute.xlu0 0
    %96 = vperm.xlu0 %95, %v37
    %v97 = vpop.permute.xlu0 %96
    %100 = vset.pattern.permute.xlu0 0
    %101 = vperm.xlu0 %100, %v38
    %v102 = vpop.permute.xlu0 %101
    %105 = vset.pattern.permute.xlu0 0
    %106 = vperm.xlu0 %105, %v39
    %v107 = vpop.permute.xlu0 %106
    %110 = vset.pattern.permute.xlu0 0
    %111 = vperm.xlu0 %110, %v40
    %v112 = vpop.permute.xlu0 %111
    %115 = vset.pattern.permute.xlu0 0
    %116 = vperm.xlu0 %115, %v41
    %v117 = vpop.permute.xlu0 %116
    %120 = vset.pattern.permute.xlu0 0
    %121 = vperm.xlu0 %120, %v42
    %v122 = vpop.permute.xlu0 %121
    %125 = vset.pattern.permute.xlu0 0
    %126 = vperm.xlu0 %125, %v43
    %v127 = vpop.permute.xlu0 %126
    %130 = vset.pattern.permute.xlu0 0
    %131 = vperm.xlu0 %130, %v44
    %v132 = vpop.permute.xlu0 %131
    %135 = vset.pattern.permute.xlu0 0
    %136 = vperm.xlu0 %135, %v45
    %v137 = vpop.permute.xlu0 %136
    %140 = vset.pattern.permute.xlu0 0
    %141 = vperm.xlu0 %140, %v46
    %v142 = vpop.permute.xlu0 %141
    %145 = vset.pattern.permute.xlu0 0
    %146 = vperm.xlu0 %145, %v47
    %v147 = vpop.permute.xlu0 %146
    %150 = vset.pattern.permute.xlu0 0
    %151 = vperm.xlu0 %150, %v48
    %v152 = vpop.permute.xlu0 %151
    %155 = vset.pattern.permute.xlu0 0
    %156 = vperm.xlu0 %155, %v49
    %v157 = vpop.permute.xlu0 %156
    %160 = vset.pattern.permute.xlu0 0
    %161 = vperm.xlu0 %160, %v50
    %v162 = vpop.permute.xlu0 %161
    %165 = vset.pattern.permute.xlu0 0
    %166 = vperm.xlu0 %165, %v51
    %v167 = vpop.permute.xlu0 %166
    %170 = vset.pattern.permute.xlu0 0
    %171 = vperm.xlu0 %170, %v52
    %v172 = vpop.permute.xlu0 %171
    %175 = vset.pattern.permute.xlu0 0
    %176 = vperm.xlu0 %175, %v53
    %v177 = vpop.permute.xlu0 %176
    %180 = vset.pattern.permute.xlu0 0
    %181 = vperm.xlu0 %180, %v54
    %v182 = vpop.permute.xlu0 %181
    %185 = vset.pattern.permute.xlu0 0
    %186 = vperm.xlu0 %185, %v55
    %v187 = vpop.permute.xlu0 %186
    %190 = vset.pattern.permute.xlu0 0
    %191 = vperm.xlu0 %190, %v56
    %v192 = vpop.permute.xlu0 %191
    %195 = vset.pattern.permute.xlu0 0
    %196 = vperm.xlu0 %195, %v57
    %v197 = vpop.permute.xlu0 %196
    %200 = vset.pattern.permute.xlu0 0
    %201 = vperm.xlu0 %200, %v58
    %v202 = vpop.permute.xlu0 %201
    %205 = vset.pattern.permute.xlu0 0
    %206 = vperm.xlu0 %205, %v59
    %v207 = vpop.permute.xlu0 %206
    %210 = vset.pattern.permute.xlu0 0
    %211 = vperm.xlu0 %210, %v60
    %v212 = vpop.permute.xlu0 %211
    %215 = vset.pattern.permute.xlu0 0
    %216 = vperm.xlu0 %215, %v61
    %v217 = vpop.permute.xlu0 %216
    %220 = vset.pattern.permute.xlu0 0
    %221 = vperm.xlu0 %220, %v62
    %v222 = vpop.permute.xlu0 %221
    %v225 = vlaneseq
    %v226 = vshrl.u32 %v225, 7
    %v227 = vsub.s32 0, %v226
    %v228 = vrot.slane %v63, %v227
    %v230 = vmul.f32 %v67, %v228
    %v231 = vmul.f32 %v72, %v228
    %v232 = vmul.f32 %v77, %v228
    %v233 = vmul.f32 %v82, %v228
    %v234 = vmul.f32 %v87, %v228
    %v235 = vmul.f32 %v92, %v228
    %v236 = vmul.f32 %v97, %v228
    %v237 = vmul.f32 %v102, %v228
    %v238 = vmul.f32 %v107, %v228
    %v239 = vmul.f32 %v112, %v228
    %v240 = vmul.f32 %v117, %v228
    %v241 = vmul.f32 %v122, %v228
    %v242 = vmul.f32 %v127, %v228
    %v243 = vmul.f32 %v132, %v228
    %v244 = vmul.f32 %v137, %v228
    %v245 = vmul.f32 %v142, %v228
    %v246 = vmul.f32 %v147, %v228
    %v247 = vmul.f32 %v152, %v228
    %v248 = vmul.f32 %v157, %v228
    %v249 = vmul.f32 %v162, %v228
    %v250 = vmul.f32 %v167, %v228
    %v251 = vmul.f32 %v172, %v228
    %v252 = vmul.f32 %v177, %v228
    %v253 = vmul.f32 %v182, %v228
    %v254 = vmul.f32 %v187, %v228
    %v255 = vmul.f32 %v192, %v228
    %v256 = vmul.f32 %v197, %v228
    %v257 = vmul.f32 %v202, %v228
    %v258 = vmul.f32 %v207, %v228
    %v259 = vmul.f32 %v212, %v228
    %v260 = vmul.f32 %v217, %v228
    %v261 = vmul.f32 %v222, %v228
    %v262 = vld [vmem:[%s3] sm:$0x1]
    %v264 = vlaneseq
    %v265 = vshrl.u32 %v264, 7
    %v266 = vsub.s32 0, %v265
    %v267 = vrot.slane %v262, %v266
    %v269 = vadd.f32 %v230, %v267
    %v270 = vadd.f32 %v231, %v267
    %v271 = vadd.f32 %v232, %v267
    %v272 = vadd.f32 %v233, %v267
    %v273 = vadd.f32 %v234, %v267
    %v274 = vadd.f32 %v235, %v267
    %v275 = vadd.f32 %v236, %v267
    %v276 = vadd.f32 %v237, %v267
    %v277 = vadd.f32 %v238, %v267
    %v278 = vadd.f32 %v239, %v267
    %v279 = vadd.f32 %v240, %v267
    %v280 = vadd.f32 %v241, %v267
    %v281 = vadd.f32 %v242, %v267
    %v282 = vadd.f32 %v243, %v267
    %v283 = vadd.f32 %v244, %v267
    %v284 = vadd.f32 %v245, %v267
    %v285 = vadd.f32 %v246, %v267
    %v286 = vadd.f32 %v247, %v267
    %v287 = vadd.f32 %v248, %v267
    %v288 = vadd.f32 %v249, %v267
    %v289 = vadd.f32 %v250, %v267
    %v290 = vadd.f32 %v251, %v267
    %v291 = vadd.f32 %v252, %v267
    %v292 = vadd.f32 %v253, %v267
    %v293 = vadd.f32 %v254, %v267
    %v294 = vadd.f32 %v255, %v267
    %v295 = vadd.f32 %v256, %v267
    %v296 = vadd.f32 %v257, %v267
    %v297 = vadd.f32 %v258, %v267
    %v298 = vadd.f32 %v259, %v267
    %v299 = vadd.f32 %v260, %v267
    %v300 = vadd.f32 %v261, %v267
    %301 = vst [vmem:[#allocation2] sm:$0xff] %v269
    %302 = vst [vmem:[#allocation2 + $0x8] sm:$0xff] %v270
    %303 = vst [vmem:[#allocation2 + $0x10] sm:$0xff] %v271
    %304 = vst [vmem:[#allocation2 + $0x18] sm:$0xff] %v272
    %305 = vst [vmem:[#allocation2 + $0x20] sm:$0xff] %v273
    %306 = vst [vmem:[#allocation2 + $0x28] sm:$0xff] %v274
    %307 = vst [vmem:[#allocation2 + $0x30] sm:$0xff] %v275
    %308 = vst [vmem:[#allocation2 + $0x38] sm:$0xff] %v276
    %309 = vst [vmem:[#allocation2 + $0x40] sm:$0xff] %v277
    %310 = vst [vmem:[#allocation2 + $0x48] sm:$0xff] %v278
    %311 = vst [vmem:[#allocation2 + $0x50] sm:$0xff] %v279
    %312 = vst [vmem:[#allocation2 + $0x58] sm:$0xff] %v280
    %313 = vst [vmem:[#allocation2 + $0x60] sm:$0xff] %v281
    %314 = vst [vmem:[#allocation2 + $0x68] sm:$0xff] %v282
    %315 = vst [vmem:[#allocation2 + $0x70] sm:$0xff] %v283
    %316 = vst [vmem:[#allocation2 + $0x78] sm:$0xff] %v284
    %317 = vst [vmem:[#allocation2 + $0x80] sm:$0xff] %v285
    %318 = vst [vmem:[#allocation2 + $0x88] sm:$0xff] %v286
    %319 = vst [vmem:[#allocation2 + $0x90] sm:$0xff] %v287
    %320 = vst [vmem:[#allocation2 + $0x98] sm:$0xff] %v288
    %321 = vst [vmem:[#allocation2 + $0xa0] sm:$0xff] %v289
    %322 = vst [vmem:[#allocation2 + $0xa8] sm:$0xff] %v290
    %323 = vst [vmem:[#allocation2 + $0xb0] sm:$0xff] %v291
    %324 = vst [vmem:[#allocation2 + $0xb8] sm:$0xff] %v292
    %325 = vst [vmem:[#allocation2 + $0xc0] sm:$0xff] %v293
    %326 = vst [vmem:[#allocation2 + $0xc8] sm:$0xff] %v294
    %327 = vst [vmem:[#allocation2 + $0xd0] sm:$0xff] %v295
    %328 = vst [vmem:[#allocation2 + $0xd8] sm:$0xff] %v296
    %329 = vst [vmem:[#allocation2 + $0xe0] sm:$0xff] %v297
    %330 = vst [vmem:[#allocation2 + $0xe8] sm:$0xff] %v298
    %331 = vst [vmem:[#allocation2 + $0xf0] sm:$0xff] %v299
    %332 = vst [vmem:[#allocation2 + $0xf8] sm:$0xff] %v300
    %v333 = vld [vmem:[%s2] sm:$0xf]
    %v334 = vld [vmem:[%s2 + $0x4] sm:$0xf]
    %v335 = vld [vmem:[%s2 + $0x8] sm:$0xf]
    %v336 = vld [vmem:[%s2 + $0xc] sm:$0xf]
    %v337 = vld [vmem:[#allocation2] sm:$0xff]
    %v342 = vunpack.c.l.b16 %v333
    %v343 = vunpack.c.l.b16 %v334
    %v344 = vunpack.c.l.b16 %v335
    %v345 = vunpack.c.l.b16 %v336
    %v346 = vpack.c.b16 %v343, %v342
    %v347 = vpack.c.b16 %v345, %v344
    %vm350 = vcmask 261120
    %v352 = vsel %vm350, 0, 0
    %354 = vmatprep.subr.bf16.mxu0 0
    %355 = vmatpush1.bf16.msra.mxu0 0
    %356 = vmatprep.subr.bf16.mxu0 0
    %357 = vmatpush1.bf16.msra.mxu0 0
    %358 = vmatprep.subr.bf16.mxu0 0
    %359 = vmatpush1.bf16.msra.mxu0 0
    %360 = vmatprep.subr.bf16.mxu0 0
    %361 = vmatpush1.bf16.msra.mxu0 0
    %362 = vmatprep.subr.bf16.mxu0 0
    %363 = vmatpush1.bf16.msra.mxu0 0
    %364 = vmatprep.subr.bf16.mxu0 0
    %365 = vmatpush1.bf16.msra.mxu0 0
    %366 = vmatprep.subr.bf16.mxu0 0
    %367 = vmatpush1.bf16.msra.mxu0 %v347
    %368 = vmatprep.subr.bf16.mxu0 0
    %369 = vmatpush1.bf16.msra.mxu0 %v346
    %370 = vmatprep.subr.bf16.mxu0 0
    %371 = vmatpush2.bf16.msra.mxu0 0
    %372 = vmatprep.subr.bf16.mxu0 0
    %373 = vmatpush2.bf16.msra.mxu0 0
    %374 = vmatprep.subr.bf16.mxu0 0
    %375 = vmatpush2.bf16.msra.mxu0 0
    %376 = vmatprep.subr.bf16.mxu0 0
    %377 = vmatpush2.bf16.msra.mxu0 0
    %378 = vmatprep.subr.bf16.mxu0 0
    %379 = vmatpush2.bf16.msra.mxu0 0
    %380 = vmatprep.subr.bf16.mxu0 0
    %381 = vmatpush2.bf16.msra.mxu0 0
    %382 = vmatprep.subr.bf16.mxu0 0
    %383 = vmatpush2.bf16.msra.mxu0 0
    %384 = vmatprep.subr.bf16.mxu0 0
    %385 = vmatpush2.bf16.msra.mxu0 0
    %386 = vmatprep.mubr.bf16.mxu0 0
    %387 = vmatmul.mubr.bf16.gmra.mxu0 %v352
    %v388 = vpop.f32.mrf.mxu0
    %v389 = vadd.f32 0.0, %v388
    %v390 = vpop.f32.mrf.mxu0
    %v391 = vpop.f32.mrf.mxu0
    %v392 = vpop.f32.mrf.mxu0
    %393 = vdwg.mxu0
    %v394 = vadd.f32 %v337, %v389
    %v395 = vxor.u32 %v394, 2147483648
    %v396 = vmul.f32 %v395, 1.442695
    %v397 = vpow.pop %v396
    %v398 = vadd.f32 %v397, 1.0
    %v399 = vrcp.pop %v398
    %v400 = vmul.f32 1.0, %v399
    %v401 = vmul.f32 %v400, 2.0
    %v402 = vsub.f32 %v401, 1.0
    %v403 = vmul.f32 %v400, 0.0
    %405 = vrot.lane.b32.xlu0 %v402, 64
    %v406 = vpop.permute.xlu0 %405
    %v408 = vmul.f32 %v400, %v406
    %410 = vrot.lane.b32.xlu0 %v408, 32
    %v411 = vpop.permute.xlu0 %410
    %v413 = vadd.f32 %v403, %v411
    %v414 = vtanh.pop %v413
    %416 = vrot.lane.b32.xlu0 %v414, 64
    %v417 = vpop.permute.xlu0 %416
    %v419 = vmul.f32 %v400, %v417
    %v420 = vpack.c.bf16 %v419, %v419
    %s421 = scalar_lea.vmem [#allocation2], 8
    %v422 = vld [vmem:[%s421] sm:$0xff]
    %424 = vrot.lane.b32.xlu0 %v420, 32
    %v425 = vpop.permute.xlu0 %424
    %v427 = vsel %vm350, %v425, 0
    %429 = vmatprep.subr.bf16.mxu0 0
    %430 = vmatpush1.bf16.msra.mxu0 0
    %431 = vmatprep.subr.bf16.mxu0 0
    %432 = vmatpush1.bf16.msra.mxu0 0
    %433 = vmatprep.subr.bf16.mxu0 0
    %434 = vmatpush1.bf16.msra.mxu0 0
    %435 = vmatprep.subr.bf16.mxu0 0
    %436 = vmatpush1.bf16.msra.mxu0 0
    %437 = vmatprep.subr.bf16.mxu0 0
    %438 = vmatpush1.bf16.msra.mxu0 0
    %439 = vmatprep.subr.bf16.mxu0 0
    %440 = vmatpush1.bf16.msra.mxu0 0
    %441 = vmatprep.subr.bf16.mxu0 0
    %442 = vmatpush1.bf16.msra.mxu0 %v347
    %443 = vmatprep.subr.bf16.mxu0 0
    %444 = vmatpush1.bf16.msra.mxu0 %v346
    %445 = vmatprep.subr.bf16.mxu0 0
    %446 = vmatpush2.bf16.msra.mxu0 0
    %447 = vmatprep.subr.bf16.mxu0 0
    %448 = vmatpush2.bf16.msra.mxu0 0
    %449 = vmatprep.subr.bf16.mxu0 0
    %450 = vmatpush2.bf16.msra.mxu0 0
    %451 = vmatprep.subr.bf16.mxu0 0
    %452 = vmatpush2.bf16.msra.mxu0 0
    %453 = vmatprep.subr.bf16.mxu0 0
    %454 = vmatpush2.bf16.msra.mxu0 0
    %455 = vmatprep.subr.bf16.mxu0 0
    %456 = vmatpush2.bf16.msra.mxu0 0
    %457 = vmatprep.subr.bf16.mxu0 0
    %458 = vmatpush2.bf16.msra.mxu0 0
    %459 = vmatprep.subr.bf16.mxu0 0
    %460 = vmatpush2.bf16.msra.mxu0 0
    %461 = vmatprep.mubr.bf16.mxu0 0
    %462 = vmatmul.mubr.bf16.gmra.mxu0 %v427
    %v463 = vpop.f32.mrf.mxu0
    %v464 = vadd.f32 0.0, %v463
    %v465 = vpop.f32.mrf.mxu0
    %v466 = vpop.f32.mrf.mxu0
    %v467 = vpop.f32.mrf.mxu0
    %468 = vdwg.mxu0
    %v469 = vadd.f32 %v422, %v464
    %v470 = vxor.u32 %v469, 2147483648
    %v471 = vmul.f32 %v470, 1.442695
    %v472 = vpow.pop %v471
    %v473 = vadd.f32 %v472, 1.0
    %v474 = vrcp.pop %v473
    %v475 = vmul.f32 1.0, %v474
    %v476 = vmul.f32 %v475, 2.0
    %v477 = vsub.f32 %v476, 1.0
    %v478 = vmul.f32 %v475, %v413
    %480 = vrot.lane.b32.xlu0 %v477, 64
    %v481 = vpop.permute.xlu0 %480
    %v483 = vmul.f32 %v475, %v481
    %485 = vrot.lane.b32.xlu0 %v483, 32
    %v486 = vpop.permute.xlu0 %485
    %v488 = vadd.f32 %v478, %v486
    %v489 = vtanh.pop %v488
    %491 = vrot.lane.b32.xlu0 %v489, 64
    %v492 = vpop.permute.xlu0 %491
    %v494 = vmul.f32 %v475, %v492
    %v495 = vpack.c.bf16 %v494, %v494
    %s496 = scalar_lea.vmem [#allocation2], 16
    %v497 = vld [vmem:[%s496] sm:$0xff]
    %499 = vrot.lane.b32.xlu0 %v495, 32
    %v500 = vpop.permute.xlu0 %499
    %v502 = vsel %vm350, %v500, 0
    %504 = vmatprep.subr.bf16.mxu0 0
    %505 = vmatpush1.bf16.msra.mxu0 0
    %506 = vmatprep.subr.bf16.mxu0 0
    %507 = vmatpush1.bf16.msra.mxu0 0
    %508 = vmatprep.subr.bf16.mxu0 0
    %509 = vmatpush1.bf16.msra.mxu0 0
    %510 = vmatprep.subr.bf16.mxu0 0
    %511 = vmatpush1.bf16.msra.mxu0 0
    %512 = vmatprep.subr.bf16.mxu0 0
    %513 = vmatpush1.bf16.msra.mxu0 0
    %514 = vmatprep.subr.bf16.mxu0 0
    %515 = vmatpush1.bf16.msra.mxu0 0
    %516 = vmatprep.subr.bf16.mxu0 0
    %517 = vmatpush1.bf16.msra.mxu0 %v347
    %518 = vmatprep.subr.bf16.mxu0 0
    %519 = vmatpush1.bf16.msra.mxu0 %v346
    %520 = vmatprep.subr.bf16.mxu0 0
    %521 = vmatpush2.bf16.msra.mxu0 0
    %522 = vmatprep.subr.bf16.mxu0 0
    %523 = vmatpush2.bf16.msra.mxu0 0
    %524 = vmatprep.subr.bf16.mxu0 0
    %525 = vmatpush2.bf16.msra.mxu0 0
    %526 = vmatprep.subr.bf16.mxu0 0
    %527 = vmatpush2.bf16.msra.mxu0 0
    %528 = vmatprep.subr.bf16.mxu0 0
    %529 = vmatpush2.bf16.msra.mxu0 0
    %530 = vmatprep.subr.bf16.mxu0 0
    %531 = vmatpush2.bf16.msra.mxu0 0
    %532 = vmatprep.subr.bf16.mxu0 0
    %533 = vmatpush2.bf16.msra.mxu0 0
    %534 = vmatprep.subr.bf16.mxu0 0
    %535 = vmatpush2.bf16.msra.mxu0 0
    %536 = vmatprep.mubr.bf16.mxu0 0
    %537 = vmatmul.mubr.bf16.gmra.mxu0 %v502
    %v538 = vpop.f32.mrf.mxu0
    %v539 = vadd.f32 0.0, %v538
    %v540 = vpop.f32.mrf.mxu0
    %v541 = vpop.f32.mrf.mxu0
    %v542 = vpop.f32.mrf.mxu0
    %543 = vdwg.mxu0
    %v544 = vadd.f32 %v497, %v539
    %v545 = vxor.u32 %v544, 2147483648
    %v546 = vmul.f32 %v545, 1.442695
    %v547 = vpow.pop %v546
    %v548 = vadd.f32 %v547, 1.0
    %v549 = vrcp.pop %v548
    %v550 = vmul.f32 1.0, %v549
    %v551 = vmul.f32 %v550, 2.0
    %v552 = vsub.f32 %v551, 1.0
    %v553 = vmul.f32 %v550, %v488
    %555 = vrot.lane.b32.xlu0 %v552, 64
    %v556 = vpop.permute.xlu0 %555
    %v558 = vmul.f32 %v550, %v556
    %560 = vrot.lane.b32.xlu0 %v558, 32
    %v561 = vpop.permute.xlu0 %560
    %v563 = vadd.f32 %v553, %v561
    %v564 = vtanh.pop %v563
    %566 = vrot.lane.b32.xlu0 %v564, 64
    %v567 = vpop.permute.xlu0 %566
    %v569 = vmul.f32 %v550, %v567
    %v570 = vpack.c.bf16 %v569, %v569
    %s571 = scalar_lea.vmem [#allocation2], 24
    %v572 = vld [vmem:[%s571] sm:$0xff]
    %574 = vrot.lane.b32.xlu0 %v570, 32
    %v575 = vpop.permute.xlu0 %574
    %v577 = vsel %vm350, %v575, 0
    %579 = vmatprep.subr.bf16.mxu0 0
    %580 = vmatpush1.bf16.msra.mxu0 0
    %581 = vmatprep.subr.bf16.mxu0 0
    %582 = vmatpush1.bf16.msra.mxu0 0
    %583 = vmatprep.subr.bf16.mxu0 0
    %584 = vmatpush1.bf16.msra.mxu0 0
    %585 = vmatprep.subr.bf16.mxu0 0
    %586 = vmatpush1.bf16.msra.mxu0 0
    %587 = vmatprep.subr.bf16.mxu0 0
    %588 = vmatpush1.bf16.msra.mxu0 0
    %589 = vmatprep.subr.bf16.mxu0 0
    %590 = vmatpush1.bf16.msra.mxu0 0
    %591 = vmatprep.subr.bf16.mxu0 0
    %592 = vmatpush1.bf16.msra.mxu0 %v347
    %593 = vmatprep.subr.bf16.mxu0 0
    %594 = vmatpush1.bf16.msra.mxu0 %v346
    %595 = vmatprep.subr.bf16.mxu0 0
    %596 = vmatpush2.bf16.msra.mxu0 0
    %597 = vmatprep.subr.bf16.mxu0 0
    %598 = vmatpush2.bf16.msra.mxu0 0
    %599 = vmatprep.subr.bf16.mxu0 0
    %600 = vmatpush2.bf16.msra.mxu0 0
    %601 = vmatprep.subr.bf16.mxu0 0
    %602 = vmatpush2.bf16.msra.mxu0 0
    %603 = vmatprep.subr.bf16.mxu0 0
    %604 = vmatpush2.bf16.msra.mxu0 0
    %605 = vmatprep.subr.bf16.mxu0 0
    %606 = vmatpush2.bf16.msra.mxu0 0
    %607 = vmatprep.subr.bf16.mxu0 0
    %608 = vmatpush2.bf16.msra.mxu0 0
    %609 = vmatprep.subr.bf16.mxu0 0
    %610 = vmatpush2.bf16.msra.mxu0 0
    %611 = vmatprep.mubr.bf16.mxu0 0
    %612 = vmatmul.mubr.bf16.gmra.mxu0 %v577
    %v613 = vpop.f32.mrf.mxu0
    %v614 = vadd.f32 0.0, %v613
    %v615 = vpop.f32.mrf.mxu0
    %v616 = vpop.f32.mrf.mxu0
    %v617 = vpop.f32.mrf.mxu0
    %618 = vdwg.mxu0
    %v619 = vadd.f32 %v572, %v614
    %v620 = vxor.u32 %v619, 2147483648
    %v621 = vmul.f32 %v620, 1.442695
    %v622 = vpow.pop %v621
    %v623 = vadd.f32 %v622, 1.0
    %v624 = vrcp.pop %v623
    %v625 = vmul.f32 1.0, %v624
    %v626 = vmul.f32 %v625, 2.0
    %v627 = vsub.f32 %v626, 1.0
    %v628 = vmul.f32 %v625, %v563
    %630 = vrot.lane.b32.xlu0 %v627, 64
    %v631 = vpop.permute.xlu0 %630
    %v633 = vmul.f32 %v625, %v631
    %635 = vrot.lane.b32.xlu0 %v633, 32
    %v636 = vpop.permute.xlu0 %635
    %v638 = vadd.f32 %v628, %v636
    %v639 = vtanh.pop %v638
    %641 = vrot.lane.b32.xlu0 %v639, 64
    %v642 = vpop.permute.xlu0 %641
    %v644 = vmul.f32 %v625, %v642
    %v645 = vpack.c.bf16 %v644, %v644
    %s646 = scalar_lea.vmem [#allocation2], 32
    %v647 = vld [vmem:[%s646] sm:$0xff]
    %649 = vrot.lane.b32.xlu0 %v645, 32
    %v650 = vpop.permute.xlu0 %649
    %v652 = vsel %vm350, %v650, 0
    %654 = vmatprep.subr.bf16.mxu0 0
    %655 = vmatpush1.bf16.msra.mxu0 0
    %656 = vmatprep.subr.bf16.mxu0 0
    %657 = vmatpush1.bf16.msra.mxu0 0
    %658 = vmatprep.subr.bf16.mxu0 0
    %659 = vmatpush1.bf16.msra.mxu0 0
    %660 = vmatprep.subr.bf16.mxu0 0
    %661 = vmatpush1.bf16.msra.mxu0 0
    %662 = vmatprep.subr.bf16.mxu0 0
    %663 = vmatpush1.bf16.msra.mxu0 0
    %664 = vmatprep.subr.bf16.mxu0 0
    %665 = vmatpush1.bf16.msra.mxu0 0
    %666 = vmatprep.subr.bf16.mxu0 0
    %667 = vmatpush1.bf16.msra.mxu0 %v347
    %668 = vmatprep.subr.bf16.mxu0 0
    %669 = vmatpush1.bf16.msra.mxu0 %v346
    %670 = vmatprep.subr.bf16.mxu0 0
    %671 = vmatpush2.bf16.msra.mxu0 0
    %672 = vmatprep.subr.bf16.mxu0 0
    %673 = vmatpush2.bf16.msra.mxu0 0
    %674 = vmatprep.subr.bf16.mxu0 0
    %675 = vmatpush2.bf16.msra.mxu0 0
    %676 = vmatprep.subr.bf16.mxu0 0
    %677 = vmatpush2.bf16.msra.mxu0 0
    %678 = vmatprep.subr.bf16.mxu0 0
    %679 = vmatpush2.bf16.msra.mxu0 0
    %680 = vmatprep.subr.bf16.mxu0 0
    %681 = vmatpush2.bf16.msra.mxu0 0
    %682 = vmatprep.subr.bf16.mxu0 0
    %683 = vmatpush2.bf16.msra.mxu0 0
    %684 = vmatprep.subr.bf16.mxu0 0
    %685 = vmatpush2.bf16.msra.mxu0 0
    %686 = vmatprep.mubr.bf16.mxu0 0
    %687 = vmatmul.mubr.bf16.gmra.mxu0 %v652
    %v688 = vpop.f32.mrf.mxu0
    %v689 = vadd.f32 0.0, %v688
    %v690 = vpop.f32.mrf.mxu0
    %v691 = vpop.f32.mrf.mxu0
    %v692 = vpop.f32.mrf.mxu0
    %693 = vdwg.mxu0
    %v694 = vadd.f32 %v647, %v689
    %v695 = vxor.u32 %v694, 2147483648
    %v696 = vmul.f32 %v695, 1.442695
    %v697 = vpow.pop %v696
    %v698 = vadd.f32 %v697, 1.0
    %v699 = vrcp.pop %v698
    %v700 = vmul.f32 1.0, %v699
    %v701 = vmul.f32 %v700, 2.0
    %v702 = vsub.f32 %v701, 1.0
    %v703 = vmul.f32 %v700, %v638
    %705 = vrot.lane.b32.xlu0 %v702, 64
    %v706 = vpop.permute.xlu0 %705
    %v708 = vmul.f32 %v700, %v706
    %710 = vrot.lane.b32.xlu0 %v708, 32
    %v711 = vpop.permute.xlu0 %710
    %v713 = vadd.f32 %v703, %v711
    %v714 = vtanh.pop %v713
    %716 = vrot.lane.b32.xlu0 %v714, 64
    %v717 = vpop.permute.xlu0 %716
    %v719 = vmul.f32 %v700, %v717
    %v720 = vpack.c.bf16 %v719, %v719
    %s721 = scalar_lea.vmem [#allocation2], 40
    %v722 = vld [vmem:[%s721] sm:$0xff]
    %724 = vrot.lane.b32.xlu0 %v720, 32
    %v725 = vpop.permute.xlu0 %724
    %v727 = vsel %vm350, %v725, 0
    %729 = vmatprep.subr.bf16.mxu0 0
    %730 = vmatpush1.bf16.msra.mxu0 0
    %731 = vmatprep.subr.bf16.mxu0 0
    %732 = vmatpush1.bf16.msra.mxu0 0
    %733 = vmatprep.subr.bf16.mxu0 0
    %734 = vmatpush1.bf16.msra.mxu0 0
    %735 = vmatprep.subr.bf16.mxu0 0
    %736 = vmatpush1.bf16.msra.mxu0 0
    %737 = vmatprep.subr.bf16.mxu0 0
    %738 = vmatpush1.bf16.msra.mxu0 0
    %739 = vmatprep.subr.bf16.mxu0 0
    %740 = vmatpush1.bf16.msra.mxu0 0
    %741 = vmatprep.subr.bf16.mxu0 0
    %742 = vmatpush1.bf16.msra.mxu0 %v347
    %743 = vmatprep.subr.bf16.mxu0 0
    %744 = vmatpush1.bf16.msra.mxu0 %v346
    %745 = vmatprep.subr.bf16.mxu0 0
    %746 = vmatpush2.bf16.msra.mxu0 0
    %747 = vmatprep.subr.bf16.mxu0 0
    %748 = vmatpush2.bf16.msra.mxu0 0
    %749 = vmatprep.subr.bf16.mxu0 0
    %750 = vmatpush2.bf16.msra.mxu0 0
    %751 = vmatprep.subr.bf16.mxu0 0
    %752 = vmatpush2.bf16.msra.mxu0 0
    %753 = vmatprep.subr.bf16.mxu0 0
    %754 = vmatpush2.bf16.msra.mxu0 0
    %755 = vmatprep.subr.bf16.mxu0 0
    %756 = vmatpush2.bf16.msra.mxu0 0
    %757 = vmatprep.subr.bf16.mxu0 0
    %758 = vmatpush2.bf16.msra.mxu0 0
    %759 = vmatprep.subr.bf16.mxu0 0
    %760 = vmatpush2.bf16.msra.mxu0 0
    %761 = vmatprep.mubr.bf16.mxu0 0
    %762 = vmatmul.mubr.bf16.gmra.mxu0 %v727
    %v763 = vpop.f32.mrf.mxu0
    %v764 = vadd.f32 0.0, %v763
    %v765 = vpop.f32.mrf.mxu0
    %v766 = vpop.f32.mrf.mxu0
    %v767 = vpop.f32.mrf.mxu0
    %768 = vdwg.mxu0
    %v769 = vadd.f32 %v722, %v764
    %v770 = vxor.u32 %v769, 2147483648
    %v771 = vmul.f32 %v770, 1.442695
    %v772 = vpow.pop %v771
    %v773 = vadd.f32 %v772, 1.0
    %v774 = vrcp.pop %v773
    %v775 = vmul.f32 1.0, %v774
    %v776 = vmul.f32 %v775, 2.0
    %v777 = vsub.f32 %v776, 1.0
    %v778 = vmul.f32 %v775, %v713
    %780 = vrot.lane.b32.xlu0 %v777, 64
    %v781 = vpop.permute.xlu0 %780
    %v783 = vmul.f32 %v775, %v781
    %785 = vrot.lane.b32.xlu0 %v783, 32
    %v786 = vpop.permute.xlu0 %785
    %v788 = vadd.f32 %v778, %v786
    %v789 = vtanh.pop %v788
    %791 = vrot.lane.b32.xlu0 %v789, 64
    %v792 = vpop.permute.xlu0 %791
    %v794 = vmul.f32 %v775, %v792
    %v795 = vpack.c.bf16 %v794, %v794
    %s796 = scalar_lea.vmem [#allocation2], 48
    %v797 = vld [vmem:[%s796] sm:$0xff]
    %799 = vrot.lane.b32.xlu0 %v795, 32
    %v800 = vpop.permute.xlu0 %799
    %v802 = vsel %vm350, %v800, 0
    %804 = vmatprep.subr.bf16.mxu0 0
    %805 = vmatpush1.bf16.msra.mxu0 0
    %806 = vmatprep.subr.bf16.mxu0 0
    %807 = vmatpush1.bf16.msra.mxu0 0
    %808 = vmatprep.subr.bf16.mxu0 0
    %809 = vmatpush1.bf16.msra.mxu0 0
    %810 = vmatprep.subr.bf16.mxu0 0
    %811 = vmatpush1.bf16.msra.mxu0 0
    %812 = vmatprep.subr.bf16.mxu0 0
    %813 = vmatpush1.bf16.msra.mxu0 0
    %814 = vmatprep.subr.bf16.mxu0 0
    %815 = vmatpush1.bf16.msra.mxu0 0
    %816 = vmatprep.subr.bf16.mxu0 0
    %817 = vmatpush1.bf16.msra.mxu0 %v347
    %818 = vmatprep.subr.bf16.mxu0 0
    %819 = vmatpush1.bf16.msra.mxu0 %v346
    %820 = vmatprep.subr.bf16.mxu0 0
    %821 = vmatpush2.bf16.msra.mxu0 0
    %822 = vmatprep.subr.bf16.mxu0 0
    %823 = vmatpush2.bf16.msra.mxu0 0
    %824 = vmatprep.subr.bf16.mxu0 0
    %825 = vmatpush2.bf16.msra.mxu0 0
    %826 = vmatprep.subr.bf16.mxu0 0
    %827 = vmatpush2.bf16.msra.mxu0 0
    %828 = vmatprep.subr.bf16.mxu0 0
    %829 = vmatpush2.bf16.msra.mxu0 0
    %830 = vmatprep.subr.bf16.mxu0 0
    %831 = vmatpush2.bf16.msra.mxu0 0
    %832 = vmatprep.subr.bf16.mxu0 0
    %833 = vmatpush2.bf16.msra.mxu0 0
    %834 = vmatprep.subr.bf16.mxu0 0
    %835 = vmatpush2.bf16.msra.mxu0 0
    %836 = vmatprep.mubr.bf16.mxu0 0
    %837 = vmatmul.mubr.bf16.gmra.mxu0 %v802
    %v838 = vpop.f32.mrf.mxu0
    %v839 = vadd.f32 0.0, %v838
    %v840 = vpop.f32.mrf.mxu0
    %v841 = vpop.f32.mrf.mxu0
    %v842 = vpop.f32.mrf.mxu0
    %843 = vdwg.mxu0
    %v844 = vadd.f32 %v797, %v839
    %v845 = vxor.u32 %v844, 2147483648
    %v846 = vmul.f32 %v845, 1.442695
    %v847 = vpow.pop %v846
    %v848 = vadd.f32 %v847, 1.0
    %v849 = vrcp.pop %v848
    %v850 = vmul.f32 1.0, %v849
    %v851 = vmul.f32 %v850, 2.0
    %v852 = vsub.f32 %v851, 1.0
    %v853 = vmul.f32 %v850, %v788
    %855 = vrot.lane.b32.xlu0 %v852, 64
    %v856 = vpop.permute.xlu0 %855
    %v858 = vmul.f32 %v850, %v856
    %860 = vrot.lane.b32.xlu0 %v858, 32
    %v861 = vpop.permute.xlu0 %860
    %v863 = vadd.f32 %v853, %v861
    %v864 = vtanh.pop %v863
    %866 = vrot.lane.b32.xlu0 %v864, 64
    %v867 = vpop.permute.xlu0 %866
    %v869 = vmul.f32 %v850, %v867
    %v870 = vpack.c.bf16 %v869, %v869
    %s871 = scalar_lea.vmem [#allocation2], 56
    %v872 = vld [vmem:[%s871] sm:$0xff]
    %874 = vrot.lane.b32.xlu0 %v870, 32
    %v875 = vpop.permute.xlu0 %874
    %v877 = vsel %vm350, %v875, 0
    %879 = vmatprep.subr.bf16.mxu0 0
    %880 = vmatpush1.bf16.msra.mxu0 0
    %881 = vmatprep.subr.bf16.mxu0 0
    %882 = vmatpush1.bf16.msra.mxu0 0
    %883 = vmatprep.subr.bf16.mxu0 0
    %884 = vmatpush1.bf16.msra.mxu0 0
    %885 = vmatprep.subr.bf16.mxu0 0
    %886 = vmatpush1.bf16.msra.mxu0 0
    %887 = vmatprep.subr.bf16.mxu0 0
    %888 = vmatpush1.bf16.msra.mxu0 0
    %889 = vmatprep.subr.bf16.mxu0 0
    %890 = vmatpush1.bf16.msra.mxu0 0
    %891 = vmatprep.subr.bf16.mxu0 0
    %892 = vmatpush1.bf16.msra.mxu0 %v347
    %893 = vmatprep.subr.bf16.mxu0 0
    %894 = vmatpush1.bf16.msra.mxu0 %v346
    %895 = vmatprep.subr.bf16.mxu0 0
    %896 = vmatpush2.bf16.msra.mxu0 0
    %897 = vmatprep.subr.bf16.mxu0 0
    %898 = vmatpush2.bf16.msra.mxu0 0
    %899 = vmatprep.subr.bf16.mxu0 0
    %900 = vmatpush2.bf16.msra.mxu0 0
    %901 = vmatprep.subr.bf16.mxu0 0
    %902 = vmatpush2.bf16.msra.mxu0 0
    %903 = vmatprep.subr.bf16.mxu0 0
    %904 = vmatpush2.bf16.msra.mxu0 0
    %905 = vmatprep.subr.bf16.mxu0 0
    %906 = vmatpush2.bf16.msra.mxu0 0
    %907 = vmatprep.subr.bf16.mxu0 0
    %908 = vmatpush2.bf16.msra.mxu0 0
    %909 = vmatprep.subr.bf16.mxu0 0
    %910 = vmatpush2.bf16.msra.mxu0 0
    %911 = vmatprep.mubr.bf16.mxu0 0
    %912 = vmatmul.mubr.bf16.gmra.mxu0 %v877
    %v913 = vpop.f32.mrf.mxu0
    %v914 = vadd.f32 0.0, %v913
    %v915 = vpop.f32.mrf.mxu0
    %v916 = vpop.f32.mrf.mxu0
    %v917 = vpop.f32.mrf.mxu0
    %918 = vdwg.mxu0
    %v919 = vadd.f32 %v872, %v914
    %v920 = vxor.u32 %v919, 2147483648
    %v921 = vmul.f32 %v920, 1.442695
    %v922 = vpow.pop %v921
    %v923 = vadd.f32 %v922, 1.0
    %v924 = vrcp.pop %v923
    %v925 = vmul.f32 1.0, %v924
    %v926 = vmul.f32 %v925, 2.0
    %v927 = vsub.f32 %v926, 1.0
    %v928 = vmul.f32 %v925, %v863
    %930 = vrot.lane.b32.xlu0 %v927, 64
    %v931 = vpop.permute.xlu0 %930
    %v933 = vmul.f32 %v925, %v931
    %935 = vrot.lane.b32.xlu0 %v933, 32
    %v936 = vpop.permute.xlu0 %935
    %v938 = vadd.f32 %v928, %v936
    %v939 = vtanh.pop %v938
    %941 = vrot.lane.b32.xlu0 %v939, 64
    %v942 = vpop.permute.xlu0 %941
    %v944 = vmul.f32 %v925, %v942
    %v945 = vpack.c.bf16 %v944, %v944
    %s946 = scalar_lea.vmem [#allocation2], 64
    %v947 = vld [vmem:[%s946] sm:$0xff]
    %949 = vrot.lane.b32.xlu0 %v945, 32
    %v950 = vpop.permute.xlu0 %949
    %v952 = vsel %vm350, %v950, 0
    %954 = vmatprep.subr.bf16.mxu0 0
    %955 = vmatpush1.bf16.msra.mxu0 0
    %956 = vmatprep.subr.bf16.mxu0 0
    %957 = vmatpush1.bf16.msra.mxu0 0
    %958 = vmatprep.subr.bf16.mxu0 0
    %959 = vmatpush1.bf16.msra.mxu0 0
    %960 = vmatprep.subr.bf16.mxu0 0
    %961 = vmatpush1.bf16.msra.mxu0 0
    %962 = vmatprep.subr.bf16.mxu0 0
    %963 = vmatpush1.bf16.msra.mxu0 0
    %964 = vmatprep.subr.bf16.mxu0 0
    %965 = vmatpush1.bf16.msra.mxu0 0
    %966 = vmatprep.subr.bf16.mxu0 0
    %967 = vmatpush1.bf16.msra.mxu0 %v347
    %968 = vmatprep.subr.bf16.mxu0 0
    %969 = vmatpush1.bf16.msra.mxu0 %v346
    %970 = vmatprep.subr.bf16.mxu0 0
    %971 = vmatpush2.bf16.msra.mxu0 0
    %972 = vmatprep.subr.bf16.mxu0 0
    %973 = vmatpush2.bf16.msra.mxu0 0
    %974 = vmatprep.subr.bf16.mxu0 0
    %975 = vmatpush2.bf16.msra.mxu0 0
    %976 = vmatprep.subr.bf16.mxu0 0
    %977 = vmatpush2.bf16.msra.mxu0 0
    %978 = vmatprep.subr.bf16.mxu0 0
    %979 = vmatpush2.bf16.msra.mxu0 0
    %980 = vmatprep.subr.bf16.mxu0 0
    %981 = vmatpush2.bf16.msra.mxu0 0
    %982 = vmatprep.subr.bf16.mxu0 0
    %983 = vmatpush2.bf16.msra.mxu0 0
    %984 = vmatprep.subr.bf16.mxu0 0
    %985 = vmatpush2.bf16.msra.mxu0 0
    %986 = vmatprep.mubr.bf16.mxu0 0
    %987 = vmatmul.mubr.bf16.gmra.mxu0 %v952
    %v988 = vpop.f32.mrf.mxu0
    %v989 = vadd.f32 0.0, %v988
    %v990 = vpop.f32.mrf.mxu0
    %v991 = vpop.f32.mrf.mxu0
    %v992 = vpop.f32.mrf.mxu0
    %993 = vdwg.mxu0
    %v994 = vadd.f32 %v947, %v989
    %v995 = vxor.u32 %v994, 2147483648
    %v996 = vmul.f32 %v995, 1.442695
    %v997 = vpow.pop %v996
    %v998 = vadd.f32 %v997, 1.0
    %v999 = vrcp.pop %v998
    %v1000 = vmul.f32 1.0, %v999
    %v1001 = vmul.f32 %v1000, 2.0
    %v1002 = vsub.f32 %v1001, 1.0
    %v1003 = vmul.f32 %v1000, %v938
    %1005 = vrot.lane.b32.xlu0 %v1002, 64
    %v1006 = vpop.permute.xlu0 %1005
    %v1008 = vmul.f32 %v1000, %v1006
    %1010 = vrot.lane.b32.xlu0 %v1008, 32
    %v1011 = vpop.permute.xlu0 %1010
    %v1013 = vadd.f32 %v1003, %v1011
    %v1014 = vtanh.pop %v1013
    %1016 = vrot.lane.b32.xlu0 %v1014, 64
    %v1017 = vpop.permute.xlu0 %1016
    %v1019 = vmul.f32 %v1000, %v1017
    %v1020 = vpack.c.bf16 %v1019, %v1019
    %s1021 = scalar_lea.vmem [#allocation2], 72
    %v1022 = vld [vmem:[%s1021] sm:$0xff]
    %1024 = vrot.lane.b32.xlu0 %v1020, 32
    %v1025 = vpop.permute.xlu0 %1024
    %v1027 = vsel %vm350, %v1025, 0
    %1029 = vmatprep.subr.bf16.mxu0 0
    %1030 = vmatpush1.bf16.msra.mxu0 0
    %1031 = vmatprep.subr.bf16.mxu0 0
    %1032 = vmatpush1.bf16.msra.mxu0 0
    %1033 = vmatprep.subr.bf16.mxu0 0
    %1034 = vmatpush1.bf16.msra.mxu0 0
    %1035 = vmatprep.subr.bf16.mxu0 0
    %1036 = vmatpush1.bf16.msra.mxu0 0
    %1037 = vmatprep.subr.bf16.mxu0 0
    %1038 = vmatpush1.bf16.msra.mxu0 0
    %1039 = vmatprep.subr.bf16.mxu0 0
    %1040 = vmatpush1.bf16.msra.mxu0 0
    %1041 = vmatprep.subr.bf16.mxu0 0
    %1042 = vmatpush1.bf16.msra.mxu0 %v347
    %1043 = vmatprep.subr.bf16.mxu0 0
    %1044 = vmatpush1.bf16.msra.mxu0 %v346
    %1045 = vmatprep.subr.bf16.mxu0 0
    %1046 = vmatpush2.bf16.msra.mxu0 0
    %1047 = vmatprep.subr.bf16.mxu0 0
    %1048 = vmatpush2.bf16.msra.mxu0 0
    %1049 = vmatprep.subr.bf16.mxu0 0
    %1050 = vmatpush2.bf16.msra.mxu0 0
    %1051 = vmatprep.subr.bf16.mxu0 0
    %1052 = vmatpush2.bf16.msra.mxu0 0
    %1053 = vmatprep.subr.bf16.mxu0 0
    %1054 = vmatpush2.bf16.msra.mxu0 0
    %1055 = vmatprep.subr.bf16.mxu0 0
    %1056 = vmatpush2.bf16.msra.mxu0 0
    %1057 = vmatprep.subr.bf16.mxu0 0
    %1058 = vmatpush2.bf16.msra.mxu0 0
    %1059 = vmatprep.subr.bf16.mxu0 0
    %1060 = vmatpush2.bf16.msra.mxu0 0
    %1061 = vmatprep.mubr.bf16.mxu0 0
    %1062 = vmatmul.mubr.bf16.gmra.mxu0 %v1027
    %v1063 = vpop.f32.mrf.mxu0
    %v1064 = vadd.f32 0.0, %v1063
    %v1065 = vpop.f32.mrf.mxu0
    %v1066 = vpop.f32.mrf.mxu0
    %v1067 = vpop.f32.mrf.mxu0
    %1068 = vdwg.mxu0
    %v1069 = vadd.f32 %v1022, %v1064
    %v1070 = vxor.u32 %v1069, 2147483648
    %v1071 = vmul.f32 %v1070, 1.442695
    %v1072 = vpow.pop %v1071
    %v1073 = vadd.f32 %v1072, 1.0
    %v1074 = vrcp.pop %v1073
    %v1075 = vmul.f32 1.0, %v1074
    %v1076 = vmul.f32 %v1075, 2.0
    %v1077 = vsub.f32 %v1076, 1.0
    %v1078 = vmul.f32 %v1075, %v1013
    %1080 = vrot.lane.b32.xlu0 %v1077, 64
    %v1081 = vpop.permute.xlu0 %1080
    %v1083 = vmul.f32 %v1075, %v1081
    %1085 = vrot.lane.b32.xlu0 %v1083, 32
    %v1086 = vpop.permute.xlu0 %1085
    %v1088 = vadd.f32 %v1078, %v1086
    %v1089 = vtanh.pop %v1088
    %1091 = vrot.lane.b32.xlu0 %v1089, 64
    %v1092 = vpop.permute.xlu0 %1091
    %v1094 = vmul.f32 %v1075, %v1092
    %v1095 = vpack.c.bf16 %v1094, %v1094
    %s1096 = scalar_lea.vmem [#allocation2], 80
    %v1097 = vld [vmem:[%s1096] sm:$0xff]
    %1099 = vrot.lane.b32.xlu0 %v1095, 32
    %v1100 = vpop.permute.xlu0 %1099
    %v1102 = vsel %vm350, %v1100, 0
    %1104 = vmatprep.subr.bf16.mxu0 0
    %1105 = vmatpush1.bf16.msra.mxu0 0
    %1106 = vmatprep.subr.bf16.mxu0 0
    %1107 = vmatpush1.bf16.msra.mxu0 0
    %1108 = vmatprep.subr.bf16.mxu0 0
    %1109 = vmatpush1.bf16.msra.mxu0 0
    %1110 = vmatprep.subr.bf16.mxu0 0
    %1111 = vmatpush1.bf16.msra.mxu0 0
    %1112 = vmatprep.subr.bf16.mxu0 0
    %1113 = vmatpush1.bf16.msra.mxu0 0
    %1114 = vmatprep.subr.bf16.mxu0 0
    %1115 = vmatpush1.bf16.msra.mxu0 0
    %1116 = vmatprep.subr.bf16.mxu0 0
    %1117 = vmatpush1.bf16.msra.mxu0 %v347
    %1118 = vmatprep.subr.bf16.mxu0 0
    %1119 = vmatpush1.bf16.msra.mxu0 %v346
    %1120 = vmatprep.subr.bf16.mxu0 0
    %1121 = vmatpush2.bf16.msra.mxu0 0
    %1122 = vmatprep.subr.bf16.mxu0 0
    %1123 = vmatpush2.bf16.msra.mxu0 0
    %1124 = vmatprep.subr.bf16.mxu0 0
    %1125 = vmatpush2.bf16.msra.mxu0 0
    %1126 = vmatprep.subr.bf16.mxu0 0
    %1127 = vmatpush2.bf16.msra.mxu0 0
    %1128 = vmatprep.subr.bf16.mxu0 0
    %1129 = vmatpush2.bf16.msra.mxu0 0
    %1130 = vmatprep.subr.bf16.mxu0 0
    %1131 = vmatpush2.bf16.msra.mxu0 0
    %1132 = vmatprep.subr.bf16.mxu0 0
    %1133 = vmatpush2.bf16.msra.mxu0 0
    %1134 = vmatprep.subr.bf16.mxu0 0
    %1135 = vmatpush2.bf16.msra.mxu0 0
    %1136 = vmatprep.mubr.bf16.mxu0 0
    %1137 = vmatmul.mubr.bf16.gmra.mxu0 %v1102
    %v1138 = vpop.f32.mrf.mxu0
    %v1139 = vadd.f32 0.0, %v1138
    %v1140 = vpop.f32.mrf.mxu0
    %v1141 = vpop.f32.mrf.mxu0
    %v1142 = vpop.f32.mrf.mxu0
    %1143 = vdwg.mxu0
    %v1144 = vadd.f32 %v1097, %v1139
    %v1145 = vxor.u32 %v1144, 2147483648
    %v1146 = vmul.f32 %v1145, 1.442695
    %v1147 = vpow.pop %v1146
    %v1148 = vadd.f32 %v1147, 1.0
    %v1149 = vrcp.pop %v1148
    %v1150 = vmul.f32 1.0, %v1149
    %v1151 = vmul.f32 %v1150, 2.0
    %v1152 = vsub.f32 %v1151, 1.0
    %v1153 = vmul.f32 %v1150, %v1088
    %1155 = vrot.lane.b32.xlu0 %v1152, 64
    %v1156 = vpop.permute.xlu0 %1155
    %v1158 = vmul.f32 %v1150, %v1156
    %1160 = vrot.lane.b32.xlu0 %v1158, 32
    %v1161 = vpop.permute.xlu0 %1160
    %v1163 = vadd.f32 %v1153, %v1161
    %v1164 = vtanh.pop %v1163
    %1166 = vrot.lane.b32.xlu0 %v1164, 64
    %v1167 = vpop.permute.xlu0 %1166
    %v1169 = vmul.f32 %v1150, %v1167
    %v1170 = vpack.c.bf16 %v1169, %v1169
    %s1171 = scalar_lea.vmem [#allocation2], 88
    %v1172 = vld [vmem:[%s1171] sm:$0xff]
    %1174 = vrot.lane.b32.xlu0 %v1170, 32
    %v1175 = vpop.permute.xlu0 %1174
    %v1177 = vsel %vm350, %v1175, 0
    %1179 = vmatprep.subr.bf16.mxu0 0
    %1180 = vmatpush1.bf16.msra.mxu0 0
    %1181 = vmatprep.subr.bf16.mxu0 0
    %1182 = vmatpush1.bf16.msra.mxu0 0
    %1183 = vmatprep.subr.bf16.mxu0 0
    %1184 = vmatpush1.bf16.msra.mxu0 0
    %1185 = vmatprep.subr.bf16.mxu0 0
    %1186 = vmatpush1.bf16.msra.mxu0 0
    %1187 = vmatprep.subr.bf16.mxu0 0
    %1188 = vmatpush1.bf16.msra.mxu0 0
    %1189 = vmatprep.subr.bf16.mxu0 0
    %1190 = vmatpush1.bf16.msra.mxu0 0
    %1191 = vmatprep.subr.bf16.mxu0 0
    %1192 = vmatpush1.bf16.msra.mxu0 %v347
    %1193 = vmatprep.subr.bf16.mxu0 0
    %1194 = vmatpush1.bf16.msra.mxu0 %v346
    %1195 = vmatprep.subr.bf16.mxu0 0
    %1196 = vmatpush2.bf16.msra.mxu0 0
    %1197 = vmatprep.subr.bf16.mxu0 0
    %1198 = vmatpush2.bf16.msra.mxu0 0
    %1199 = vmatprep.subr.bf16.mxu0 0
    %1200 = vmatpush2.bf16.msra.mxu0 0
    %1201 = vmatprep.subr.bf16.mxu0 0
    %1202 = vmatpush2.bf16.msra.mxu0 0
    %1203 = vmatprep.subr.bf16.mxu0 0
    %1204 = vmatpush2.bf16.msra.mxu0 0
    %1205 = vmatprep.subr.bf16.mxu0 0
    %1206 = vmatpush2.bf16.msra.mxu0 0
    %1207 = vmatprep.subr.bf16.mxu0 0
    %1208 = vmatpush2.bf16.msra.mxu0 0
    %1209 = vmatprep.subr.bf16.mxu0 0
    %1210 = vmatpush2.bf16.msra.mxu0 0
    %1211 = vmatprep.mubr.bf16.mxu0 0
    %1212 = vmatmul.mubr.bf16.gmra.mxu0 %v1177
    %v1213 = vpop.f32.mrf.mxu0
    %v1214 = vadd.f32 0.0, %v1213
    %v1215 = vpop.f32.mrf.mxu0
    %v1216 = vpop.f32.mrf.mxu0
    %v1217 = vpop.f32.mrf.mxu0
    %1218 = vdwg.mxu0
    %v1219 = vadd.f32 %v1172, %v1214
    %v1220 = vxor.u32 %v1219, 2147483648
    %v1221 = vmul.f32 %v1220, 1.442695
    %v1222 = vpow.pop %v1221
    %v1223 = vadd.f32 %v1222, 1.0
    %v1224 = vrcp.pop %v1223
    %v1225 = vmul.f32 1.0, %v1224
    %v1226 = vmul.f32 %v1225, 2.0
    %v1227 = vsub.f32 %v1226, 1.0
    %v1228 = vmul.f32 %v1225, %v1163
    %1230 = vrot.lane.b32.xlu0 %v1227, 64
    %v1231 = vpop.permute.xlu0 %1230
    %v1233 = vmul.f32 %v1225, %v1231
    %1235 = vrot.lane.b32.xlu0 %v1233, 32
    %v1236 = vpop.permute.xlu0 %1235
    %v1238 = vadd.f32 %v1228, %v1236
    %v1239 = vtanh.pop %v1238
    %1241 = vrot.lane.b32.xlu0 %v1239, 64
    %v1242 = vpop.permute.xlu0 %1241
    %v1244 = vmul.f32 %v1225, %v1242
    %v1245 = vpack.c.bf16 %v1244, %v1244
    %s1246 = scalar_lea.vmem [#allocation2], 96
    %v1247 = vld [vmem:[%s1246] sm:$0xff]
    %1249 = vrot.lane.b32.xlu0 %v1245, 32
    %v1250 = vpop.permute.xlu0 %1249
    %v1252 = vsel %vm350, %v1250, 0
    %1254 = vmatprep.subr.bf16.mxu0 0
    %1255 = vmatpush1.bf16.msra.mxu0 0
    %1256 = vmatprep.subr.bf16.mxu0 0
    %1257 = vmatpush1.bf16.msra.mxu0 0
    %1258 = vmatprep.subr.bf16.mxu0 0
    %1259 = vmatpush1.bf16.msra.mxu0 0
    %1260 = vmatprep.subr.bf16.mxu0 0
    %1261 = vmatpush1.bf16.msra.mxu0 0
    %1262 = vmatprep.subr.bf16.mxu0 0
    %1263 = vmatpush1.bf16.msra.mxu0 0
    %1264 = vmatprep.subr.bf16.mxu0 0
    %1265 = vmatpush1.bf16.msra.mxu0 0
    %1266 = vmatprep.subr.bf16.mxu0 0
    %1267 = vmatpush1.bf16.msra.mxu0 %v347
    %1268 = vmatprep.subr.bf16.mxu0 0
    %1269 = vmatpush1.bf16.msra.mxu0 %v346
    %1270 = vmatprep.subr.bf16.mxu0 0
    %1271 = vmatpush2.bf16.msra.mxu0 0
    %1272 = vmatprep.subr.bf16.mxu0 0
    %1273 = vmatpush2.bf16.msra.mxu0 0
    %1274 = vmatprep.subr.bf16.mxu0 0
    %1275 = vmatpush2.bf16.msra.mxu0 0
    %1276 = vmatprep.subr.bf16.mxu0 0
    %1277 = vmatpush2.bf16.msra.mxu0 0
    %1278 = vmatprep.subr.bf16.mxu0 0
    %1279 = vmatpush2.bf16.msra.mxu0 0
    %1280 = vmatprep.subr.bf16.mxu0 0
    %1281 = vmatpush2.bf16.msra.mxu0 0
    %1282 = vmatprep.subr.bf16.mxu0 0
    %1283 = vmatpush2.bf16.msra.mxu0 0
    %1284 = vmatprep.subr.bf16.mxu0 0
    %1285 = vmatpush2.bf16.msra.mxu0 0
    %1286 = vmatprep.mubr.bf16.mxu0 0
    %1287 = vmatmul.mubr.bf16.gmra.mxu0 %v1252
    %v1288 = vpop.f32.mrf.mxu0
    %v1289 = vadd.f32 0.0, %v1288
    %v1290 = vpop.f32.mrf.mxu0
    %v1291 = vpop.f32.mrf.mxu0
    %v1292 = vpop.f32.mrf.mxu0
    %1293 = vdwg.mxu0
    %v1294 = vadd.f32 %v1247, %v1289
    %v1295 = vxor.u32 %v1294, 2147483648
    %v1296 = vmul.f32 %v1295, 1.442695
    %v1297 = vpow.pop %v1296
    %v1298 = vadd.f32 %v1297, 1.0
    %v1299 = vrcp.pop %v1298
    %v1300 = vmul.f32 1.0, %v1299
    %v1301 = vmul.f32 %v1300, 2.0
    %v1302 = vsub.f32 %v1301, 1.0
    %v1303 = vmul.f32 %v1300, %v1238
    %1305 = vrot.lane.b32.xlu0 %v1302, 64
    %v1306 = vpop.permute.xlu0 %1305
    %v1308 = vmul.f32 %v1300, %v1306
    %1310 = vrot.lane.b32.xlu0 %v1308, 32
    %v1311 = vpop.permute.xlu0 %1310
    %v1313 = vadd.f32 %v1303, %v1311
    %v1314 = vtanh.pop %v1313
    %1316 = vrot.lane.b32.xlu0 %v1314, 64
    %v1317 = vpop.permute.xlu0 %1316
    %v1319 = vmul.f32 %v1300, %v1317
    %v1320 = vpack.c.bf16 %v1319, %v1319
    %s1321 = scalar_lea.vmem [#allocation2], 104
    %v1322 = vld [vmem:[%s1321] sm:$0xff]
    %1324 = vrot.lane.b32.xlu0 %v1320, 32
    %v1325 = vpop.permute.xlu0 %1324
    %v1327 = vsel %vm350, %v1325, 0
    %1329 = vmatprep.subr.bf16.mxu0 0
    %1330 = vmatpush1.bf16.msra.mxu0 0
    %1331 = vmatprep.subr.bf16.mxu0 0
    %1332 = vmatpush1.bf16.msra.mxu0 0
    %1333 = vmatprep.subr.bf16.mxu0 0
    %1334 = vmatpush1.bf16.msra.mxu0 0
    %1335 = vmatprep.subr.bf16.mxu0 0
    %1336 = vmatpush1.bf16.msra.mxu0 0
    %1337 = vmatprep.subr.bf16.mxu0 0
    %1338 = vmatpush1.bf16.msra.mxu0 0
    %1339 = vmatprep.subr.bf16.mxu0 0
    %1340 = vmatpush1.bf16.msra.mxu0 0
    %1341 = vmatprep.subr.bf16.mxu0 0
    %1342 = vmatpush1.bf16.msra.mxu0 %v347
    %1343 = vmatprep.subr.bf16.mxu0 0
    %1344 = vmatpush1.bf16.msra.mxu0 %v346
    %1345 = vmatprep.subr.bf16.mxu0 0
    %1346 = vmatpush2.bf16.msra.mxu0 0
    %1347 = vmatprep.subr.bf16.mxu0 0
    %1348 = vmatpush2.bf16.msra.mxu0 0
    %1349 = vmatprep.subr.bf16.mxu0 0
    %1350 = vmatpush2.bf16.msra.mxu0 0
    %1351 = vmatprep.subr.bf16.mxu0 0
    %1352 = vmatpush2.bf16.msra.mxu0 0
    %1353 = vmatprep.subr.bf16.mxu0 0
    %1354 = vmatpush2.bf16.msra.mxu0 0
    %1355 = vmatprep.subr.bf16.mxu0 0
    %1356 = vmatpush2.bf16.msra.mxu0 0
    %1357 = vmatprep.subr.bf16.mxu0 0
    %1358 = vmatpush2.bf16.msra.mxu0 0
    %1359 = vmatprep.subr.bf16.mxu0 0
    %1360 = vmatpush2.bf16.msra.mxu0 0
    %1361 = vmatprep.mubr.bf16.mxu0 0
    %1362 = vmatmul.mubr.bf16.gmra.mxu0 %v1327
    %v1363 = vpop.f32.mrf.mxu0
    %v1364 = vadd.f32 0.0, %v1363
    %v1365 = vpop.f32.mrf.mxu0
    %v1366 = vpop.f32.mrf.mxu0
    %v1367 = vpop.f32.mrf.mxu0
    %1368 = vdwg.mxu0
    %v1369 = vadd.f32 %v1322, %v1364
    %v1370 = vxor.u32 %v1369, 2147483648
    %v1371 = vmul.f32 %v1370, 1.442695
    %v1372 = vpow.pop %v1371
    %v1373 = vadd.f32 %v1372, 1.0
    %v1374 = vrcp.pop %v1373
    %v1375 = vmul.f32 1.0, %v1374
    %v1376 = vmul.f32 %v1375, 2.0
    %v1377 = vsub.f32 %v1376, 1.0
    %v1378 = vmul.f32 %v1375, %v1313
    %1380 = vrot.lane.b32.xlu0 %v1377, 64
    %v1381 = vpop.permute.xlu0 %1380
    %v1383 = vmul.f32 %v1375, %v1381
    %1385 = vrot.lane.b32.xlu0 %v1383, 32
    %v1386 = vpop.permute.xlu0 %1385
    %v1388 = vadd.f32 %v1378, %v1386
    %v1389 = vtanh.pop %v1388
    %1391 = vrot.lane.b32.xlu0 %v1389, 64
    %v1392 = vpop.permute.xlu0 %1391
    %v1394 = vmul.f32 %v1375, %v1392
    %v1395 = vpack.c.bf16 %v1394, %v1394
    %s1396 = scalar_lea.vmem [#allocation2], 112
    %v1397 = vld [vmem:[%s1396] sm:$0xff]
    %1399 = vrot.lane.b32.xlu0 %v1395, 32
    %v1400 = vpop.permute.xlu0 %1399
    %v1402 = vsel %vm350, %v1400, 0
    %1404 = vmatprep.subr.bf16.mxu0 0
    %1405 = vmatpush1.bf16.msra.mxu0 0
    %1406 = vmatprep.subr.bf16.mxu0 0
    %1407 = vmatpush1.bf16.msra.mxu0 0
    %1408 = vmatprep.subr.bf16.mxu0 0
    %1409 = vmatpush1.bf16.msra.mxu0 0
    %1410 = vmatprep.subr.bf16.mxu0 0
    %1411 = vmatpush1.bf16.msra.mxu0 0
    %1412 = vmatprep.subr.bf16.mxu0 0
    %1413 = vmatpush1.bf16.msra.mxu0 0
    %1414 = vmatprep.subr.bf16.mxu0 0
    %1415 = vmatpush1.bf16.msra.mxu0 0
    %1416 = vmatprep.subr.bf16.mxu0 0
    %1417 = vmatpush1.bf16.msra.mxu0 %v347
    %1418 = vmatprep.subr.bf16.mxu0 0
    %1419 = vmatpush1.bf16.msra.mxu0 %v346
    %1420 = vmatprep.subr.bf16.mxu0 0
    %1421 = vmatpush2.bf16.msra.mxu0 0
    %1422 = vmatprep.subr.bf16.mxu0 0
    %1423 = vmatpush2.bf16.msra.mxu0 0
    %1424 = vmatprep.subr.bf16.mxu0 0
    %1425 = vmatpush2.bf16.msra.mxu0 0
    %1426 = vmatprep.subr.bf16.mxu0 0
    %1427 = vmatpush2.bf16.msra.mxu0 0
    %1428 = vmatprep.subr.bf16.mxu0 0
    %1429 = vmatpush2.bf16.msra.mxu0 0
    %1430 = vmatprep.subr.bf16.mxu0 0
    %1431 = vmatpush2.bf16.msra.mxu0 0
    %1432 = vmatprep.subr.bf16.mxu0 0
    %1433 = vmatpush2.bf16.msra.mxu0 0
    %1434 = vmatprep.subr.bf16.mxu0 0
    %1435 = vmatpush2.bf16.msra.mxu0 0
    %1436 = vmatprep.mubr.bf16.mxu0 0
    %1437 = vmatmul.mubr.bf16.gmra.mxu0 %v1402
    %v1438 = vpop.f32.mrf.mxu0
    %v1439 = vadd.f32 0.0, %v1438
    %v1440 = vpop.f32.mrf.mxu0
    %v1441 = vpop.f32.mrf.mxu0
    %v1442 = vpop.f32.mrf.mxu0
    %1443 = vdwg.mxu0
    %v1444 = vadd.f32 %v1397, %v1439
    %v1445 = vxor.u32 %v1444, 2147483648
    %v1446 = vmul.f32 %v1445, 1.442695
    %v1447 = vpow.pop %v1446
    %v1448 = vadd.f32 %v1447, 1.0
    %v1449 = vrcp.pop %v1448
    %v1450 = vmul.f32 1.0, %v1449
    %v1451 = vmul.f32 %v1450, 2.0
    %v1452 = vsub.f32 %v1451, 1.0
    %v1453 = vmul.f32 %v1450, %v1388
    %1455 = vrot.lane.b32.xlu0 %v1452, 64
    %v1456 = vpop.permute.xlu0 %1455
    %v1458 = vmul.f32 %v1450, %v1456
    %1460 = vrot.lane.b32.xlu0 %v1458, 32
    %v1461 = vpop.permute.xlu0 %1460
    %v1463 = vadd.f32 %v1453, %v1461
    %v1464 = vtanh.pop %v1463
    %1466 = vrot.lane.b32.xlu0 %v1464, 64
    %v1467 = vpop.permute.xlu0 %1466
    %v1469 = vmul.f32 %v1450, %v1467
    %v1470 = vpack.c.bf16 %v1469, %v1469
    %s1471 = scalar_lea.vmem [#allocation2], 120
    %v1472 = vld [vmem:[%s1471] sm:$0xff]
    %1474 = vrot.lane.b32.xlu0 %v1470, 32
    %v1475 = vpop.permute.xlu0 %1474
    %v1477 = vsel %vm350, %v1475, 0
    %1479 = vmatprep.subr.bf16.mxu0 0
    %1480 = vmatpush1.bf16.msra.mxu0 0
    %1481 = vmatprep.subr.bf16.mxu0 0
    %1482 = vmatpush1.bf16.msra.mxu0 0
    %1483 = vmatprep.subr.bf16.mxu0 0
    %1484 = vmatpush1.bf16.msra.mxu0 0
    %1485 = vmatprep.subr.bf16.mxu0 0
    %1486 = vmatpush1.bf16.msra.mxu0 0
    %1487 = vmatprep.subr.bf16.mxu0 0
    %1488 = vmatpush1.bf16.msra.mxu0 0
    %1489 = vmatprep.subr.bf16.mxu0 0
    %1490 = vmatpush1.bf16.msra.mxu0 0
    %1491 = vmatprep.subr.bf16.mxu0 0
    %1492 = vmatpush1.bf16.msra.mxu0 %v347
    %1493 = vmatprep.subr.bf16.mxu0 0
    %1494 = vmatpush1.bf16.msra.mxu0 %v346
    %1495 = vmatprep.subr.bf16.mxu0 0
    %1496 = vmatpush2.bf16.msra.mxu0 0
    %1497 = vmatprep.subr.bf16.mxu0 0
    %1498 = vmatpush2.bf16.msra.mxu0 0
    %1499 = vmatprep.subr.bf16.mxu0 0
    %1500 = vmatpush2.bf16.msra.mxu0 0
    %1501 = vmatprep.subr.bf16.mxu0 0
    %1502 = vmatpush2.bf16.msra.mxu0 0
    %1503 = vmatprep.subr.bf16.mxu0 0
    %1504 = vmatpush2.bf16.msra.mxu0 0
    %1505 = vmatprep.subr.bf16.mxu0 0
    %1506 = vmatpush2.bf16.msra.mxu0 0
    %1507 = vmatprep.subr.bf16.mxu0 0
    %1508 = vmatpush2.bf16.msra.mxu0 0
    %1509 = vmatprep.subr.bf16.mxu0 0
    %1510 = vmatpush2.bf16.msra.mxu0 0
    %1511 = vmatprep.mubr.bf16.mxu0 0
    %1512 = vmatmul.mubr.bf16.gmra.mxu0 %v1477
    %v1513 = vpop.f32.mrf.mxu0
    %v1514 = vadd.f32 0.0, %v1513
    %v1515 = vpop.f32.mrf.mxu0
    %v1516 = vpop.f32.mrf.mxu0
    %v1517 = vpop.f32.mrf.mxu0
    %1518 = vdwg.mxu0
    %v1519 = vadd.f32 %v1472, %v1514
    %v1520 = vxor.u32 %v1519, 2147483648
    %v1521 = vmul.f32 %v1520, 1.442695
    %v1522 = vpow.pop %v1521
    %v1523 = vadd.f32 %v1522, 1.0
    %v1524 = vrcp.pop %v1523
    %v1525 = vmul.f32 1.0, %v1524
    %v1526 = vmul.f32 %v1525, 2.0
    %v1527 = vsub.f32 %v1526, 1.0
    %v1528 = vmul.f32 %v1525, %v1463
    %1530 = vrot.lane.b32.xlu0 %v1527, 64
    %v1531 = vpop.permute.xlu0 %1530
    %v1533 = vmul.f32 %v1525, %v1531
    %1535 = vrot.lane.b32.xlu0 %v1533, 32
    %v1536 = vpop.permute.xlu0 %1535
    %v1538 = vadd.f32 %v1528, %v1536
    %v1539 = vtanh.pop %v1538
    %1541 = vrot.lane.b32.xlu0 %v1539, 64
    %v1542 = vpop.permute.xlu0 %1541
    %v1544 = vmul.f32 %v1525, %v1542
    %v1545 = vpack.c.bf16 %v1544, %v1544
    %s1546 = scalar_lea.vmem [#allocation2], 128
    %v1547 = vld [vmem:[%s1546] sm:$0xff]
    %1549 = vrot.lane.b32.xlu0 %v1545, 32
    %v1550 = vpop.permute.xlu0 %1549
    %v1552 = vsel %vm350, %v1550, 0
    %1554 = vmatprep.subr.bf16.mxu0 0
    %1555 = vmatpush1.bf16.msra.mxu0 0
    %1556 = vmatprep.subr.bf16.mxu0 0
    %1557 = vmatpush1.bf16.msra.mxu0 0
    %1558 = vmatprep.subr.bf16.mxu0 0
    %1559 = vmatpush1.bf16.msra.mxu0 0
    %1560 = vmatprep.subr.bf16.mxu0 0
    %1561 = vmatpush1.bf16.msra.mxu0 0
    %1562 = vmatprep.subr.bf16.mxu0 0
    %1563 = vmatpush1.bf16.msra.mxu0 0
    %1564 = vmatprep.subr.bf16.mxu0 0
    %1565 = vmatpush1.bf16.msra.mxu0 0
    %1566 = vmatprep.subr.bf16.mxu0 0
    %1567 = vmatpush1.bf16.msra.mxu0 %v347
    %1568 = vmatprep.subr.bf16.mxu0 0
    %1569 = vmatpush1.bf16.msra.mxu0 %v346
    %1570 = vmatprep.subr.bf16.mxu0 0
    %1571 = vmatpush2.bf16.msra.mxu0 0
    %1572 = vmatprep.subr.bf16.mxu0 0
    %1573 = vmatpush2.bf16.msra.mxu0 0
    %1574 = vmatprep.subr.bf16.mxu0 0
    %1575 = vmatpush2.bf16.msra.mxu0 0
    %1576 = vmatprep.subr.bf16.mxu0 0
    %1577 = vmatpush2.bf16.msra.mxu0 0
    %1578 = vmatprep.subr.bf16.mxu0 0
    %1579 = vmatpush2.bf16.msra.mxu0 0
    %1580 = vmatprep.subr.bf16.mxu0 0
    %1581 = vmatpush2.bf16.msra.mxu0 0
    %1582 = vmatprep.subr.bf16.mxu0 0
    %1583 = vmatpush2.bf16.msra.mxu0 0
    %1584 = vmatprep.subr.bf16.mxu0 0
    %1585 = vmatpush2.bf16.msra.mxu0 0
    %1586 = vmatprep.mubr.bf16.mxu0 0
    %1587 = vmatmul.mubr.bf16.gmra.mxu0 %v1552
    %v1588 = vpop.f32.mrf.mxu0
    %v1589 = vadd.f32 0.0, %v1588
    %v1590 = vpop.f32.mrf.mxu0
    %v1591 = vpop.f32.mrf.mxu0
    %v1592 = vpop.f32.mrf.mxu0
    %1593 = vdwg.mxu0
    %v1594 = vadd.f32 %v1547, %v1589
    %v1595 = vxor.u32 %v1594, 2147483648
    %v1596 = vmul.f32 %v1595, 1.442695
    %v1597 = vpow.pop %v1596
    %v1598 = vadd.f32 %v1597, 1.0
    %v1599 = vrcp.pop %v1598
    %v1600 = vmul.f32 1.0, %v1599
    %v1601 = vmul.f32 %v1600, 2.0
    %v1602 = vsub.f32 %v1601, 1.0
    %v1603 = vmul.f32 %v1600, %v1538
    %1605 = vrot.lane.b32.xlu0 %v1602, 64
    %v1606 = vpop.permute.xlu0 %1605
    %v1608 = vmul.f32 %v1600, %v1606
    %1610 = vrot.lane.b32.xlu0 %v1608, 32
    %v1611 = vpop.permute.xlu0 %1610
    %v1613 = vadd.f32 %v1603, %v1611
    %v1614 = vtanh.pop %v1613
    %1616 = vrot.lane.b32.xlu0 %v1614, 64
    %v1617 = vpop.permute.xlu0 %1616
    %v1619 = vmul.f32 %v1600, %v1617
    %v1620 = vpack.c.bf16 %v1619, %v1619
    %v1621 = vld [vmem:[%s4] sm:$0xf]
    %v1622 = vld [vmem:[%s4 + $0x4] sm:$0xf]
    %v1623 = vld [vmem:[%s4 + $0x8] sm:$0xf]
    %v1624 = vld [vmem:[%s4 + $0xc] sm:$0xf]
    %s1625 = scalar_lea.vmem [#allocation2], 136
    %v1626 = vld [vmem:[%s1625] sm:$0xff]
    %1628 = vrot.lane.b32.xlu0 %v1620, 32
    %v1629 = vpop.permute.xlu0 %1628
    %v1631 = vsel %vm350, %v1629, 0
    %1633 = vmatprep.subr.bf16.mxu0 0
    %1634 = vmatpush1.bf16.msra.mxu0 0
    %1635 = vmatprep.subr.bf16.mxu0 0
    %1636 = vmatpush1.bf16.msra.mxu0 0
    %1637 = vmatprep.subr.bf16.mxu0 0
    %1638 = vmatpush1.bf16.msra.mxu0 0
    %1639 = vmatprep.subr.bf16.mxu0 0
    %1640 = vmatpush1.bf16.msra.mxu0 0
    %1641 = vmatprep.subr.bf16.mxu0 0
    %1642 = vmatpush1.bf16.msra.mxu0 0
    %1643 = vmatprep.subr.bf16.mxu0 0
    %1644 = vmatpush1.bf16.msra.mxu0 0
    %1645 = vmatprep.subr.bf16.mxu0 0
    %1646 = vmatpush1.bf16.msra.mxu0 %v347
    %1647 = vmatprep.subr.bf16.mxu0 0
    %1648 = vmatpush1.bf16.msra.mxu0 %v346
    %1649 = vmatprep.subr.bf16.mxu0 0
    %1650 = vmatpush2.bf16.msra.mxu0 0
    %1651 = vmatprep.subr.bf16.mxu0 0
    %1652 = vmatpush2.bf16.msra.mxu0 0
    %1653 = vmatprep.subr.bf16.mxu0 0
    %1654 = vmatpush2.bf16.msra.mxu0 0
    %1655 = vmatprep.subr.bf16.mxu0 0
    %1656 = vmatpush2.bf16.msra.mxu0 0
    %1657 = vmatprep.subr.bf16.mxu0 0
    %1658 = vmatpush2.bf16.msra.mxu0 0
    %1659 = vmatprep.subr.bf16.mxu0 0
    %1660 = vmatpush2.bf16.msra.mxu0 0
    %1661 = vmatprep.subr.bf16.mxu0 0
    %1662 = vmatpush2.bf16.msra.mxu0 0
    %1663 = vmatprep.subr.bf16.mxu0 0
    %1664 = vmatpush2.bf16.msra.mxu0 0
    %1665 = vmatprep.mubr.bf16.mxu0 0
    %1666 = vmatmul.mubr.bf16.gmra.mxu0 %v1631
    %v1667 = vpop.f32.mrf.mxu0
    %v1668 = vadd.f32 0.0, %v1667
    %v1669 = vpop.f32.mrf.mxu0
    %v1670 = vpop.f32.mrf.mxu0
    %v1671 = vpop.f32.mrf.mxu0
    %1672 = vdwg.mxu0
    %v1673 = vadd.f32 %v1626, %v1668
    %v1674 = vxor.u32 %v1673, 2147483648
    %v1675 = vmul.f32 %v1674, 1.442695
    %v1676 = vpow.pop %v1675
    %v1677 = vadd.f32 %v1676, 1.0
    %v1678 = vrcp.pop %v1677
    %v1679 = vmul.f32 1.0, %v1678
    %v1680 = vmul.f32 %v1679, 2.0
    %v1681 = vsub.f32 %v1680, 1.0
    %v1682 = vmul.f32 %v1679, %v1613
    %1684 = vrot.lane.b32.xlu0 %v1681, 64
    %v1685 = vpop.permute.xlu0 %1684
    %v1687 = vmul.f32 %v1679, %v1685
    %1689 = vrot.lane.b32.xlu0 %v1687, 32
    %v1690 = vpop.permute.xlu0 %1689
    %v1692 = vadd.f32 %v1682, %v1690
    %v1693 = vtanh.pop %v1692
    %1695 = vrot.lane.b32.xlu0 %v1693, 64
    %v1696 = vpop.permute.xlu0 %1695
    %v1698 = vmul.f32 %v1679, %v1696
    %v1699 = vpack.c.bf16 %v1698, %v1698
    %s1700 = scalar_lea.vmem %s4, 16
    %v1701 = vld [vmem:[%s1700] sm:$0xf]
    %v1702 = vld [vmem:[%s1700 + $0x4] sm:$0xf]
    %v1703 = vld [vmem:[%s1700 + $0x8] sm:$0xf]
    %v1704 = vld [vmem:[%s1700 + $0xc] sm:$0xf]
    %1706 = vrot.lane.b32.xlu0 %v1699, 32
    %v1707 = vpop.permute.xlu0 %1706
    %v1712 = vunpack.c.l.b16 %v1701
    %v1713 = vunpack.c.l.b16 %v1702
    %v1714 = vunpack.c.l.b16 %v1703
    %v1715 = vunpack.c.l.b16 %v1704
    %v1716 = vpack.c.b16 %v1713, %v1712
    %v1717 = vpack.c.b16 %v1715, %v1714
    %v1721 = vsel %vm350, %v1707, 0
    %1723 = vmatprep.subr.bf16.mxu0 0
    %1724 = vmatpush1.bf16.msra.mxu0 0
    %1725 = vmatprep.subr.bf16.mxu0 0
    %1726 = vmatpush1.bf16.msra.mxu0 0
    %1727 = vmatprep.subr.bf16.mxu0 0
    %1728 = vmatpush1.bf16.msra.mxu0 0
    %1729 = vmatprep.subr.bf16.mxu0 0
    %1730 = vmatpush1.bf16.msra.mxu0 0
    %1731 = vmatprep.subr.bf16.mxu0 0
    %1732 = vmatpush1.bf16.msra.mxu0 0
    %1733 = vmatprep.subr.bf16.mxu0 0
    %1734 = vmatpush1.bf16.msra.mxu0 0
    %1735 = vmatprep.subr.bf16.mxu0 0
    %1736 = vmatpush1.bf16.msra.mxu0 %v1717
    %1737 = vmatprep.subr.bf16.mxu0 0
    %1738 = vmatpush1.bf16.msra.mxu0 %v1716
    %1739 = vmatprep.subr.bf16.mxu0 0
    %1740 = vmatpush2.bf16.msra.mxu0 0
    %1741 = vmatprep.subr.bf16.mxu0 0
    %1742 = vmatpush2.bf16.msra.mxu0 0
    %1743 = vmatprep.subr.bf16.mxu0 0
    %1744 = vmatpush2.bf16.msra.mxu0 0
    %1745 = vmatprep.subr.bf16.mxu0 0
    %1746 = vmatpush2.bf16.msra.mxu0 0
    %1747 = vmatprep.subr.bf16.mxu0 0
    %1748 = vmatpush2.bf16.msra.mxu0 0
    %1749 = vmatprep.subr.bf16.mxu0 0
    %1750 = vmatpush2.bf16.msra.mxu0 0
    %1751 = vmatprep.subr.bf16.mxu0 0
    %1752 = vmatpush2.bf16.msra.mxu0 0
    %1753 = vmatprep.subr.bf16.mxu0 0
    %1754 = vmatpush2.bf16.msra.mxu0 0
    %1755 = vmatprep.mubr.bf16.mxu0 0
    %1756 = vmatmul.mubr.bf16.gmra.mxu0 %v1721
    %v1757 = vpop.f32.mrf.mxu0
    %v1758 = vadd.f32 0.0, %v1757
    %v1759 = vpop.f32.mrf.mxu0
    %v1760 = vpop.f32.mrf.mxu0
    %v1761 = vpop.f32.mrf.mxu0
    %1762 = vdwg.mxu0
    %v1767 = vunpack.c.l.b16 %v1621
    %v1768 = vunpack.c.l.b16 %v1622
    %v1769 = vunpack.c.l.b16 %v1623
    %v1770 = vunpack.c.l.b16 %v1624
    %v1771 = vpack.c.b16 %v1768, %v1767
    %v1772 = vpack.c.b16 %v1770, %v1769
    %1775 = vmatprep.subr.bf16.mxu0 0
    %1776 = vmatpush1.bf16.msra.mxu0 0
    %1777 = vmatprep.subr.bf16.mxu0 0
    %1778 = vmatpush1.bf16.msra.mxu0 0
    %1779 = vmatprep.subr.bf16.mxu0 0
    %1780 = vmatpush1.bf16.msra.mxu0 0
    %1781 = vmatprep.subr.bf16.mxu0 0
    %1782 = vmatpush1.bf16.msra.mxu0 0
    %1783 = vmatprep.subr.bf16.mxu0 0
    %1784 = vmatpush1.bf16.msra.mxu0 0
    %1785 = vmatprep.subr.bf16.mxu0 0
    %1786 = vmatpush1.bf16.msra.mxu0 0
    %1787 = vmatprep.subr.bf16.mxu0 0
    %1788 = vmatpush1.bf16.msra.mxu0 %v1772
    %1789 = vmatprep.subr.bf16.mxu0 0
    %1790 = vmatpush1.bf16.msra.mxu0 %v1771
    %1791 = vmatprep.subr.bf16.mxu0 0
    %1792 = vmatpush2.bf16.msra.mxu0 0
    %1793 = vmatprep.subr.bf16.mxu0 0
    %1794 = vmatpush2.bf16.msra.mxu0 0
    %1795 = vmatprep.subr.bf16.mxu0 0
    %1796 = vmatpush2.bf16.msra.mxu0 0
    %1797 = vmatprep.subr.bf16.mxu0 0
    %1798 = vmatpush2.bf16.msra.mxu0 0
    %1799 = vmatprep.subr.bf16.mxu0 0
    %1800 = vmatpush2.bf16.msra.mxu0 0
    %1801 = vmatprep.subr.bf16.mxu0 0
    %1802 = vmatpush2.bf16.msra.mxu0 0
    %1803 = vmatprep.subr.bf16.mxu0 0
    %1804 = vmatpush2.bf16.msra.mxu0 0
    %1805 = vmatprep.subr.bf16.mxu0 0
    %1806 = vmatpush2.bf16.msra.mxu0 0
    %1807 = vmatprep.mubr.bf16.mxu0 0
    %1808 = vmatmul.mubr.bf16.gmra.mxu0 %v1631
    %v1809 = vpop.f32.mrf.mxu0
    %v1810 = vadd.f32 %v1758, %v1809
    %v1811 = vpop.f32.mrf.mxu0
    %v1812 = vpop.f32.mrf.mxu0
    %v1813 = vpop.f32.mrf.mxu0
    %1814 = vdwg.mxu0
    %s1815 = scalar_lea.vmem [#allocation2], 144
    %v1816 = vld [vmem:[%s1815] sm:$0xff]
    %1817 = vmatprep.subr.bf16.mxu0 0
    %1818 = vmatpush1.bf16.msra.mxu0 0
    %1819 = vmatprep.subr.bf16.mxu0 0
    %1820 = vmatpush1.bf16.msra.mxu0 0
    %1821 = vmatprep.subr.bf16.mxu0 0
    %1822 = vmatpush1.bf16.msra.mxu0 0
    %1823 = vmatprep.subr.bf16.mxu0 0
    %1824 = vmatpush1.bf16.msra.mxu0 0
    %1825 = vmatprep.subr.bf16.mxu0 0
    %1826 = vmatpush1.bf16.msra.mxu0 0
    %1827 = vmatprep.subr.bf16.mxu0 0
    %1828 = vmatpush1.bf16.msra.mxu0 0
    %1829 = vmatprep.subr.bf16.mxu0 0
    %1830 = vmatpush1.bf16.msra.mxu0 %v347
    %1831 = vmatprep.subr.bf16.mxu0 0
    %1832 = vmatpush1.bf16.msra.mxu0 %v346
    %1833 = vmatprep.subr.bf16.mxu0 0
    %1834 = vmatpush2.bf16.msra.mxu0 0
    %1835 = vmatprep.subr.bf16.mxu0 0
    %1836 = vmatpush2.bf16.msra.mxu0 0
    %1837 = vmatprep.subr.bf16.mxu0 0
    %1838 = vmatpush2.bf16.msra.mxu0 0
    %1839 = vmatprep.subr.bf16.mxu0 0
    %1840 = vmatpush2.bf16.msra.mxu0 0
    %1841 = vmatprep.subr.bf16.mxu0 0
    %1842 = vmatpush2.bf16.msra.mxu0 0
    %1843 = vmatprep.subr.bf16.mxu0 0
    %1844 = vmatpush2.bf16.msra.mxu0 0
    %1845 = vmatprep.subr.bf16.mxu0 0
    %1846 = vmatpush2.bf16.msra.mxu0 0
    %1847 = vmatprep.subr.bf16.mxu0 0
    %1848 = vmatpush2.bf16.msra.mxu0 0
    %1849 = vmatprep.mubr.bf16.mxu0 0
    %1850 = vmatmul.mubr.bf16.gmra.mxu0 %v1721
    %v1851 = vpop.f32.mrf.mxu0
    %v1852 = vadd.f32 0.0, %v1851
    %v1853 = vpop.f32.mrf.mxu0
    %v1854 = vpop.f32.mrf.mxu0
    %v1855 = vpop.f32.mrf.mxu0
    %1856 = vdwg.mxu0
    %v1857 = vadd.f32 %v1816, %v1852
    %v1858 = vxor.u32 %v1857, 2147483648
    %v1859 = vmul.f32 %v1858, 1.442695
    %v1860 = vpow.pop %v1859
    %v1861 = vadd.f32 %v1860, 1.0
    %v1862 = vrcp.pop %v1861
    %v1863 = vmul.f32 1.0, %v1862
    %v1864 = vmul.f32 %v1863, 2.0
    %v1865 = vsub.f32 %v1864, 1.0
    %v1866 = vmul.f32 %v1863, %v1692
    %1868 = vrot.lane.b32.xlu0 %v1865, 64
    %v1869 = vpop.permute.xlu0 %1868
    %v1871 = vmul.f32 %v1863, %v1869
    %1873 = vrot.lane.b32.xlu0 %v1871, 32
    %v1874 = vpop.permute.xlu0 %1873
    %v1876 = vadd.f32 %v1866, %v1874
    %v1877 = vtanh.pop %v1876
    %1879 = vrot.lane.b32.xlu0 %v1877, 64
    %v1880 = vpop.permute.xlu0 %1879
    %v1882 = vmul.f32 %v1863, %v1880
    %v1883 = vpack.c.bf16 %v1882, %v1882
    %s1884 = scalar_lea.vmem %s4, 32
    %v1885 = vld [vmem:[%s1884] sm:$0xf]
    %v1886 = vld [vmem:[%s1884 + $0x4] sm:$0xf]
    %v1887 = vld [vmem:[%s1884 + $0x8] sm:$0xf]
    %v1888 = vld [vmem:[%s1884 + $0xc] sm:$0xf]
    %1890 = vrot.lane.b32.xlu0 %v1883, 32
    %v1891 = vpop.permute.xlu0 %1890
    %v1896 = vunpack.c.l.b16 %v1885
    %v1897 = vunpack.c.l.b16 %v1886
    %v1898 = vunpack.c.l.b16 %v1887
    %v1899 = vunpack.c.l.b16 %v1888
    %v1900 = vpack.c.b16 %v1897, %v1896
    %v1901 = vpack.c.b16 %v1899, %v1898
    %v1905 = vsel %vm350, %v1891, 0
    %1907 = vmatprep.subr.bf16.mxu0 0
    %1908 = vmatpush1.bf16.msra.mxu0 0
    %1909 = vmatprep.subr.bf16.mxu0 0
    %1910 = vmatpush1.bf16.msra.mxu0 0
    %1911 = vmatprep.subr.bf16.mxu0 0
    %1912 = vmatpush1.bf16.msra.mxu0 0
    %1913 = vmatprep.subr.bf16.mxu0 0
    %1914 = vmatpush1.bf16.msra.mxu0 0
    %1915 = vmatprep.subr.bf16.mxu0 0
    %1916 = vmatpush1.bf16.msra.mxu0 0
    %1917 = vmatprep.subr.bf16.mxu0 0
    %1918 = vmatpush1.bf16.msra.mxu0 0
    %1919 = vmatprep.subr.bf16.mxu0 0
    %1920 = vmatpush1.bf16.msra.mxu0 %v1901
    %1921 = vmatprep.subr.bf16.mxu0 0
    %1922 = vmatpush1.bf16.msra.mxu0 %v1900
    %1923 = vmatprep.subr.bf16.mxu0 0
    %1924 = vmatpush2.bf16.msra.mxu0 0
    %1925 = vmatprep.subr.bf16.mxu0 0
    %1926 = vmatpush2.bf16.msra.mxu0 0
    %1927 = vmatprep.subr.bf16.mxu0 0
    %1928 = vmatpush2.bf16.msra.mxu0 0
    %1929 = vmatprep.subr.bf16.mxu0 0
    %1930 = vmatpush2.bf16.msra.mxu0 0
    %1931 = vmatprep.subr.bf16.mxu0 0
    %1932 = vmatpush2.bf16.msra.mxu0 0
    %1933 = vmatprep.subr.bf16.mxu0 0
    %1934 = vmatpush2.bf16.msra.mxu0 0
    %1935 = vmatprep.subr.bf16.mxu0 0
    %1936 = vmatpush2.bf16.msra.mxu0 0
    %1937 = vmatprep.subr.bf16.mxu0 0
    %1938 = vmatpush2.bf16.msra.mxu0 0
    %1939 = vmatprep.mubr.bf16.mxu0 0
    %1940 = vmatmul.mubr.bf16.gmra.mxu0 %v1905
    %v1941 = vpop.f32.mrf.mxu0
    %v1942 = vadd.f32 0.0, %v1941
    %v1943 = vpop.f32.mrf.mxu0
    %v1944 = vpop.f32.mrf.mxu0
    %v1945 = vpop.f32.mrf.mxu0
    %1946 = vdwg.mxu0
    %v1947 = vadd.f32 %v1810, %v1942
    %s1948 = scalar_lea.vmem [#allocation2], 152
    %v1949 = vld [vmem:[%s1948] sm:$0xff]
    %1950 = vmatprep.subr.bf16.mxu0 0
    %1951 = vmatpush1.bf16.msra.mxu0 0
    %1952 = vmatprep.subr.bf16.mxu0 0
    %1953 = vmatpush1.bf16.msra.mxu0 0
    %1954 = vmatprep.subr.bf16.mxu0 0
    %1955 = vmatpush1.bf16.msra.mxu0 0
    %1956 = vmatprep.subr.bf16.mxu0 0
    %1957 = vmatpush1.bf16.msra.mxu0 0
    %1958 = vmatprep.subr.bf16.mxu0 0
    %1959 = vmatpush1.bf16.msra.mxu0 0
    %1960 = vmatprep.subr.bf16.mxu0 0
    %1961 = vmatpush1.bf16.msra.mxu0 0
    %1962 = vmatprep.subr.bf16.mxu0 0
    %1963 = vmatpush1.bf16.msra.mxu0 %v347
    %1964 = vmatprep.subr.bf16.mxu0 0
    %1965 = vmatpush1.bf16.msra.mxu0 %v346
    %1966 = vmatprep.subr.bf16.mxu0 0
    %1967 = vmatpush2.bf16.msra.mxu0 0
    %1968 = vmatprep.subr.bf16.mxu0 0
    %1969 = vmatpush2.bf16.msra.mxu0 0
    %1970 = vmatprep.subr.bf16.mxu0 0
    %1971 = vmatpush2.bf16.msra.mxu0 0
    %1972 = vmatprep.subr.bf16.mxu0 0
    %1973 = vmatpush2.bf16.msra.mxu0 0
    %1974 = vmatprep.subr.bf16.mxu0 0
    %1975 = vmatpush2.bf16.msra.mxu0 0
    %1976 = vmatprep.subr.bf16.mxu0 0
    %1977 = vmatpush2.bf16.msra.mxu0 0
    %1978 = vmatprep.subr.bf16.mxu0 0
    %1979 = vmatpush2.bf16.msra.mxu0 0
    %1980 = vmatprep.subr.bf16.mxu0 0
    %1981 = vmatpush2.bf16.msra.mxu0 0
    %1982 = vmatprep.mubr.bf16.mxu0 0
    %1983 = vmatmul.mubr.bf16.gmra.mxu0 %v1905
    %v1984 = vpop.f32.mrf.mxu0
    %v1985 = vadd.f32 0.0, %v1984
    %v1986 = vpop.f32.mrf.mxu0
    %v1987 = vpop.f32.mrf.mxu0
    %v1988 = vpop.f32.mrf.mxu0
    %1989 = vdwg.mxu0
    %v1990 = vadd.f32 %v1949, %v1985
    %v1991 = vxor.u32 %v1990, 2147483648
    %v1992 = vmul.f32 %v1991, 1.442695
    %v1993 = vpow.pop %v1992
    %v1994 = vadd.f32 %v1993, 1.0
    %v1995 = vrcp.pop %v1994
    %v1996 = vmul.f32 1.0, %v1995
    %v1997 = vmul.f32 %v1996, 2.0
    %v1998 = vsub.f32 %v1997, 1.0
    %v1999 = vmul.f32 %v1996, %v1876
    %2001 = vrot.lane.b32.xlu0 %v1998, 64
    %v2002 = vpop.permute.xlu0 %2001
    %v2004 = vmul.f32 %v1996, %v2002
    %2006 = vrot.lane.b32.xlu0 %v2004, 32
    %v2007 = vpop.permute.xlu0 %2006
    %v2009 = vadd.f32 %v1999, %v2007
    %v2010 = vtanh.pop %v2009
    %2012 = vrot.lane.b32.xlu0 %v2010, 64
    %v2013 = vpop.permute.xlu0 %2012
    %v2015 = vmul.f32 %v1996, %v2013
    %v2016 = vpack.c.bf16 %v2015, %v2015
    %s2017 = scalar_lea.vmem %s4, 48
    %v2018 = vld [vmem:[%s2017] sm:$0xf]
    %v2019 = vld [vmem:[%s2017 + $0x4] sm:$0xf]
    %v2020 = vld [vmem:[%s2017 + $0x8] sm:$0xf]
    %v2021 = vld [vmem:[%s2017 + $0xc] sm:$0xf]
    %2023 = vrot.lane.b32.xlu0 %v2016, 32
    %v2024 = vpop.permute.xlu0 %2023
    %v2029 = vunpack.c.l.b16 %v2018
    %v2030 = vunpack.c.l.b16 %v2019
    %v2031 = vunpack.c.l.b16 %v2020
    %v2032 = vunpack.c.l.b16 %v2021
    %v2033 = vpack.c.b16 %v2030, %v2029
    %v2034 = vpack.c.b16 %v2032, %v2031
    %v2038 = vsel %vm350, %v2024, 0
    %2040 = vmatprep.subr.bf16.mxu0 0
    %2041 = vmatpush1.bf16.msra.mxu0 0
    %2042 = vmatprep.subr.bf16.mxu0 0
    %2043 = vmatpush1.bf16.msra.mxu0 0
    %2044 = vmatprep.subr.bf16.mxu0 0
    %2045 = vmatpush1.bf16.msra.mxu0 0
    %2046 = vmatprep.subr.bf16.mxu0 0
    %2047 = vmatpush1.bf16.msra.mxu0 0
    %2048 = vmatprep.subr.bf16.mxu0 0
    %2049 = vmatpush1.bf16.msra.mxu0 0
    %2050 = vmatprep.subr.bf16.mxu0 0
    %2051 = vmatpush1.bf16.msra.mxu0 0
    %2052 = vmatprep.subr.bf16.mxu0 0
    %2053 = vmatpush1.bf16.msra.mxu0 %v2034
    %2054 = vmatprep.subr.bf16.mxu0 0
    %2055 = vmatpush1.bf16.msra.mxu0 %v2033
    %2056 = vmatprep.subr.bf16.mxu0 0
    %2057 = vmatpush2.bf16.msra.mxu0 0
    %2058 = vmatprep.subr.bf16.mxu0 0
    %2059 = vmatpush2.bf16.msra.mxu0 0
    %2060 = vmatprep.subr.bf16.mxu0 0
    %2061 = vmatpush2.bf16.msra.mxu0 0
    %2062 = vmatprep.subr.bf16.mxu0 0
    %2063 = vmatpush2.bf16.msra.mxu0 0
    %2064 = vmatprep.subr.bf16.mxu0 0
    %2065 = vmatpush2.bf16.msra.mxu0 0
    %2066 = vmatprep.subr.bf16.mxu0 0
    %2067 = vmatpush2.bf16.msra.mxu0 0
    %2068 = vmatprep.subr.bf16.mxu0 0
    %2069 = vmatpush2.bf16.msra.mxu0 0
    %2070 = vmatprep.subr.bf16.mxu0 0
    %2071 = vmatpush2.bf16.msra.mxu0 0
    %2072 = vmatprep.mubr.bf16.mxu0 0
    %2073 = vmatmul.mubr.bf16.gmra.mxu0 %v2038
    %v2074 = vpop.f32.mrf.mxu0
    %v2075 = vadd.f32 0.0, %v2074
    %v2076 = vpop.f32.mrf.mxu0
    %v2077 = vpop.f32.mrf.mxu0
    %v2078 = vpop.f32.mrf.mxu0
    %2079 = vdwg.mxu0
    %v2080 = vadd.f32 %v1947, %v2075
    %s2081 = scalar_lea.vmem [#allocation2], 160
    %v2082 = vld [vmem:[%s2081] sm:$0xff]
    %2083 = vmatprep.subr.bf16.mxu0 0
    %2084 = vmatpush1.bf16.msra.mxu0 0
    %2085 = vmatprep.subr.bf16.mxu0 0
    %2086 = vmatpush1.bf16.msra.mxu0 0
    %2087 = vmatprep.subr.bf16.mxu0 0
    %2088 = vmatpush1.bf16.msra.mxu0 0
    %2089 = vmatprep.subr.bf16.mxu0 0
    %2090 = vmatpush1.bf16.msra.mxu0 0
    %2091 = vmatprep.subr.bf16.mxu0 0
    %2092 = vmatpush1.bf16.msra.mxu0 0
    %2093 = vmatprep.subr.bf16.mxu0 0
    %2094 = vmatpush1.bf16.msra.mxu0 0
    %2095 = vmatprep.subr.bf16.mxu0 0
    %2096 = vmatpush1.bf16.msra.mxu0 %v347
    %2097 = vmatprep.subr.bf16.mxu0 0
    %2098 = vmatpush1.bf16.msra.mxu0 %v346
    %2099 = vmatprep.subr.bf16.mxu0 0
    %2100 = vmatpush2.bf16.msra.mxu0 0
    %2101 = vmatprep.subr.bf16.mxu0 0
    %2102 = vmatpush2.bf16.msra.mxu0 0
    %2103 = vmatprep.subr.bf16.mxu0 0
    %2104 = vmatpush2.bf16.msra.mxu0 0
    %2105 = vmatprep.subr.bf16.mxu0 0
    %2106 = vmatpush2.bf16.msra.mxu0 0
    %2107 = vmatprep.subr.bf16.mxu0 0
    %2108 = vmatpush2.bf16.msra.mxu0 0
    %2109 = vmatprep.subr.bf16.mxu0 0
    %2110 = vmatpush2.bf16.msra.mxu0 0
    %2111 = vmatprep.subr.bf16.mxu0 0
    %2112 = vmatpush2.bf16.msra.mxu0 0
    %2113 = vmatprep.subr.bf16.mxu0 0
    %2114 = vmatpush2.bf16.msra.mxu0 0
    %2115 = vmatprep.mubr.bf16.mxu0 0
    %2116 = vmatmul.mubr.bf16.gmra.mxu0 %v2038
    %v2117 = vpop.f32.mrf.mxu0
    %v2118 = vadd.f32 0.0, %v2117
    %v2119 = vpop.f32.mrf.mxu0
    %v2120 = vpop.f32.mrf.mxu0
    %v2121 = vpop.f32.mrf.mxu0
    %2122 = vdwg.mxu0
    %v2123 = vadd.f32 %v2082, %v2118
    %v2124 = vxor.u32 %v2123, 2147483648
    %v2125 = vmul.f32 %v2124, 1.442695
    %v2126 = vpow.pop %v2125
    %v2127 = vadd.f32 %v2126, 1.0
    %v2128 = vrcp.pop %v2127
    %v2129 = vmul.f32 1.0, %v2128
    %v2130 = vmul.f32 %v2129, 2.0
    %v2131 = vsub.f32 %v2130, 1.0
    %v2132 = vmul.f32 %v2129, %v2009
    %2134 = vrot.lane.b32.xlu0 %v2131, 64
    %v2135 = vpop.permute.xlu0 %2134
    %v2137 = vmul.f32 %v2129, %v2135
    %2139 = vrot.lane.b32.xlu0 %v2137, 32
    %v2140 = vpop.permute.xlu0 %2139
    %v2142 = vadd.f32 %v2132, %v2140
    %v2143 = vtanh.pop %v2142
    %2145 = vrot.lane.b32.xlu0 %v2143, 64
    %v2146 = vpop.permute.xlu0 %2145
    %v2148 = vmul.f32 %v2129, %v2146
    %v2149 = vpack.c.bf16 %v2148, %v2148
    %s2150 = scalar_lea.vmem %s4, 64
    %v2151 = vld [vmem:[%s2150] sm:$0xf]
    %v2152 = vld [vmem:[%s2150 + $0x4] sm:$0xf]
    %v2153 = vld [vmem:[%s2150 + $0x8] sm:$0xf]
    %v2154 = vld [vmem:[%s2150 + $0xc] sm:$0xf]
    %2156 = vrot.lane.b32.xlu0 %v2149, 32
    %v2157 = vpop.permute.xlu0 %2156
    %v2162 = vunpack.c.l.b16 %v2151
    %v2163 = vunpack.c.l.b16 %v2152
    %v2164 = vunpack.c.l.b16 %v2153
    %v2165 = vunpack.c.l.b16 %v2154
    %v2166 = vpack.c.b16 %v2163, %v2162
    %v2167 = vpack.c.b16 %v2165, %v2164
    %v2171 = vsel %vm350, %v2157, 0
    %2173 = vmatprep.subr.bf16.mxu0 0
    %2174 = vmatpush1.bf16.msra.mxu0 0
    %2175 = vmatprep.subr.bf16.mxu0 0
    %2176 = vmatpush1.bf16.msra.mxu0 0
    %2177 = vmatprep.subr.bf16.mxu0 0
    %2178 = vmatpush1.bf16.msra.mxu0 0
    %2179 = vmatprep.subr.bf16.mxu0 0
    %2180 = vmatpush1.bf16.msra.mxu0 0
    %2181 = vmatprep.subr.bf16.mxu0 0
    %2182 = vmatpush1.bf16.msra.mxu0 0
    %2183 = vmatprep.subr.bf16.mxu0 0
    %2184 = vmatpush1.bf16.msra.mxu0 0
    %2185 = vmatprep.subr.bf16.mxu0 0
    %2186 = vmatpush1.bf16.msra.mxu0 %v2167
    %2187 = vmatprep.subr.bf16.mxu0 0
    %2188 = vmatpush1.bf16.msra.mxu0 %v2166
    %2189 = vmatprep.subr.bf16.mxu0 0
    %2190 = vmatpush2.bf16.msra.mxu0 0
    %2191 = vmatprep.subr.bf16.mxu0 0
    %2192 = vmatpush2.bf16.msra.mxu0 0
    %2193 = vmatprep.subr.bf16.mxu0 0
    %2194 = vmatpush2.bf16.msra.mxu0 0
    %2195 = vmatprep.subr.bf16.mxu0 0
    %2196 = vmatpush2.bf16.msra.mxu0 0
    %2197 = vmatprep.subr.bf16.mxu0 0
    %2198 = vmatpush2.bf16.msra.mxu0 0
    %2199 = vmatprep.subr.bf16.mxu0 0
    %2200 = vmatpush2.bf16.msra.mxu0 0
    %2201 = vmatprep.subr.bf16.mxu0 0
    %2202 = vmatpush2.bf16.msra.mxu0 0
    %2203 = vmatprep.subr.bf16.mxu0 0
    %2204 = vmatpush2.bf16.msra.mxu0 0
    %2205 = vmatprep.mubr.bf16.mxu0 0
    %2206 = vmatmul.mubr.bf16.gmra.mxu0 %v2171
    %v2207 = vpop.f32.mrf.mxu0
    %v2208 = vadd.f32 0.0, %v2207
    %v2209 = vpop.f32.mrf.mxu0
    %v2210 = vpop.f32.mrf.mxu0
    %v2211 = vpop.f32.mrf.mxu0
    %2212 = vdwg.mxu0
    %v2213 = vadd.f32 %v2080, %v2208
    %s2214 = scalar_lea.vmem [#allocation2], 168
    %v2215 = vld [vmem:[%s2214] sm:$0xff]
    %2216 = vmatprep.subr.bf16.mxu0 0
    %2217 = vmatpush1.bf16.msra.mxu0 0
    %2218 = vmatprep.subr.bf16.mxu0 0
    %2219 = vmatpush1.bf16.msra.mxu0 0
    %2220 = vmatprep.subr.bf16.mxu0 0
    %2221 = vmatpush1.bf16.msra.mxu0 0
    %2222 = vmatprep.subr.bf16.mxu0 0
    %2223 = vmatpush1.bf16.msra.mxu0 0
    %2224 = vmatprep.subr.bf16.mxu0 0
    %2225 = vmatpush1.bf16.msra.mxu0 0
    %2226 = vmatprep.subr.bf16.mxu0 0
    %2227 = vmatpush1.bf16.msra.mxu0 0
    %2228 = vmatprep.subr.bf16.mxu0 0
    %2229 = vmatpush1.bf16.msra.mxu0 %v347
    %2230 = vmatprep.subr.bf16.mxu0 0
    %2231 = vmatpush1.bf16.msra.mxu0 %v346
    %2232 = vmatprep.subr.bf16.mxu0 0
    %2233 = vmatpush2.bf16.msra.mxu0 0
    %2234 = vmatprep.subr.bf16.mxu0 0
    %2235 = vmatpush2.bf16.msra.mxu0 0
    %2236 = vmatprep.subr.bf16.mxu0 0
    %2237 = vmatpush2.bf16.msra.mxu0 0
    %2238 = vmatprep.subr.bf16.mxu0 0
    %2239 = vmatpush2.bf16.msra.mxu0 0
    %2240 = vmatprep.subr.bf16.mxu0 0
    %2241 = vmatpush2.bf16.msra.mxu0 0
    %2242 = vmatprep.subr.bf16.mxu0 0
    %2243 = vmatpush2.bf16.msra.mxu0 0
    %2244 = vmatprep.subr.bf16.mxu0 0
    %2245 = vmatpush2.bf16.msra.mxu0 0
    %2246 = vmatprep.subr.bf16.mxu0 0
    %2247 = vmatpush2.bf16.msra.mxu0 0
    %2248 = vmatprep.mubr.bf16.mxu0 0
    %2249 = vmatmul.mubr.bf16.gmra.mxu0 %v2171
    %v2250 = vpop.f32.mrf.mxu0
    %v2251 = vadd.f32 0.0, %v2250
    %v2252 = vpop.f32.mrf.mxu0
    %v2253 = vpop.f32.mrf.mxu0
    %v2254 = vpop.f32.mrf.mxu0
    %2255 = vdwg.mxu0
    %v2256 = vadd.f32 %v2215, %v2251
    %v2257 = vxor.u32 %v2256, 2147483648
    %v2258 = vmul.f32 %v2257, 1.442695
    %v2259 = vpow.pop %v2258
    %v2260 = vadd.f32 %v2259, 1.0
    %v2261 = vrcp.pop %v2260
    %v2262 = vmul.f32 1.0, %v2261
    %v2263 = vmul.f32 %v2262, 2.0
    %v2264 = vsub.f32 %v2263, 1.0
    %v2265 = vmul.f32 %v2262, %v2142
    %2267 = vrot.lane.b32.xlu0 %v2264, 64
    %v2268 = vpop.permute.xlu0 %2267
    %v2270 = vmul.f32 %v2262, %v2268
    %2272 = vrot.lane.b32.xlu0 %v2270, 32
    %v2273 = vpop.permute.xlu0 %2272
    %v2275 = vadd.f32 %v2265, %v2273
    %v2276 = vtanh.pop %v2275
    %2278 = vrot.lane.b32.xlu0 %v2276, 64
    %v2279 = vpop.permute.xlu0 %2278
    %v2281 = vmul.f32 %v2262, %v2279
    %v2282 = vpack.c.bf16 %v2281, %v2281
    %s2283 = scalar_lea.vmem %s4, 80
    %v2284 = vld [vmem:[%s2283] sm:$0xf]
    %v2285 = vld [vmem:[%s2283 + $0x4] sm:$0xf]
    %v2286 = vld [vmem:[%s2283 + $0x8] sm:$0xf]
    %v2287 = vld [vmem:[%s2283 + $0xc] sm:$0xf]
    %2289 = vrot.lane.b32.xlu0 %v2282, 32
    %v2290 = vpop.permute.xlu0 %2289
    %v2295 = vunpack.c.l.b16 %v2284
    %v2296 = vunpack.c.l.b16 %v2285
    %v2297 = vunpack.c.l.b16 %v2286
    %v2298 = vunpack.c.l.b16 %v2287
    %v2299 = vpack.c.b16 %v2296, %v2295
    %v2300 = vpack.c.b16 %v2298, %v2297
    %v2304 = vsel %vm350, %v2290, 0
    %2306 = vmatprep.subr.bf16.mxu0 0
    %2307 = vmatpush1.bf16.msra.mxu0 0
    %2308 = vmatprep.subr.bf16.mxu0 0
    %2309 = vmatpush1.bf16.msra.mxu0 0
    %2310 = vmatprep.subr.bf16.mxu0 0
    %2311 = vmatpush1.bf16.msra.mxu0 0
    %2312 = vmatprep.subr.bf16.mxu0 0
    %2313 = vmatpush1.bf16.msra.mxu0 0
    %2314 = vmatprep.subr.bf16.mxu0 0
    %2315 = vmatpush1.bf16.msra.mxu0 0
    %2316 = vmatprep.subr.bf16.mxu0 0
    %2317 = vmatpush1.bf16.msra.mxu0 0
    %2318 = vmatprep.subr.bf16.mxu0 0
    %2319 = vmatpush1.bf16.msra.mxu0 %v2300
    %2320 = vmatprep.subr.bf16.mxu0 0
    %2321 = vmatpush1.bf16.msra.mxu0 %v2299
    %2322 = vmatprep.subr.bf16.mxu0 0
    %2323 = vmatpush2.bf16.msra.mxu0 0
    %2324 = vmatprep.subr.bf16.mxu0 0
    %2325 = vmatpush2.bf16.msra.mxu0 0
    %2326 = vmatprep.subr.bf16.mxu0 0
    %2327 = vmatpush2.bf16.msra.mxu0 0
    %2328 = vmatprep.subr.bf16.mxu0 0
    %2329 = vmatpush2.bf16.msra.mxu0 0
    %2330 = vmatprep.subr.bf16.mxu0 0
    %2331 = vmatpush2.bf16.msra.mxu0 0
    %2332 = vmatprep.subr.bf16.mxu0 0
    %2333 = vmatpush2.bf16.msra.mxu0 0
    %2334 = vmatprep.subr.bf16.mxu0 0
    %2335 = vmatpush2.bf16.msra.mxu0 0
    %2336 = vmatprep.subr.bf16.mxu0 0
    %2337 = vmatpush2.bf16.msra.mxu0 0
    %2338 = vmatprep.mubr.bf16.mxu0 0
    %2339 = vmatmul.mubr.bf16.gmra.mxu0 %v2304
    %v2340 = vpop.f32.mrf.mxu0
    %v2341 = vadd.f32 0.0, %v2340
    %v2342 = vpop.f32.mrf.mxu0
    %v2343 = vpop.f32.mrf.mxu0
    %v2344 = vpop.f32.mrf.mxu0
    %2345 = vdwg.mxu0
    %v2346 = vadd.f32 %v2213, %v2341
    %s2347 = scalar_lea.vmem [#allocation2], 176
    %v2348 = vld [vmem:[%s2347] sm:$0xff]
    %2349 = vmatprep.subr.bf16.mxu0 0
    %2350 = vmatpush1.bf16.msra.mxu0 0
    %2351 = vmatprep.subr.bf16.mxu0 0
    %2352 = vmatpush1.bf16.msra.mxu0 0
    %2353 = vmatprep.subr.bf16.mxu0 0
    %2354 = vmatpush1.bf16.msra.mxu0 0
    %2355 = vmatprep.subr.bf16.mxu0 0
    %2356 = vmatpush1.bf16.msra.mxu0 0
    %2357 = vmatprep.subr.bf16.mxu0 0
    %2358 = vmatpush1.bf16.msra.mxu0 0
    %2359 = vmatprep.subr.bf16.mxu0 0
    %2360 = vmatpush1.bf16.msra.mxu0 0
    %2361 = vmatprep.subr.bf16.mxu0 0
    %2362 = vmatpush1.bf16.msra.mxu0 %v347
    %2363 = vmatprep.subr.bf16.mxu0 0
    %2364 = vmatpush1.bf16.msra.mxu0 %v346
    %2365 = vmatprep.subr.bf16.mxu0 0
    %2366 = vmatpush2.bf16.msra.mxu0 0
    %2367 = vmatprep.subr.bf16.mxu0 0
    %2368 = vmatpush2.bf16.msra.mxu0 0
    %2369 = vmatprep.subr.bf16.mxu0 0
    %2370 = vmatpush2.bf16.msra.mxu0 0
    %2371 = vmatprep.subr.bf16.mxu0 0
    %2372 = vmatpush2.bf16.msra.mxu0 0
    %2373 = vmatprep.subr.bf16.mxu0 0
    %2374 = vmatpush2.bf16.msra.mxu0 0
    %2375 = vmatprep.subr.bf16.mxu0 0
    %2376 = vmatpush2.bf16.msra.mxu0 0
    %2377 = vmatprep.subr.bf16.mxu0 0
    %2378 = vmatpush2.bf16.msra.mxu0 0
    %2379 = vmatprep.subr.bf16.mxu0 0
    %2380 = vmatpush2.bf16.msra.mxu0 0
    %2381 = vmatprep.mubr.bf16.mxu0 0
    %2382 = vmatmul.mubr.bf16.gmra.mxu0 %v2304
    %v2383 = vpop.f32.mrf.mxu0
    %v2384 = vadd.f32 0.0, %v2383
    %v2385 = vpop.f32.mrf.mxu0
    %v2386 = vpop.f32.mrf.mxu0
    %v2387 = vpop.f32.mrf.mxu0
    %2388 = vdwg.mxu0
    %v2389 = vadd.f32 %v2348, %v2384
    %v2390 = vxor.u32 %v2389, 2147483648
    %v2391 = vmul.f32 %v2390, 1.442695
    %v2392 = vpow.pop %v2391
    %v2393 = vadd.f32 %v2392, 1.0
    %v2394 = vrcp.pop %v2393
    %v2395 = vmul.f32 1.0, %v2394
    %v2396 = vmul.f32 %v2395, 2.0
    %v2397 = vsub.f32 %v2396, 1.0
    %v2398 = vmul.f32 %v2395, %v2275
    %2400 = vrot.lane.b32.xlu0 %v2397, 64
    %v2401 = vpop.permute.xlu0 %2400
    %v2403 = vmul.f32 %v2395, %v2401
    %2405 = vrot.lane.b32.xlu0 %v2403, 32
    %v2406 = vpop.permute.xlu0 %2405
    %v2408 = vadd.f32 %v2398, %v2406
    %v2409 = vtanh.pop %v2408
    %2411 = vrot.lane.b32.xlu0 %v2409, 64
    %v2412 = vpop.permute.xlu0 %2411
    %v2414 = vmul.f32 %v2395, %v2412
    %v2415 = vpack.c.bf16 %v2414, %v2414
    %s2416 = scalar_lea.vmem %s4, 96
    %v2417 = vld [vmem:[%s2416] sm:$0xf]
    %v2418 = vld [vmem:[%s2416 + $0x4] sm:$0xf]
    %v2419 = vld [vmem:[%s2416 + $0x8] sm:$0xf]
    %v2420 = vld [vmem:[%s2416 + $0xc] sm:$0xf]
    %2422 = vrot.lane.b32.xlu0 %v2415, 32
    %v2423 = vpop.permute.xlu0 %2422
    %v2428 = vunpack.c.l.b16 %v2417
    %v2429 = vunpack.c.l.b16 %v2418
    %v2430 = vunpack.c.l.b16 %v2419
    %v2431 = vunpack.c.l.b16 %v2420
    %v2432 = vpack.c.b16 %v2429, %v2428
    %v2433 = vpack.c.b16 %v2431, %v2430
    %v2437 = vsel %vm350, %v2423, 0
    %2439 = vmatprep.subr.bf16.mxu0 0
    %2440 = vmatpush1.bf16.msra.mxu0 0
    %2441 = vmatprep.subr.bf16.mxu0 0
    %2442 = vmatpush1.bf16.msra.mxu0 0
    %2443 = vmatprep.subr.bf16.mxu0 0
    %2444 = vmatpush1.bf16.msra.mxu0 0
    %2445 = vmatprep.subr.bf16.mxu0 0
    %2446 = vmatpush1.bf16.msra.mxu0 0
    %2447 = vmatprep.subr.bf16.mxu0 0
    %2448 = vmatpush1.bf16.msra.mxu0 0
    %2449 = vmatprep.subr.bf16.mxu0 0
    %2450 = vmatpush1.bf16.msra.mxu0 0
    %2451 = vmatprep.subr.bf16.mxu0 0
    %2452 = vmatpush1.bf16.msra.mxu0 %v2433
    %2453 = vmatprep.subr.bf16.mxu0 0
    %2454 = vmatpush1.bf16.msra.mxu0 %v2432
    %2455 = vmatprep.subr.bf16.mxu0 0
    %2456 = vmatpush2.bf16.msra.mxu0 0
    %2457 = vmatprep.subr.bf16.mxu0 0
    %2458 = vmatpush2.bf16.msra.mxu0 0
    %2459 = vmatprep.subr.bf16.mxu0 0
    %2460 = vmatpush2.bf16.msra.mxu0 0
    %2461 = vmatprep.subr.bf16.mxu0 0
    %2462 = vmatpush2.bf16.msra.mxu0 0
    %2463 = vmatprep.subr.bf16.mxu0 0
    %2464 = vmatpush2.bf16.msra.mxu0 0
    %2465 = vmatprep.subr.bf16.mxu0 0
    %2466 = vmatpush2.bf16.msra.mxu0 0
    %2467 = vmatprep.subr.bf16.mxu0 0
    %2468 = vmatpush2.bf16.msra.mxu0 0
    %2469 = vmatprep.subr.bf16.mxu0 0
    %2470 = vmatpush2.bf16.msra.mxu0 0
    %2471 = vmatprep.mubr.bf16.mxu0 0
    %2472 = vmatmul.mubr.bf16.gmra.mxu0 %v2437
    %v2473 = vpop.f32.mrf.mxu0
    %v2474 = vadd.f32 0.0, %v2473
    %v2475 = vpop.f32.mrf.mxu0
    %v2476 = vpop.f32.mrf.mxu0
    %v2477 = vpop.f32.mrf.mxu0
    %2478 = vdwg.mxu0
    %v2479 = vadd.f32 %v2346, %v2474
    %s2480 = scalar_lea.vmem [#allocation2], 184
    %v2481 = vld [vmem:[%s2480] sm:$0xff]
    %2482 = vmatprep.subr.bf16.mxu0 0
    %2483 = vmatpush1.bf16.msra.mxu0 0
    %2484 = vmatprep.subr.bf16.mxu0 0
    %2485 = vmatpush1.bf16.msra.mxu0 0
    %2486 = vmatprep.subr.bf16.mxu0 0
    %2487 = vmatpush1.bf16.msra.mxu0 0
    %2488 = vmatprep.subr.bf16.mxu0 0
    %2489 = vmatpush1.bf16.msra.mxu0 0
    %2490 = vmatprep.subr.bf16.mxu0 0
    %2491 = vmatpush1.bf16.msra.mxu0 0
    %2492 = vmatprep.subr.bf16.mxu0 0
    %2493 = vmatpush1.bf16.msra.mxu0 0
    %2494 = vmatprep.subr.bf16.mxu0 0
    %2495 = vmatpush1.bf16.msra.mxu0 %v347
    %2496 = vmatprep.subr.bf16.mxu0 0
    %2497 = vmatpush1.bf16.msra.mxu0 %v346
    %2498 = vmatprep.subr.bf16.mxu0 0
    %2499 = vmatpush2.bf16.msra.mxu0 0
    %2500 = vmatprep.subr.bf16.mxu0 0
    %2501 = vmatpush2.bf16.msra.mxu0 0
    %2502 = vmatprep.subr.bf16.mxu0 0
    %2503 = vmatpush2.bf16.msra.mxu0 0
    %2504 = vmatprep.subr.bf16.mxu0 0
    %2505 = vmatpush2.bf16.msra.mxu0 0
    %2506 = vmatprep.subr.bf16.mxu0 0
    %2507 = vmatpush2.bf16.msra.mxu0 0
    %2508 = vmatprep.subr.bf16.mxu0 0
    %2509 = vmatpush2.bf16.msra.mxu0 0
    %2510 = vmatprep.subr.bf16.mxu0 0
    %2511 = vmatpush2.bf16.msra.mxu0 0
    %2512 = vmatprep.subr.bf16.mxu0 0
    %2513 = vmatpush2.bf16.msra.mxu0 0
    %2514 = vmatprep.mubr.bf16.mxu0 0
    %2515 = vmatmul.mubr.bf16.gmra.mxu0 %v2437
    %v2516 = vpop.f32.mrf.mxu0
    %v2517 = vadd.f32 0.0, %v2516
    %v2518 = vpop.f32.mrf.mxu0
    %v2519 = vpop.f32.mrf.mxu0
    %v2520 = vpop.f32.mrf.mxu0
    %2521 = vdwg.mxu0
    %v2522 = vadd.f32 %v2481, %v2517
    %v2523 = vxor.u32 %v2522, 2147483648
    %v2524 = vmul.f32 %v2523, 1.442695
    %v2525 = vpow.pop %v2524
    %v2526 = vadd.f32 %v2525, 1.0
    %v2527 = vrcp.pop %v2526
    %v2528 = vmul.f32 1.0, %v2527
    %v2529 = vmul.f32 %v2528, 2.0
    %v2530 = vsub.f32 %v2529, 1.0
    %v2531 = vmul.f32 %v2528, %v2408
    %2533 = vrot.lane.b32.xlu0 %v2530, 64
    %v2534 = vpop.permute.xlu0 %2533
    %v2536 = vmul.f32 %v2528, %v2534
    %2538 = vrot.lane.b32.xlu0 %v2536, 32
    %v2539 = vpop.permute.xlu0 %2538
    %v2541 = vadd.f32 %v2531, %v2539
    %v2542 = vtanh.pop %v2541
    %2544 = vrot.lane.b32.xlu0 %v2542, 64
    %v2545 = vpop.permute.xlu0 %2544
    %v2547 = vmul.f32 %v2528, %v2545
    %v2548 = vpack.c.bf16 %v2547, %v2547
    %s2549 = scalar_lea.vmem %s4, 112
    %v2550 = vld [vmem:[%s2549] sm:$0xf]
    %v2551 = vld [vmem:[%s2549 + $0x4] sm:$0xf]
    %v2552 = vld [vmem:[%s2549 + $0x8] sm:$0xf]
    %v2553 = vld [vmem:[%s2549 + $0xc] sm:$0xf]
    %2555 = vrot.lane.b32.xlu0 %v2548, 32
    %v2556 = vpop.permute.xlu0 %2555
    %v2561 = vunpack.c.l.b16 %v2550
    %v2562 = vunpack.c.l.b16 %v2551
    %v2563 = vunpack.c.l.b16 %v2552
    %v2564 = vunpack.c.l.b16 %v2553
    %v2565 = vpack.c.b16 %v2562, %v2561
    %v2566 = vpack.c.b16 %v2564, %v2563
    %v2570 = vsel %vm350, %v2556, 0
    %2572 = vmatprep.subr.bf16.mxu0 0
    %2573 = vmatpush1.bf16.msra.mxu0 0
    %2574 = vmatprep.subr.bf16.mxu0 0
    %2575 = vmatpush1.bf16.msra.mxu0 0
    %2576 = vmatprep.subr.bf16.mxu0 0
    %2577 = vmatpush1.bf16.msra.mxu0 0
    %2578 = vmatprep.subr.bf16.mxu0 0
    %2579 = vmatpush1.bf16.msra.mxu0 0
    %2580 = vmatprep.subr.bf16.mxu0 0
    %2581 = vmatpush1.bf16.msra.mxu0 0
    %2582 = vmatprep.subr.bf16.mxu0 0
    %2583 = vmatpush1.bf16.msra.mxu0 0
    %2584 = vmatprep.subr.bf16.mxu0 0
    %2585 = vmatpush1.bf16.msra.mxu0 %v2566
    %2586 = vmatprep.subr.bf16.mxu0 0
    %2587 = vmatpush1.bf16.msra.mxu0 %v2565
    %2588 = vmatprep.subr.bf16.mxu0 0
    %2589 = vmatpush2.bf16.msra.mxu0 0
    %2590 = vmatprep.subr.bf16.mxu0 0
    %2591 = vmatpush2.bf16.msra.mxu0 0
    %2592 = vmatprep.subr.bf16.mxu0 0
    %2593 = vmatpush2.bf16.msra.mxu0 0
    %2594 = vmatprep.subr.bf16.mxu0 0
    %2595 = vmatpush2.bf16.msra.mxu0 0
    %2596 = vmatprep.subr.bf16.mxu0 0
    %2597 = vmatpush2.bf16.msra.mxu0 0
    %2598 = vmatprep.subr.bf16.mxu0 0
    %2599 = vmatpush2.bf16.msra.mxu0 0
    %2600 = vmatprep.subr.bf16.mxu0 0
    %2601 = vmatpush2.bf16.msra.mxu0 0
    %2602 = vmatprep.subr.bf16.mxu0 0
    %2603 = vmatpush2.bf16.msra.mxu0 0
    %2604 = vmatprep.mubr.bf16.mxu0 0
    %2605 = vmatmul.mubr.bf16.gmra.mxu0 %v2570
    %v2606 = vpop.f32.mrf.mxu0
    %v2607 = vadd.f32 0.0, %v2606
    %v2608 = vpop.f32.mrf.mxu0
    %v2609 = vpop.f32.mrf.mxu0
    %v2610 = vpop.f32.mrf.mxu0
    %2611 = vdwg.mxu0
    %v2612 = vadd.f32 %v2479, %v2607
    %s2613 = scalar_lea.vmem [#allocation2], 192
    %v2614 = vld [vmem:[%s2613] sm:$0xff]
    %2615 = vmatprep.subr.bf16.mxu0 0
    %2616 = vmatpush1.bf16.msra.mxu0 0
    %2617 = vmatprep.subr.bf16.mxu0 0
    %2618 = vmatpush1.bf16.msra.mxu0 0
    %2619 = vmatprep.subr.bf16.mxu0 0
    %2620 = vmatpush1.bf16.msra.mxu0 0
    %2621 = vmatprep.subr.bf16.mxu0 0
    %2622 = vmatpush1.bf16.msra.mxu0 0
    %2623 = vmatprep.subr.bf16.mxu0 0
    %2624 = vmatpush1.bf16.msra.mxu0 0
    %2625 = vmatprep.subr.bf16.mxu0 0
    %2626 = vmatpush1.bf16.msra.mxu0 0
    %2627 = vmatprep.subr.bf16.mxu0 0
    %2628 = vmatpush1.bf16.msra.mxu0 %v347
    %2629 = vmatprep.subr.bf16.mxu0 0
    %2630 = vmatpush1.bf16.msra.mxu0 %v346
    %2631 = vmatprep.subr.bf16.mxu0 0
    %2632 = vmatpush2.bf16.msra.mxu0 0
    %2633 = vmatprep.subr.bf16.mxu0 0
    %2634 = vmatpush2.bf16.msra.mxu0 0
    %2635 = vmatprep.subr.bf16.mxu0 0
    %2636 = vmatpush2.bf16.msra.mxu0 0
    %2637 = vmatprep.subr.bf16.mxu0 0
    %2638 = vmatpush2.bf16.msra.mxu0 0
    %2639 = vmatprep.subr.bf16.mxu0 0
    %2640 = vmatpush2.bf16.msra.mxu0 0
    %2641 = vmatprep.subr.bf16.mxu0 0
    %2642 = vmatpush2.bf16.msra.mxu0 0
    %2643 = vmatprep.subr.bf16.mxu0 0
    %2644 = vmatpush2.bf16.msra.mxu0 0
    %2645 = vmatprep.subr.bf16.mxu0 0
    %2646 = vmatpush2.bf16.msra.mxu0 0
    %2647 = vmatprep.mubr.bf16.mxu0 0
    %2648 = vmatmul.mubr.bf16.gmra.mxu0 %v2570
    %v2649 = vpop.f32.mrf.mxu0
    %v2650 = vadd.f32 0.0, %v2649
    %v2651 = vpop.f32.mrf.mxu0
    %v2652 = vpop.f32.mrf.mxu0
    %v2653 = vpop.f32.mrf.mxu0
    %2654 = vdwg.mxu0
    %v2655 = vadd.f32 %v2614, %v2650
    %v2656 = vxor.u32 %v2655, 2147483648
    %v2657 = vmul.f32 %v2656, 1.442695
    %v2658 = vpow.pop %v2657
    %v2659 = vadd.f32 %v2658, 1.0
    %v2660 = vrcp.pop %v2659
    %v2661 = vmul.f32 1.0, %v2660
    %v2662 = vmul.f32 %v2661, 2.0
    %v2663 = vsub.f32 %v2662, 1.0
    %v2664 = vmul.f32 %v2661, %v2541
    %2666 = vrot.lane.b32.xlu0 %v2663, 64
    %v2667 = vpop.permute.xlu0 %2666
    %v2669 = vmul.f32 %v2661, %v2667
    %2671 = vrot.lane.b32.xlu0 %v2669, 32
    %v2672 = vpop.permute.xlu0 %2671
    %v2674 = vadd.f32 %v2664, %v2672
    %v2675 = vtanh.pop %v2674
    %2677 = vrot.lane.b32.xlu0 %v2675, 64
    %v2678 = vpop.permute.xlu0 %2677
    %v2680 = vmul.f32 %v2661, %v2678
    %v2681 = vpack.c.bf16 %v2680, %v2680
    %s2682 = scalar_lea.vmem %s4, 128
    %v2683 = vld [vmem:[%s2682] sm:$0xf]
    %v2684 = vld [vmem:[%s2682 + $0x4] sm:$0xf]
    %v2685 = vld [vmem:[%s2682 + $0x8] sm:$0xf]
    %v2686 = vld [vmem:[%s2682 + $0xc] sm:$0xf]
    %2688 = vrot.lane.b32.xlu0 %v2681, 32
    %v2689 = vpop.permute.xlu0 %2688
    %v2694 = vunpack.c.l.b16 %v2683
    %v2695 = vunpack.c.l.b16 %v2684
    %v2696 = vunpack.c.l.b16 %v2685
    %v2697 = vunpack.c.l.b16 %v2686
    %v2698 = vpack.c.b16 %v2695, %v2694
    %v2699 = vpack.c.b16 %v2697, %v2696
    %v2703 = vsel %vm350, %v2689, 0
    %2705 = vmatprep.subr.bf16.mxu0 0
    %2706 = vmatpush1.bf16.msra.mxu0 0
    %2707 = vmatprep.subr.bf16.mxu0 0
    %2708 = vmatpush1.bf16.msra.mxu0 0
    %2709 = vmatprep.subr.bf16.mxu0 0
    %2710 = vmatpush1.bf16.msra.mxu0 0
    %2711 = vmatprep.subr.bf16.mxu0 0
    %2712 = vmatpush1.bf16.msra.mxu0 0
    %2713 = vmatprep.subr.bf16.mxu0 0
    %2714 = vmatpush1.bf16.msra.mxu0 0
    %2715 = vmatprep.subr.bf16.mxu0 0
    %2716 = vmatpush1.bf16.msra.mxu0 0
    %2717 = vmatprep.subr.bf16.mxu0 0
    %2718 = vmatpush1.bf16.msra.mxu0 %v2699
    %2719 = vmatprep.subr.bf16.mxu0 0
    %2720 = vmatpush1.bf16.msra.mxu0 %v2698
    %2721 = vmatprep.subr.bf16.mxu0 0
    %2722 = vmatpush2.bf16.msra.mxu0 0
    %2723 = vmatprep.subr.bf16.mxu0 0
    %2724 = vmatpush2.bf16.msra.mxu0 0
    %2725 = vmatprep.subr.bf16.mxu0 0
    %2726 = vmatpush2.bf16.msra.mxu0 0
    %2727 = vmatprep.subr.bf16.mxu0 0
    %2728 = vmatpush2.bf16.msra.mxu0 0
    %2729 = vmatprep.subr.bf16.mxu0 0
    %2730 = vmatpush2.bf16.msra.mxu0 0
    %2731 = vmatprep.subr.bf16.mxu0 0
    %2732 = vmatpush2.bf16.msra.mxu0 0
    %2733 = vmatprep.subr.bf16.mxu0 0
    %2734 = vmatpush2.bf16.msra.mxu0 0
    %2735 = vmatprep.subr.bf16.mxu0 0
    %2736 = vmatpush2.bf16.msra.mxu0 0
    %2737 = vmatprep.mubr.bf16.mxu0 0
    %2738 = vmatmul.mubr.bf16.gmra.mxu0 %v2703
    %v2739 = vpop.f32.mrf.mxu0
    %v2740 = vadd.f32 0.0, %v2739
    %v2741 = vpop.f32.mrf.mxu0
    %v2742 = vpop.f32.mrf.mxu0
    %v2743 = vpop.f32.mrf.mxu0
    %2744 = vdwg.mxu0
    %v2745 = vadd.f32 %v2612, %v2740
    %s2746 = scalar_lea.vmem [#allocation2], 200
    %v2747 = vld [vmem:[%s2746] sm:$0xff]
    %2748 = vmatprep.subr.bf16.mxu0 0
    %2749 = vmatpush1.bf16.msra.mxu0 0
    %2750 = vmatprep.subr.bf16.mxu0 0
    %2751 = vmatpush1.bf16.msra.mxu0 0
    %2752 = vmatprep.subr.bf16.mxu0 0
    %2753 = vmatpush1.bf16.msra.mxu0 0
    %2754 = vmatprep.subr.bf16.mxu0 0
    %2755 = vmatpush1.bf16.msra.mxu0 0
    %2756 = vmatprep.subr.bf16.mxu0 0
    %2757 = vmatpush1.bf16.msra.mxu0 0
    %2758 = vmatprep.subr.bf16.mxu0 0
    %2759 = vmatpush1.bf16.msra.mxu0 0
    %2760 = vmatprep.subr.bf16.mxu0 0
    %2761 = vmatpush1.bf16.msra.mxu0 %v347
    %2762 = vmatprep.subr.bf16.mxu0 0
    %2763 = vmatpush1.bf16.msra.mxu0 %v346
    %2764 = vmatprep.subr.bf16.mxu0 0
    %2765 = vmatpush2.bf16.msra.mxu0 0
    %2766 = vmatprep.subr.bf16.mxu0 0
    %2767 = vmatpush2.bf16.msra.mxu0 0
    %2768 = vmatprep.subr.bf16.mxu0 0
    %2769 = vmatpush2.bf16.msra.mxu0 0
    %2770 = vmatprep.subr.bf16.mxu0 0
    %2771 = vmatpush2.bf16.msra.mxu0 0
    %2772 = vmatprep.subr.bf16.mxu0 0
    %2773 = vmatpush2.bf16.msra.mxu0 0
    %2774 = vmatprep.subr.bf16.mxu0 0
    %2775 = vmatpush2.bf16.msra.mxu0 0
    %2776 = vmatprep.subr.bf16.mxu0 0
    %2777 = vmatpush2.bf16.msra.mxu0 0
    %2778 = vmatprep.subr.bf16.mxu0 0
    %2779 = vmatpush2.bf16.msra.mxu0 0
    %2780 = vmatprep.mubr.bf16.mxu0 0
    %2781 = vmatmul.mubr.bf16.gmra.mxu0 %v2703
    %v2782 = vpop.f32.mrf.mxu0
    %v2783 = vadd.f32 0.0, %v2782
    %v2784 = vpop.f32.mrf.mxu0
    %v2785 = vpop.f32.mrf.mxu0
    %v2786 = vpop.f32.mrf.mxu0
    %2787 = vdwg.mxu0
    %v2788 = vadd.f32 %v2747, %v2783
    %v2789 = vxor.u32 %v2788, 2147483648
    %v2790 = vmul.f32 %v2789, 1.442695
    %v2791 = vpow.pop %v2790
    %v2792 = vadd.f32 %v2791, 1.0
    %v2793 = vrcp.pop %v2792
    %v2794 = vmul.f32 1.0, %v2793
    %v2795 = vmul.f32 %v2794, 2.0
    %v2796 = vsub.f32 %v2795, 1.0
    %v2797 = vmul.f32 %v2794, %v2674
    %2799 = vrot.lane.b32.xlu0 %v2796, 64
    %v2800 = vpop.permute.xlu0 %2799
    %v2802 = vmul.f32 %v2794, %v2800
    %2804 = vrot.lane.b32.xlu0 %v2802, 32
    %v2805 = vpop.permute.xlu0 %2804
    %v2807 = vadd.f32 %v2797, %v2805
    %v2808 = vtanh.pop %v2807
    %2810 = vrot.lane.b32.xlu0 %v2808, 64
    %v2811 = vpop.permute.xlu0 %2810
    %v2813 = vmul.f32 %v2794, %v2811
    %v2814 = vpack.c.bf16 %v2813, %v2813
    %s2815 = scalar_lea.vmem %s4, 144
    %v2816 = vld [vmem:[%s2815] sm:$0xf]
    %v2817 = vld [vmem:[%s2815 + $0x4] sm:$0xf]
    %v2818 = vld [vmem:[%s2815 + $0x8] sm:$0xf]
    %v2819 = vld [vmem:[%s2815 + $0xc] sm:$0xf]
    %2821 = vrot.lane.b32.xlu0 %v2814, 32
    %v2822 = vpop.permute.xlu0 %2821
    %v2827 = vunpack.c.l.b16 %v2816
    %v2828 = vunpack.c.l.b16 %v2817
    %v2829 = vunpack.c.l.b16 %v2818
    %v2830 = vunpack.c.l.b16 %v2819
    %v2831 = vpack.c.b16 %v2828, %v2827
    %v2832 = vpack.c.b16 %v2830, %v2829
    %v2836 = vsel %vm350, %v2822, 0
    %2838 = vmatprep.subr.bf16.mxu0 0
    %2839 = vmatpush1.bf16.msra.mxu0 0
    %2840 = vmatprep.subr.bf16.mxu0 0
    %2841 = vmatpush1.bf16.msra.mxu0 0
    %2842 = vmatprep.subr.bf16.mxu0 0
    %2843 = vmatpush1.bf16.msra.mxu0 0
    %2844 = vmatprep.subr.bf16.mxu0 0
    %2845 = vmatpush1.bf16.msra.mxu0 0
    %2846 = vmatprep.subr.bf16.mxu0 0
    %2847 = vmatpush1.bf16.msra.mxu0 0
    %2848 = vmatprep.subr.bf16.mxu0 0
    %2849 = vmatpush1.bf16.msra.mxu0 0
    %2850 = vmatprep.subr.bf16.mxu0 0
    %2851 = vmatpush1.bf16.msra.mxu0 %v2832
    %2852 = vmatprep.subr.bf16.mxu0 0
    %2853 = vmatpush1.bf16.msra.mxu0 %v2831
    %2854 = vmatprep.subr.bf16.mxu0 0
    %2855 = vmatpush2.bf16.msra.mxu0 0
    %2856 = vmatprep.subr.bf16.mxu0 0
    %2857 = vmatpush2.bf16.msra.mxu0 0
    %2858 = vmatprep.subr.bf16.mxu0 0
    %2859 = vmatpush2.bf16.msra.mxu0 0
    %2860 = vmatprep.subr.bf16.mxu0 0
    %2861 = vmatpush2.bf16.msra.mxu0 0
    %2862 = vmatprep.subr.bf16.mxu0 0
    %2863 = vmatpush2.bf16.msra.mxu0 0
    %2864 = vmatprep.subr.bf16.mxu0 0
    %2865 = vmatpush2.bf16.msra.mxu0 0
    %2866 = vmatprep.subr.bf16.mxu0 0
    %2867 = vmatpush2.bf16.msra.mxu0 0
    %2868 = vmatprep.subr.bf16.mxu0 0
    %2869 = vmatpush2.bf16.msra.mxu0 0
    %2870 = vmatprep.mubr.bf16.mxu0 0
    %2871 = vmatmul.mubr.bf16.gmra.mxu0 %v2836
    %v2872 = vpop.f32.mrf.mxu0
    %v2873 = vadd.f32 0.0, %v2872
    %v2874 = vpop.f32.mrf.mxu0
    %v2875 = vpop.f32.mrf.mxu0
    %v2876 = vpop.f32.mrf.mxu0
    %2877 = vdwg.mxu0
    %v2878 = vadd.f32 %v2745, %v2873
    %s2879 = scalar_lea.vmem [#allocation2], 208
    %v2880 = vld [vmem:[%s2879] sm:$0xff]
    %2881 = vmatprep.subr.bf16.mxu0 0
    %2882 = vmatpush1.bf16.msra.mxu0 0
    %2883 = vmatprep.subr.bf16.mxu0 0
    %2884 = vmatpush1.bf16.msra.mxu0 0
    %2885 = vmatprep.subr.bf16.mxu0 0
    %2886 = vmatpush1.bf16.msra.mxu0 0
    %2887 = vmatprep.subr.bf16.mxu0 0
    %2888 = vmatpush1.bf16.msra.mxu0 0
    %2889 = vmatprep.subr.bf16.mxu0 0
    %2890 = vmatpush1.bf16.msra.mxu0 0
    %2891 = vmatprep.subr.bf16.mxu0 0
    %2892 = vmatpush1.bf16.msra.mxu0 0
    %2893 = vmatprep.subr.bf16.mxu0 0
    %2894 = vmatpush1.bf16.msra.mxu0 %v347
    %2895 = vmatprep.subr.bf16.mxu0 0
    %2896 = vmatpush1.bf16.msra.mxu0 %v346
    %2897 = vmatprep.subr.bf16.mxu0 0
    %2898 = vmatpush2.bf16.msra.mxu0 0
    %2899 = vmatprep.subr.bf16.mxu0 0
    %2900 = vmatpush2.bf16.msra.mxu0 0
    %2901 = vmatprep.subr.bf16.mxu0 0
    %2902 = vmatpush2.bf16.msra.mxu0 0
    %2903 = vmatprep.subr.bf16.mxu0 0
    %2904 = vmatpush2.bf16.msra.mxu0 0
    %2905 = vmatprep.subr.bf16.mxu0 0
    %2906 = vmatpush2.bf16.msra.mxu0 0
    %2907 = vmatprep.subr.bf16.mxu0 0
    %2908 = vmatpush2.bf16.msra.mxu0 0
    %2909 = vmatprep.subr.bf16.mxu0 0
    %2910 = vmatpush2.bf16.msra.mxu0 0
    %2911 = vmatprep.subr.bf16.mxu0 0
    %2912 = vmatpush2.bf16.msra.mxu0 0
    %2913 = vmatprep.mubr.bf16.mxu0 0
    %2914 = vmatmul.mubr.bf16.gmra.mxu0 %v2836
    %v2915 = vpop.f32.mrf.mxu0
    %v2916 = vadd.f32 0.0, %v2915
    %v2917 = vpop.f32.mrf.mxu0
    %v2918 = vpop.f32.mrf.mxu0
    %v2919 = vpop.f32.mrf.mxu0
    %2920 = vdwg.mxu0
    %v2921 = vadd.f32 %v2880, %v2916
    %v2922 = vxor.u32 %v2921, 2147483648
    %v2923 = vmul.f32 %v2922, 1.442695
    %v2924 = vpow.pop %v2923
    %v2925 = vadd.f32 %v2924, 1.0
    %v2926 = vrcp.pop %v2925
    %v2927 = vmul.f32 1.0, %v2926
    %v2928 = vmul.f32 %v2927, 2.0
    %v2929 = vsub.f32 %v2928, 1.0
    %v2930 = vmul.f32 %v2927, %v2807
    %2932 = vrot.lane.b32.xlu0 %v2929, 64
    %v2933 = vpop.permute.xlu0 %2932
    %v2935 = vmul.f32 %v2927, %v2933
    %2937 = vrot.lane.b32.xlu0 %v2935, 32
    %v2938 = vpop.permute.xlu0 %2937
    %v2940 = vadd.f32 %v2930, %v2938
    %v2941 = vtanh.pop %v2940
    %2943 = vrot.lane.b32.xlu0 %v2941, 64
    %v2944 = vpop.permute.xlu0 %2943
    %v2946 = vmul.f32 %v2927, %v2944
    %v2947 = vpack.c.bf16 %v2946, %v2946
    %s2948 = scalar_lea.vmem %s4, 160
    %v2949 = vld [vmem:[%s2948] sm:$0xf]
    %v2950 = vld [vmem:[%s2948 + $0x4] sm:$0xf]
    %v2951 = vld [vmem:[%s2948 + $0x8] sm:$0xf]
    %v2952 = vld [vmem:[%s2948 + $0xc] sm:$0xf]
    %2954 = vrot.lane.b32.xlu0 %v2947, 32
    %v2955 = vpop.permute.xlu0 %2954
    %v2960 = vunpack.c.l.b16 %v2949
    %v2961 = vunpack.c.l.b16 %v2950
    %v2962 = vunpack.c.l.b16 %v2951
    %v2963 = vunpack.c.l.b16 %v2952
    %v2964 = vpack.c.b16 %v2961, %v2960
    %v2965 = vpack.c.b16 %v2963, %v2962
    %v2969 = vsel %vm350, %v2955, 0
    %2971 = vmatprep.subr.bf16.mxu0 0
    %2972 = vmatpush1.bf16.msra.mxu0 0
    %2973 = vmatprep.subr.bf16.mxu0 0
    %2974 = vmatpush1.bf16.msra.mxu0 0
    %2975 = vmatprep.subr.bf16.mxu0 0
    %2976 = vmatpush1.bf16.msra.mxu0 0
    %2977 = vmatprep.subr.bf16.mxu0 0
    %2978 = vmatpush1.bf16.msra.mxu0 0
    %2979 = vmatprep.subr.bf16.mxu0 0
    %2980 = vmatpush1.bf16.msra.mxu0 0
    %2981 = vmatprep.subr.bf16.mxu0 0
    %2982 = vmatpush1.bf16.msra.mxu0 0
    %2983 = vmatprep.subr.bf16.mxu0 0
    %2984 = vmatpush1.bf16.msra.mxu0 %v2965
    %2985 = vmatprep.subr.bf16.mxu0 0
    %2986 = vmatpush1.bf16.msra.mxu0 %v2964
    %2987 = vmatprep.subr.bf16.mxu0 0
    %2988 = vmatpush2.bf16.msra.mxu0 0
    %2989 = vmatprep.subr.bf16.mxu0 0
    %2990 = vmatpush2.bf16.msra.mxu0 0
    %2991 = vmatprep.subr.bf16.mxu0 0
    %2992 = vmatpush2.bf16.msra.mxu0 0
    %2993 = vmatprep.subr.bf16.mxu0 0
    %2994 = vmatpush2.bf16.msra.mxu0 0
    %2995 = vmatprep.subr.bf16.mxu0 0
    %2996 = vmatpush2.bf16.msra.mxu0 0
    %2997 = vmatprep.subr.bf16.mxu0 0
    %2998 = vmatpush2.bf16.msra.mxu0 0
    %2999 = vmatprep.subr.bf16.mxu0 0
    %3000 = vmatpush2.bf16.msra.mxu0 0
    %3001 = vmatprep.subr.bf16.mxu0 0
    %3002 = vmatpush2.bf16.msra.mxu0 0
    %3003 = vmatprep.mubr.bf16.mxu0 0
    %3004 = vmatmul.mubr.bf16.gmra.mxu0 %v2969
    %v3005 = vpop.f32.mrf.mxu0
    %v3006 = vadd.f32 0.0, %v3005
    %v3007 = vpop.f32.mrf.mxu0
    %v3008 = vpop.f32.mrf.mxu0
    %v3009 = vpop.f32.mrf.mxu0
    %3010 = vdwg.mxu0
    %v3011 = vadd.f32 %v2878, %v3006
    %s3012 = scalar_lea.vmem [#allocation2], 216
    %v3013 = vld [vmem:[%s3012] sm:$0xff]
    %3014 = vmatprep.subr.bf16.mxu0 0
    %3015 = vmatpush1.bf16.msra.mxu0 0
    %3016 = vmatprep.subr.bf16.mxu0 0
    %3017 = vmatpush1.bf16.msra.mxu0 0
    %3018 = vmatprep.subr.bf16.mxu0 0
    %3019 = vmatpush1.bf16.msra.mxu0 0
    %3020 = vmatprep.subr.bf16.mxu0 0
    %3021 = vmatpush1.bf16.msra.mxu0 0
    %3022 = vmatprep.subr.bf16.mxu0 0
    %3023 = vmatpush1.bf16.msra.mxu0 0
    %3024 = vmatprep.subr.bf16.mxu0 0
    %3025 = vmatpush1.bf16.msra.mxu0 0
    %3026 = vmatprep.subr.bf16.mxu0 0
    %3027 = vmatpush1.bf16.msra.mxu0 %v347
    %3028 = vmatprep.subr.bf16.mxu0 0
    %3029 = vmatpush1.bf16.msra.mxu0 %v346
    %3030 = vmatprep.subr.bf16.mxu0 0
    %3031 = vmatpush2.bf16.msra.mxu0 0
    %3032 = vmatprep.subr.bf16.mxu0 0
    %3033 = vmatpush2.bf16.msra.mxu0 0
    %3034 = vmatprep.subr.bf16.mxu0 0
    %3035 = vmatpush2.bf16.msra.mxu0 0
    %3036 = vmatprep.subr.bf16.mxu0 0
    %3037 = vmatpush2.bf16.msra.mxu0 0
    %3038 = vmatprep.subr.bf16.mxu0 0
    %3039 = vmatpush2.bf16.msra.mxu0 0
    %3040 = vmatprep.subr.bf16.mxu0 0
    %3041 = vmatpush2.bf16.msra.mxu0 0
    %3042 = vmatprep.subr.bf16.mxu0 0
    %3043 = vmatpush2.bf16.msra.mxu0 0
    %3044 = vmatprep.subr.bf16.mxu0 0
    %3045 = vmatpush2.bf16.msra.mxu0 0
    %3046 = vmatprep.mubr.bf16.mxu0 0
    %3047 = vmatmul.mubr.bf16.gmra.mxu0 %v2969
    %v3048 = vpop.f32.mrf.mxu0
    %v3049 = vadd.f32 0.0, %v3048
    %v3050 = vpop.f32.mrf.mxu0
    %v3051 = vpop.f32.mrf.mxu0
    %v3052 = vpop.f32.mrf.mxu0
    %3053 = vdwg.mxu0
    %v3054 = vadd.f32 %v3013, %v3049
    %v3055 = vxor.u32 %v3054, 2147483648
    %v3056 = vmul.f32 %v3055, 1.442695
    %v3057 = vpow.pop %v3056
    %v3058 = vadd.f32 %v3057, 1.0
    %v3059 = vrcp.pop %v3058
    %v3060 = vmul.f32 1.0, %v3059
    %v3061 = vmul.f32 %v3060, 2.0
    %v3062 = vsub.f32 %v3061, 1.0
    %v3063 = vmul.f32 %v3060, %v2940
    %3065 = vrot.lane.b32.xlu0 %v3062, 64
    %v3066 = vpop.permute.xlu0 %3065
    %v3068 = vmul.f32 %v3060, %v3066
    %3070 = vrot.lane.b32.xlu0 %v3068, 32
    %v3071 = vpop.permute.xlu0 %3070
    %v3073 = vadd.f32 %v3063, %v3071
    %v3074 = vtanh.pop %v3073
    %3076 = vrot.lane.b32.xlu0 %v3074, 64
    %v3077 = vpop.permute.xlu0 %3076
    %v3079 = vmul.f32 %v3060, %v3077
    %v3080 = vpack.c.bf16 %v3079, %v3079
    %s3081 = scalar_lea.vmem %s4, 176
    %v3082 = vld [vmem:[%s3081] sm:$0xf]
    %v3083 = vld [vmem:[%s3081 + $0x4] sm:$0xf]
    %v3084 = vld [vmem:[%s3081 + $0x8] sm:$0xf]
    %v3085 = vld [vmem:[%s3081 + $0xc] sm:$0xf]
    %3087 = vrot.lane.b32.xlu0 %v3080, 32
    %v3088 = vpop.permute.xlu0 %3087
    %v3093 = vunpack.c.l.b16 %v3082
    %v3094 = vunpack.c.l.b16 %v3083
    %v3095 = vunpack.c.l.b16 %v3084
    %v3096 = vunpack.c.l.b16 %v3085
    %v3097 = vpack.c.b16 %v3094, %v3093
    %v3098 = vpack.c.b16 %v3096, %v3095
    %v3102 = vsel %vm350, %v3088, 0
    %3104 = vmatprep.subr.bf16.mxu0 0
    %3105 = vmatpush1.bf16.msra.mxu0 0
    %3106 = vmatprep.subr.bf16.mxu0 0
    %3107 = vmatpush1.bf16.msra.mxu0 0
    %3108 = vmatprep.subr.bf16.mxu0 0
    %3109 = vmatpush1.bf16.msra.mxu0 0
    %3110 = vmatprep.subr.bf16.mxu0 0
    %3111 = vmatpush1.bf16.msra.mxu0 0
    %3112 = vmatprep.subr.bf16.mxu0 0
    %3113 = vmatpush1.bf16.msra.mxu0 0
    %3114 = vmatprep.subr.bf16.mxu0 0
    %3115 = vmatpush1.bf16.msra.mxu0 0
    %3116 = vmatprep.subr.bf16.mxu0 0
    %3117 = vmatpush1.bf16.msra.mxu0 %v3098
    %3118 = vmatprep.subr.bf16.mxu0 0
    %3119 = vmatpush1.bf16.msra.mxu0 %v3097
    %3120 = vmatprep.subr.bf16.mxu0 0
    %3121 = vmatpush2.bf16.msra.mxu0 0
    %3122 = vmatprep.subr.bf16.mxu0 0
    %3123 = vmatpush2.bf16.msra.mxu0 0
    %3124 = vmatprep.subr.bf16.mxu0 0
    %3125 = vmatpush2.bf16.msra.mxu0 0
    %3126 = vmatprep.subr.bf16.mxu0 0
    %3127 = vmatpush2.bf16.msra.mxu0 0
    %3128 = vmatprep.subr.bf16.mxu0 0
    %3129 = vmatpush2.bf16.msra.mxu0 0
    %3130 = vmatprep.subr.bf16.mxu0 0
    %3131 = vmatpush2.bf16.msra.mxu0 0
    %3132 = vmatprep.subr.bf16.mxu0 0
    %3133 = vmatpush2.bf16.msra.mxu0 0
    %3134 = vmatprep.subr.bf16.mxu0 0
    %3135 = vmatpush2.bf16.msra.mxu0 0
    %3136 = vmatprep.mubr.bf16.mxu0 0
    %3137 = vmatmul.mubr.bf16.gmra.mxu0 %v3102
    %v3138 = vpop.f32.mrf.mxu0
    %v3139 = vadd.f32 0.0, %v3138
    %v3140 = vpop.f32.mrf.mxu0
    %v3141 = vpop.f32.mrf.mxu0
    %v3142 = vpop.f32.mrf.mxu0
    %3143 = vdwg.mxu0
    %v3144 = vadd.f32 %v3011, %v3139
    %s3145 = scalar_lea.vmem [#allocation2], 224
    %v3146 = vld [vmem:[%s3145] sm:$0xff]
    %3147 = vmatprep.subr.bf16.mxu0 0
    %3148 = vmatpush1.bf16.msra.mxu0 0
    %3149 = vmatprep.subr.bf16.mxu0 0
    %3150 = vmatpush1.bf16.msra.mxu0 0
    %3151 = vmatprep.subr.bf16.mxu0 0
    %3152 = vmatpush1.bf16.msra.mxu0 0
    %3153 = vmatprep.subr.bf16.mxu0 0
    %3154 = vmatpush1.bf16.msra.mxu0 0
    %3155 = vmatprep.subr.bf16.mxu0 0
    %3156 = vmatpush1.bf16.msra.mxu0 0
    %3157 = vmatprep.subr.bf16.mxu0 0
    %3158 = vmatpush1.bf16.msra.mxu0 0
    %3159 = vmatprep.subr.bf16.mxu0 0
    %3160 = vmatpush1.bf16.msra.mxu0 %v347
    %3161 = vmatprep.subr.bf16.mxu0 0
    %3162 = vmatpush1.bf16.msra.mxu0 %v346
    %3163 = vmatprep.subr.bf16.mxu0 0
    %3164 = vmatpush2.bf16.msra.mxu0 0
    %3165 = vmatprep.subr.bf16.mxu0 0
    %3166 = vmatpush2.bf16.msra.mxu0 0
    %3167 = vmatprep.subr.bf16.mxu0 0
    %3168 = vmatpush2.bf16.msra.mxu0 0
    %3169 = vmatprep.subr.bf16.mxu0 0
    %3170 = vmatpush2.bf16.msra.mxu0 0
    %3171 = vmatprep.subr.bf16.mxu0 0
    %3172 = vmatpush2.bf16.msra.mxu0 0
    %3173 = vmatprep.subr.bf16.mxu0 0
    %3174 = vmatpush2.bf16.msra.mxu0 0
    %3175 = vmatprep.subr.bf16.mxu0 0
    %3176 = vmatpush2.bf16.msra.mxu0 0
    %3177 = vmatprep.subr.bf16.mxu0 0
    %3178 = vmatpush2.bf16.msra.mxu0 0
    %3179 = vmatprep.mubr.bf16.mxu0 0
    %3180 = vmatmul.mubr.bf16.gmra.mxu0 %v3102
    %v3181 = vpop.f32.mrf.mxu0
    %v3182 = vadd.f32 0.0, %v3181
    %v3183 = vpop.f32.mrf.mxu0
    %v3184 = vpop.f32.mrf.mxu0
    %v3185 = vpop.f32.mrf.mxu0
    %3186 = vdwg.mxu0
    %v3187 = vadd.f32 %v3146, %v3182
    %v3188 = vxor.u32 %v3187, 2147483648
    %v3189 = vmul.f32 %v3188, 1.442695
    %v3190 = vpow.pop %v3189
    %v3191 = vadd.f32 %v3190, 1.0
    %v3192 = vrcp.pop %v3191
    %v3193 = vmul.f32 1.0, %v3192
    %v3194 = vmul.f32 %v3193, 2.0
    %v3195 = vsub.f32 %v3194, 1.0
    %v3196 = vmul.f32 %v3193, %v3073
    %3198 = vrot.lane.b32.xlu0 %v3195, 64
    %v3199 = vpop.permute.xlu0 %3198
    %v3201 = vmul.f32 %v3193, %v3199
    %3203 = vrot.lane.b32.xlu0 %v3201, 32
    %v3204 = vpop.permute.xlu0 %3203
    %v3206 = vadd.f32 %v3196, %v3204
    %v3207 = vtanh.pop %v3206
    %3209 = vrot.lane.b32.xlu0 %v3207, 64
    %v3210 = vpop.permute.xlu0 %3209
    %v3212 = vmul.f32 %v3193, %v3210
    %v3213 = vpack.c.bf16 %v3212, %v3212
    %s3214 = scalar_lea.vmem %s4, 192
    %v3215 = vld [vmem:[%s3214] sm:$0xf]
    %v3216 = vld [vmem:[%s3214 + $0x4] sm:$0xf]
    %v3217 = vld [vmem:[%s3214 + $0x8] sm:$0xf]
    %v3218 = vld [vmem:[%s3214 + $0xc] sm:$0xf]
    %3220 = vrot.lane.b32.xlu0 %v3213, 32
    %v3221 = vpop.permute.xlu0 %3220
    %v3226 = vunpack.c.l.b16 %v3215
    %v3227 = vunpack.c.l.b16 %v3216
    %v3228 = vunpack.c.l.b16 %v3217
    %v3229 = vunpack.c.l.b16 %v3218
    %v3230 = vpack.c.b16 %v3227, %v3226
    %v3231 = vpack.c.b16 %v3229, %v3228
    %v3235 = vsel %vm350, %v3221, 0
    %3237 = vmatprep.subr.bf16.mxu0 0
    %3238 = vmatpush1.bf16.msra.mxu0 0
    %3239 = vmatprep.subr.bf16.mxu0 0
    %3240 = vmatpush1.bf16.msra.mxu0 0
    %3241 = vmatprep.subr.bf16.mxu0 0
    %3242 = vmatpush1.bf16.msra.mxu0 0
    %3243 = vmatprep.subr.bf16.mxu0 0
    %3244 = vmatpush1.bf16.msra.mxu0 0
    %3245 = vmatprep.subr.bf16.mxu0 0
    %3246 = vmatpush1.bf16.msra.mxu0 0
    %3247 = vmatprep.subr.bf16.mxu0 0
    %3248 = vmatpush1.bf16.msra.mxu0 0
    %3249 = vmatprep.subr.bf16.mxu0 0
    %3250 = vmatpush1.bf16.msra.mxu0 %v3231
    %3251 = vmatprep.subr.bf16.mxu0 0
    %3252 = vmatpush1.bf16.msra.mxu0 %v3230
    %3253 = vmatprep.subr.bf16.mxu0 0
    %3254 = vmatpush2.bf16.msra.mxu0 0
    %3255 = vmatprep.subr.bf16.mxu0 0
    %3256 = vmatpush2.bf16.msra.mxu0 0
    %3257 = vmatprep.subr.bf16.mxu0 0
    %3258 = vmatpush2.bf16.msra.mxu0 0
    %3259 = vmatprep.subr.bf16.mxu0 0
    %3260 = vmatpush2.bf16.msra.mxu0 0
    %3261 = vmatprep.subr.bf16.mxu0 0
    %3262 = vmatpush2.bf16.msra.mxu0 0
    %3263 = vmatprep.subr.bf16.mxu0 0
    %3264 = vmatpush2.bf16.msra.mxu0 0
    %3265 = vmatprep.subr.bf16.mxu0 0
    %3266 = vmatpush2.bf16.msra.mxu0 0
    %3267 = vmatprep.subr.bf16.mxu0 0
    %3268 = vmatpush2.bf16.msra.mxu0 0
    %3269 = vmatprep.mubr.bf16.mxu0 0
    %3270 = vmatmul.mubr.bf16.gmra.mxu0 %v3235
    %v3271 = vpop.f32.mrf.mxu0
    %v3272 = vadd.f32 0.0, %v3271
    %v3273 = vpop.f32.mrf.mxu0
    %v3274 = vpop.f32.mrf.mxu0
    %v3275 = vpop.f32.mrf.mxu0
    %3276 = vdwg.mxu0
    %v3277 = vadd.f32 %v3144, %v3272
    %s3278 = scalar_lea.vmem [#allocation2], 232
    %v3279 = vld [vmem:[%s3278] sm:$0xff]
    %3280 = vmatprep.subr.bf16.mxu0 0
    %3281 = vmatpush1.bf16.msra.mxu0 0
    %3282 = vmatprep.subr.bf16.mxu0 0
    %3283 = vmatpush1.bf16.msra.mxu0 0
    %3284 = vmatprep.subr.bf16.mxu0 0
    %3285 = vmatpush1.bf16.msra.mxu0 0
    %3286 = vmatprep.subr.bf16.mxu0 0
    %3287 = vmatpush1.bf16.msra.mxu0 0
    %3288 = vmatprep.subr.bf16.mxu0 0
    %3289 = vmatpush1.bf16.msra.mxu0 0
    %3290 = vmatprep.subr.bf16.mxu0 0
    %3291 = vmatpush1.bf16.msra.mxu0 0
    %3292 = vmatprep.subr.bf16.mxu0 0
    %3293 = vmatpush1.bf16.msra.mxu0 %v347
    %3294 = vmatprep.subr.bf16.mxu0 0
    %3295 = vmatpush1.bf16.msra.mxu0 %v346
    %3296 = vmatprep.subr.bf16.mxu0 0
    %3297 = vmatpush2.bf16.msra.mxu0 0
    %3298 = vmatprep.subr.bf16.mxu0 0
    %3299 = vmatpush2.bf16.msra.mxu0 0
    %3300 = vmatprep.subr.bf16.mxu0 0
    %3301 = vmatpush2.bf16.msra.mxu0 0
    %3302 = vmatprep.subr.bf16.mxu0 0
    %3303 = vmatpush2.bf16.msra.mxu0 0
    %3304 = vmatprep.subr.bf16.mxu0 0
    %3305 = vmatpush2.bf16.msra.mxu0 0
    %3306 = vmatprep.subr.bf16.mxu0 0
    %3307 = vmatpush2.bf16.msra.mxu0 0
    %3308 = vmatprep.subr.bf16.mxu0 0
    %3309 = vmatpush2.bf16.msra.mxu0 0
    %3310 = vmatprep.subr.bf16.mxu0 0
    %3311 = vmatpush2.bf16.msra.mxu0 0
    %3312 = vmatprep.mubr.bf16.mxu0 0
    %3313 = vmatmul.mubr.bf16.gmra.mxu0 %v3235
    %v3314 = vpop.f32.mrf.mxu0
    %v3315 = vadd.f32 0.0, %v3314
    %v3316 = vpop.f32.mrf.mxu0
    %v3317 = vpop.f32.mrf.mxu0
    %v3318 = vpop.f32.mrf.mxu0
    %3319 = vdwg.mxu0
    %v3320 = vadd.f32 %v3279, %v3315
    %v3321 = vxor.u32 %v3320, 2147483648
    %v3322 = vmul.f32 %v3321, 1.442695
    %v3323 = vpow.pop %v3322
    %v3324 = vadd.f32 %v3323, 1.0
    %v3325 = vrcp.pop %v3324
    %v3326 = vmul.f32 1.0, %v3325
    %v3327 = vmul.f32 %v3326, 2.0
    %v3328 = vsub.f32 %v3327, 1.0
    %v3329 = vmul.f32 %v3326, %v3206
    %3331 = vrot.lane.b32.xlu0 %v3328, 64
    %v3332 = vpop.permute.xlu0 %3331
    %v3334 = vmul.f32 %v3326, %v3332
    %3336 = vrot.lane.b32.xlu0 %v3334, 32
    %v3337 = vpop.permute.xlu0 %3336
    %v3339 = vadd.f32 %v3329, %v3337
    %v3340 = vtanh.pop %v3339
    %3342 = vrot.lane.b32.xlu0 %v3340, 64
    %v3343 = vpop.permute.xlu0 %3342
    %v3345 = vmul.f32 %v3326, %v3343
    %v3346 = vpack.c.bf16 %v3345, %v3345
    %s3347 = scalar_lea.vmem %s4, 208
    %v3348 = vld [vmem:[%s3347] sm:$0xf]
    %v3349 = vld [vmem:[%s3347 + $0x4] sm:$0xf]
    %v3350 = vld [vmem:[%s3347 + $0x8] sm:$0xf]
    %v3351 = vld [vmem:[%s3347 + $0xc] sm:$0xf]
    %3353 = vrot.lane.b32.xlu0 %v3346, 32
    %v3354 = vpop.permute.xlu0 %3353
    %v3359 = vunpack.c.l.b16 %v3348
    %v3360 = vunpack.c.l.b16 %v3349
    %v3361 = vunpack.c.l.b16 %v3350
    %v3362 = vunpack.c.l.b16 %v3351
    %v3363 = vpack.c.b16 %v3360, %v3359
    %v3364 = vpack.c.b16 %v3362, %v3361
    %v3368 = vsel %vm350, %v3354, 0
    %3370 = vmatprep.subr.bf16.mxu0 0
    %3371 = vmatpush1.bf16.msra.mxu0 0
    %3372 = vmatprep.subr.bf16.mxu0 0
    %3373 = vmatpush1.bf16.msra.mxu0 0
    %3374 = vmatprep.subr.bf16.mxu0 0
    %3375 = vmatpush1.bf16.msra.mxu0 0
    %3376 = vmatprep.subr.bf16.mxu0 0
    %3377 = vmatpush1.bf16.msra.mxu0 0
    %3378 = vmatprep.subr.bf16.mxu0 0
    %3379 = vmatpush1.bf16.msra.mxu0 0
    %3380 = vmatprep.subr.bf16.mxu0 0
    %3381 = vmatpush1.bf16.msra.mxu0 0
    %3382 = vmatprep.subr.bf16.mxu0 0
    %3383 = vmatpush1.bf16.msra.mxu0 %v3364
    %3384 = vmatprep.subr.bf16.mxu0 0
    %3385 = vmatpush1.bf16.msra.mxu0 %v3363
    %3386 = vmatprep.subr.bf16.mxu0 0
    %3387 = vmatpush2.bf16.msra.mxu0 0
    %3388 = vmatprep.subr.bf16.mxu0 0
    %3389 = vmatpush2.bf16.msra.mxu0 0
    %3390 = vmatprep.subr.bf16.mxu0 0
    %3391 = vmatpush2.bf16.msra.mxu0 0
    %3392 = vmatprep.subr.bf16.mxu0 0
    %3393 = vmatpush2.bf16.msra.mxu0 0
    %3394 = vmatprep.subr.bf16.mxu0 0
    %3395 = vmatpush2.bf16.msra.mxu0 0
    %3396 = vmatprep.subr.bf16.mxu0 0
    %3397 = vmatpush2.bf16.msra.mxu0 0
    %3398 = vmatprep.subr.bf16.mxu0 0
    %3399 = vmatpush2.bf16.msra.mxu0 0
    %3400 = vmatprep.subr.bf16.mxu0 0
    %3401 = vmatpush2.bf16.msra.mxu0 0
    %3402 = vmatprep.mubr.bf16.mxu0 0
    %3403 = vmatmul.mubr.bf16.gmra.mxu0 %v3368
    %v3404 = vpop.f32.mrf.mxu0
    %v3405 = vadd.f32 0.0, %v3404
    %v3406 = vpop.f32.mrf.mxu0
    %v3407 = vpop.f32.mrf.mxu0
    %v3408 = vpop.f32.mrf.mxu0
    %3409 = vdwg.mxu0
    %v3410 = vadd.f32 %v3277, %v3405
    %s3411 = scalar_lea.vmem [#allocation2], 240
    %v3412 = vld [vmem:[%s3411] sm:$0xff]
    %3413 = vmatprep.subr.bf16.mxu0 0
    %3414 = vmatpush1.bf16.msra.mxu0 0
    %3415 = vmatprep.subr.bf16.mxu0 0
    %3416 = vmatpush1.bf16.msra.mxu0 0
    %3417 = vmatprep.subr.bf16.mxu0 0
    %3418 = vmatpush1.bf16.msra.mxu0 0
    %3419 = vmatprep.subr.bf16.mxu0 0
    %3420 = vmatpush1.bf16.msra.mxu0 0
    %3421 = vmatprep.subr.bf16.mxu0 0
    %3422 = vmatpush1.bf16.msra.mxu0 0
    %3423 = vmatprep.subr.bf16.mxu0 0
    %3424 = vmatpush1.bf16.msra.mxu0 0
    %3425 = vmatprep.subr.bf16.mxu0 0
    %3426 = vmatpush1.bf16.msra.mxu0 %v347
    %3427 = vmatprep.subr.bf16.mxu0 0
    %3428 = vmatpush1.bf16.msra.mxu0 %v346
    %3429 = vmatprep.subr.bf16.mxu0 0
    %3430 = vmatpush2.bf16.msra.mxu0 0
    %3431 = vmatprep.subr.bf16.mxu0 0
    %3432 = vmatpush2.bf16.msra.mxu0 0
    %3433 = vmatprep.subr.bf16.mxu0 0
    %3434 = vmatpush2.bf16.msra.mxu0 0
    %3435 = vmatprep.subr.bf16.mxu0 0
    %3436 = vmatpush2.bf16.msra.mxu0 0
    %3437 = vmatprep.subr.bf16.mxu0 0
    %3438 = vmatpush2.bf16.msra.mxu0 0
    %3439 = vmatprep.subr.bf16.mxu0 0
    %3440 = vmatpush2.bf16.msra.mxu0 0
    %3441 = vmatprep.subr.bf16.mxu0 0
    %3442 = vmatpush2.bf16.msra.mxu0 0
    %3443 = vmatprep.subr.bf16.mxu0 0
    %3444 = vmatpush2.bf16.msra.mxu0 0
    %3445 = vmatprep.mubr.bf16.mxu0 0
    %3446 = vmatmul.mubr.bf16.gmra.mxu0 %v3368
    %v3447 = vpop.f32.mrf.mxu0
    %v3448 = vadd.f32 0.0, %v3447
    %v3449 = vpop.f32.mrf.mxu0
    %v3450 = vpop.f32.mrf.mxu0
    %v3451 = vpop.f32.mrf.mxu0
    %3452 = vdwg.mxu0
    %v3453 = vadd.f32 %v3412, %v3448
    %v3454 = vxor.u32 %v3453, 2147483648
    %v3455 = vmul.f32 %v3454, 1.442695
    %v3456 = vpow.pop %v3455
    %v3457 = vadd.f32 %v3456, 1.0
    %v3458 = vrcp.pop %v3457
    %v3459 = vmul.f32 1.0, %v3458
    %v3460 = vmul.f32 %v3459, 2.0
    %v3461 = vsub.f32 %v3460, 1.0
    %v3462 = vmul.f32 %v3459, %v3339
    %3464 = vrot.lane.b32.xlu0 %v3461, 64
    %v3465 = vpop.permute.xlu0 %3464
    %v3467 = vmul.f32 %v3459, %v3465
    %3469 = vrot.lane.b32.xlu0 %v3467, 32
    %v3470 = vpop.permute.xlu0 %3469
    %v3472 = vadd.f32 %v3462, %v3470
    %v3473 = vtanh.pop %v3472
    %3475 = vrot.lane.b32.xlu0 %v3473, 64
    %v3476 = vpop.permute.xlu0 %3475
    %v3478 = vmul.f32 %v3459, %v3476
    %v3479 = vpack.c.bf16 %v3478, %v3478
    %s3480 = scalar_lea.vmem %s4, 224
    %v3481 = vld [vmem:[%s3480] sm:$0xf]
    %v3482 = vld [vmem:[%s3480 + $0x4] sm:$0xf]
    %v3483 = vld [vmem:[%s3480 + $0x8] sm:$0xf]
    %v3484 = vld [vmem:[%s3480 + $0xc] sm:$0xf]
    %3486 = vrot.lane.b32.xlu0 %v3479, 32
    %v3487 = vpop.permute.xlu0 %3486
    %v3492 = vunpack.c.l.b16 %v3481
    %v3493 = vunpack.c.l.b16 %v3482
    %v3494 = vunpack.c.l.b16 %v3483
    %v3495 = vunpack.c.l.b16 %v3484
    %v3496 = vpack.c.b16 %v3493, %v3492
    %v3497 = vpack.c.b16 %v3495, %v3494
    %v3501 = vsel %vm350, %v3487, 0
    %3503 = vmatprep.subr.bf16.mxu0 0
    %3504 = vmatpush1.bf16.msra.mxu0 0
    %3505 = vmatprep.subr.bf16.mxu0 0
    %3506 = vmatpush1.bf16.msra.mxu0 0
    %3507 = vmatprep.subr.bf16.mxu0 0
    %3508 = vmatpush1.bf16.msra.mxu0 0
    %3509 = vmatprep.subr.bf16.mxu0 0
    %3510 = vmatpush1.bf16.msra.mxu0 0
    %3511 = vmatprep.subr.bf16.mxu0 0
    %3512 = vmatpush1.bf16.msra.mxu0 0
    %3513 = vmatprep.subr.bf16.mxu0 0
    %3514 = vmatpush1.bf16.msra.mxu0 0
    %3515 = vmatprep.subr.bf16.mxu0 0
    %3516 = vmatpush1.bf16.msra.mxu0 %v3497
    %3517 = vmatprep.subr.bf16.mxu0 0
    %3518 = vmatpush1.bf16.msra.mxu0 %v3496
    %3519 = vmatprep.subr.bf16.mxu0 0
    %3520 = vmatpush2.bf16.msra.mxu0 0
    %3521 = vmatprep.subr.bf16.mxu0 0
    %3522 = vmatpush2.bf16.msra.mxu0 0
    %3523 = vmatprep.subr.bf16.mxu0 0
    %3524 = vmatpush2.bf16.msra.mxu0 0
    %3525 = vmatprep.subr.bf16.mxu0 0
    %3526 = vmatpush2.bf16.msra.mxu0 0
    %3527 = vmatprep.subr.bf16.mxu0 0
    %3528 = vmatpush2.bf16.msra.mxu0 0
    %3529 = vmatprep.subr.bf16.mxu0 0
    %3530 = vmatpush2.bf16.msra.mxu0 0
    %3531 = vmatprep.subr.bf16.mxu0 0
    %3532 = vmatpush2.bf16.msra.mxu0 0
    %3533 = vmatprep.subr.bf16.mxu0 0
    %3534 = vmatpush2.bf16.msra.mxu0 0
    %3535 = vmatprep.mubr.bf16.mxu0 0
    %3536 = vmatmul.mubr.bf16.gmra.mxu0 %v3501
    %v3537 = vpop.f32.mrf.mxu0
    %v3538 = vadd.f32 0.0, %v3537
    %v3539 = vpop.f32.mrf.mxu0
    %v3540 = vpop.f32.mrf.mxu0
    %v3541 = vpop.f32.mrf.mxu0
    %3542 = vdwg.mxu0
    %v3543 = vadd.f32 %v3410, %v3538
    %s3544 = scalar_lea.vmem [#allocation2], 248
    %v3545 = vld [vmem:[%s3544] sm:$0xff]
    %3546 = vmatprep.subr.bf16.mxu0 0
    %3547 = vmatpush1.bf16.msra.mxu0 0
    %3548 = vmatprep.subr.bf16.mxu0 0
    %3549 = vmatpush1.bf16.msra.mxu0 0
    %3550 = vmatprep.subr.bf16.mxu0 0
    %3551 = vmatpush1.bf16.msra.mxu0 0
    %3552 = vmatprep.subr.bf16.mxu0 0
    %3553 = vmatpush1.bf16.msra.mxu0 0
    %3554 = vmatprep.subr.bf16.mxu0 0
    %3555 = vmatpush1.bf16.msra.mxu0 0
    %3556 = vmatprep.subr.bf16.mxu0 0
    %3557 = vmatpush1.bf16.msra.mxu0 0
    %3558 = vmatprep.subr.bf16.mxu0 0
    %3559 = vmatpush1.bf16.msra.mxu0 %v347
    %3560 = vmatprep.subr.bf16.mxu0 0
    %3561 = vmatpush1.bf16.msra.mxu0 %v346
    %3562 = vmatprep.subr.bf16.mxu0 0
    %3563 = vmatpush2.bf16.msra.mxu0 0
    %3564 = vmatprep.subr.bf16.mxu0 0
    %3565 = vmatpush2.bf16.msra.mxu0 0
    %3566 = vmatprep.subr.bf16.mxu0 0
    %3567 = vmatpush2.bf16.msra.mxu0 0
    %3568 = vmatprep.subr.bf16.mxu0 0
    %3569 = vmatpush2.bf16.msra.mxu0 0
    %3570 = vmatprep.subr.bf16.mxu0 0
    %3571 = vmatpush2.bf16.msra.mxu0 0
    %3572 = vmatprep.subr.bf16.mxu0 0
    %3573 = vmatpush2.bf16.msra.mxu0 0
    %3574 = vmatprep.subr.bf16.mxu0 0
    %3575 = vmatpush2.bf16.msra.mxu0 0
    %3576 = vmatprep.subr.bf16.mxu0 0
    %3577 = vmatpush2.bf16.msra.mxu0 0
    %3578 = vmatprep.mubr.bf16.mxu0 0
    %3579 = vmatmul.mubr.bf16.gmra.mxu0 %v3501
    %v3580 = vpop.f32.mrf.mxu0
    %v3581 = vadd.f32 0.0, %v3580
    %v3582 = vpop.f32.mrf.mxu0
    %v3583 = vpop.f32.mrf.mxu0
    %v3584 = vpop.f32.mrf.mxu0
    %3585 = vdwg.mxu0
    %v3586 = vadd.f32 %v3545, %v3581
    %v3587 = vxor.u32 %v3586, 2147483648
    %v3588 = vmul.f32 %v3587, 1.442695
    %v3589 = vpow.pop %v3588
    %v3590 = vadd.f32 %v3589, 1.0
    %v3591 = vrcp.pop %v3590
    %v3592 = vmul.f32 1.0, %v3591
    %v3593 = vmul.f32 %v3592, 2.0
    %v3594 = vsub.f32 %v3593, 1.0
    %v3595 = vmul.f32 %v3592, %v3472
    %3597 = vrot.lane.b32.xlu0 %v3594, 64
    %v3598 = vpop.permute.xlu0 %3597
    %v3600 = vmul.f32 %v3592, %v3598
    %3602 = vrot.lane.b32.xlu0 %v3600, 32
    %v3603 = vpop.permute.xlu0 %3602
    %v3605 = vadd.f32 %v3595, %v3603
    %v3606 = vtanh.pop %v3605
    %3608 = vrot.lane.b32.xlu0 %v3606, 64
    %v3609 = vpop.permute.xlu0 %3608
    %v3611 = vmul.f32 %v3592, %v3609
    %v3612 = vpack.c.bf16 %v3611, %v3611
    %s3613 = scalar_lea.vmem %s4, 240
    %v3614 = vld [vmem:[%s3613] sm:$0xf]
    %v3615 = vld [vmem:[%s3613 + $0x4] sm:$0xf]
    %v3616 = vld [vmem:[%s3613 + $0x8] sm:$0xf]
    %v3617 = vld [vmem:[%s3613 + $0xc] sm:$0xf]
    %3619 = vrot.lane.b32.xlu0 %v3612, 32
    %v3620 = vpop.permute.xlu0 %3619
    %v3625 = vunpack.c.l.b16 %v3614
    %v3626 = vunpack.c.l.b16 %v3615
    %v3627 = vunpack.c.l.b16 %v3616
    %v3628 = vunpack.c.l.b16 %v3617
    %v3629 = vpack.c.b16 %v3626, %v3625
    %v3630 = vpack.c.b16 %v3628, %v3627
    %v3634 = vsel %vm350, %v3620, 0
    %3636 = vmatprep.subr.bf16.mxu0 0
    %3637 = vmatpush1.bf16.msra.mxu0 0
    %3638 = vmatprep.subr.bf16.mxu0 0
    %3639 = vmatpush1.bf16.msra.mxu0 0
    %3640 = vmatprep.subr.bf16.mxu0 0
    %3641 = vmatpush1.bf16.msra.mxu0 0
    %3642 = vmatprep.subr.bf16.mxu0 0
    %3643 = vmatpush1.bf16.msra.mxu0 0
    %3644 = vmatprep.subr.bf16.mxu0 0
    %3645 = vmatpush1.bf16.msra.mxu0 0
    %3646 = vmatprep.subr.bf16.mxu0 0
    %3647 = vmatpush1.bf16.msra.mxu0 0
    %3648 = vmatprep.subr.bf16.mxu0 0
    %3649 = vmatpush1.bf16.msra.mxu0 %v3630
    %3650 = vmatprep.subr.bf16.mxu0 0
    %3651 = vmatpush1.bf16.msra.mxu0 %v3629
    %3652 = vmatprep.subr.bf16.mxu0 0
    %3653 = vmatpush2.bf16.msra.mxu0 0
    %3654 = vmatprep.subr.bf16.mxu0 0
    %3655 = vmatpush2.bf16.msra.mxu0 0
    %3656 = vmatprep.subr.bf16.mxu0 0
    %3657 = vmatpush2.bf16.msra.mxu0 0
    %3658 = vmatprep.subr.bf16.mxu0 0
    %3659 = vmatpush2.bf16.msra.mxu0 0
    %3660 = vmatprep.subr.bf16.mxu0 0
    %3661 = vmatpush2.bf16.msra.mxu0 0
    %3662 = vmatprep.subr.bf16.mxu0 0
    %3663 = vmatpush2.bf16.msra.mxu0 0
    %3664 = vmatprep.subr.bf16.mxu0 0
    %3665 = vmatpush2.bf16.msra.mxu0 0
    %3666 = vmatprep.subr.bf16.mxu0 0
    %3667 = vmatpush2.bf16.msra.mxu0 0
    %3668 = vmatprep.mubr.bf16.mxu0 0
    %3669 = vmatmul.mubr.bf16.gmra.mxu0 %v3634
    %v3670 = vpop.f32.mrf.mxu0
    %v3671 = vadd.f32 0.0, %v3670
    %v3672 = vpop.f32.mrf.mxu0
    %v3673 = vpop.f32.mrf.mxu0
    %v3674 = vpop.f32.mrf.mxu0
    %3675 = vdwg.mxu0
    %v3676 = vadd.f32 %v3543, %v3671
    %v3677 = vld [vmem:[%s5] sm:$0x1]
    %v3679 = vlaneseq
    %v3680 = vshrl.u32 %v3679, 7
    %v3681 = vsub.s32 0, %v3680
    %v3682 = vrot.slane %v3677, %v3681
    %v3684 = vadd.f32 %v3676, %v3682
    %v3685 = vmax.f32 %v3684, 0.0
    %v3686 = vld [vmem:[%s6] sm:$0xff]
    %v3687 = vld [vmem:[%s6 + $0x8] sm:$0xff]
    %v3688 = vld [vmem:[%s6 + $0x10] sm:$0xff]
    %v3689 = vld [vmem:[%s6 + $0x18] sm:$0xff]
    %v3690 = vld [vmem:[%s7] sm:$0x1]
    %v3692 = vlaneseq
    %v3693 = vshrl.u32 %v3692, 7
    %v3694 = vsub.s32 0, %v3693
    %v3695 = vrot.slane %v3690, %v3694
    %v3698 = vsel %vm350, %v3685, 0
    %3700 = vmatprep.subr.mxu0 0.0
    %3701 = vmatpush1.msra.mxu0 0.0
    %3702 = vmatprep.subr.mxu0 0.0
    %3703 = vmatpush1.msra.mxu0 0.0
    %3704 = vmatprep.subr.mxu0 0.0
    %3705 = vmatpush1.msra.mxu0 0.0
    %3706 = vmatprep.subr.mxu0 0.0
    %3707 = vmatpush1.msra.mxu0 0.0
    %3708 = vmatprep.subr.mxu0 0.0
    %3709 = vmatpush1.msra.mxu0 0.0
    %3710 = vmatprep.subr.mxu0 0.0
    %3711 = vmatpush1.msra.mxu0 0.0
    %3712 = vmatprep.subr.mxu0 0.0
    %3713 = vmatpush1.msra.mxu0 0.0
    %3714 = vmatprep.subr.mxu0 0.0
    %3715 = vmatpush1.msra.mxu0 0.0
    %3716 = vmatprep.subr.mxu0 0.0
    %3717 = vmatpush1.msra.mxu0 0.0
    %3718 = vmatprep.subr.mxu0 0.0
    %3719 = vmatpush1.msra.mxu0 0.0
    %3720 = vmatprep.subr.mxu0 0.0
    %3721 = vmatpush1.msra.mxu0 0.0
    %3722 = vmatprep.subr.mxu0 0.0
    %3723 = vmatpush1.msra.mxu0 0.0
    %3724 = vmatprep.subr.mxu0 0.0
    %3725 = vmatpush1.msra.mxu0 %v3689
    %3726 = vmatprep.subr.mxu0 0.0
    %3727 = vmatpush1.msra.mxu0 %v3688
    %3728 = vmatprep.subr.mxu0 0.0
    %3729 = vmatpush1.msra.mxu0 %v3687
    %3730 = vmatprep.subr.mxu0 0.0
    %3731 = vmatpush1.msra.mxu0 %v3686
    %3732 = vmatprep.subr.mxu0 0.0
    %3733 = vmatpush2.msra.mxu0 0.0
    %3734 = vmatprep.subr.mxu0 0.0
    %3735 = vmatpush2.msra.mxu0 0.0
    %3736 = vmatprep.subr.mxu0 0.0
    %3737 = vmatpush2.msra.mxu0 0.0
    %3738 = vmatprep.subr.mxu0 0.0
    %3739 = vmatpush2.msra.mxu0 0.0
    %3740 = vmatprep.subr.mxu0 0.0
    %3741 = vmatpush2.msra.mxu0 0.0
    %3742 = vmatprep.subr.mxu0 0.0
    %3743 = vmatpush2.msra.mxu0 0.0
    %3744 = vmatprep.subr.mxu0 0.0
    %3745 = vmatpush2.msra.mxu0 0.0
    %3746 = vmatprep.subr.mxu0 0.0
    %3747 = vmatpush2.msra.mxu0 0.0
    %3748 = vmatprep.subr.mxu0 0.0
    %3749 = vmatpush2.msra.mxu0 0.0
    %3750 = vmatprep.subr.mxu0 0.0
    %3751 = vmatpush2.msra.mxu0 0.0
    %3752 = vmatprep.subr.mxu0 0.0
    %3753 = vmatpush2.msra.mxu0 0.0
    %3754 = vmatprep.subr.mxu0 0.0
    %3755 = vmatpush2.msra.mxu0 0.0
    %3756 = vmatprep.subr.mxu0 0.0
    %3757 = vmatpush2.msra.mxu0 0.0
    %3758 = vmatprep.subr.mxu0 0.0
    %3759 = vmatpush2.msra.mxu0 0.0
    %3760 = vmatprep.subr.mxu0 0.0
    %3761 = vmatpush2.msra.mxu0 0.0
    %3762 = vmatprep.subr.mxu0 0.0
    %3763 = vmatpush2.msra.mxu0 0.0
    %3764 = vmatprep.mubr.f32.mxu0 0.0
    %3765 = vmatmul.mubr.f32.gmra.mxu0 %v3698
    %v3766 = vpop.f32.mrf.mxu0
    %v3767 = vadd.f32 %v3695, %v3766
    %v3768 = vpop.f32.mrf.mxu0
    %3769 = vdwg.mxu0
    %vm3770 = vcmask 39936
    %v3771 = vsel %vm3770, %v3767, -inf
    %3772 = vmax.xlane.f32.xlu0 %v3771
    %v3773 = vpop.xlane.xlu0 %3772
    %v3774 = vsub.f32 %v3767, %v3773
    %v3775 = vmul.f32 %v3774, 1.442695
    %v3776 = vpow.pop %v3775
    %v3777 = vsel %vm3770, %v3776, 0.0
    %3778 = vadd.xlane.f32.xlu0 %v3777
    %v3779 = vpop.xlane.xlu0 %3778
    %v3780 = vlog2.pop %v3779
    %v3781 = vmul.f32 %v3780, 0.6931472
    %v3782 = vsub.f32 %v3774, %v3781
    %3783 = vst.msk [vmem:[#allocation3] sm:$0xff] %vm3770, %v3782
    // Predicated region
    $region34: #{rnn_forward.1} parent=1 // pred_check
      _
    $region35: #{rnn_forward.1} parent=1 // pred_check_branch
      %3785 = sbr.rel (0) target = $region37
    $region36: #{rnn_forward.1} parent=1 // pred_region
      %s3787 = ssub.s32 128, 128
      %3788 = vsyncadd [#allocation4], %s3787
      %s3790 = sshll.u32 [#allocation3], 4
      %s3791 = int_to_ptr.vmem [resolvable:$true] %s3790
      %3793 = dma.vmem_to_hbm [thread:$0]  %s3791, 128, %s8, [#allocation4]
    $region37: #{rnn_forward.1} parent=1 // pred_fallthru
      _
    // Predicated region
    $region38: #{rnn_forward.1} parent=1 // pred_check
      _
    $region39: #{rnn_forward.1} parent=1 // pred_check_branch
      %3795 = sbr.rel (0) target = $region41
    $region40: #{rnn_forward.1} parent=1 // pred_region
      %3796 = dma.done [#allocation4], 128
    $region41: #{rnn_forward.1} parent=1 // pred_fallthru
      _
    %3797 = vsyncpa [#allocation4], 1

</llo_original>
